<compile_context>
chip_gen: v7x
topology: tpu7x:2x2x1
jax: 0.10.0
libtpu: 0.0.40
codegen_flags: <defaults>
</compile_context>

<pallas_src>
import math

import jax
import jax.numpy as jnp
from jax import lax
from jax.experimental import pallas as pl
from jax.experimental.pallas import tpu as pltpu

_EPS = 1e-5       # nn.InstanceNorm2d default eps
_SLOPE = 0.2      # nn.LeakyReLU(0.2)
_LANE = 128
_SUB = 8


def _round_up(x, m):
    return (x + m - 1) // m * m


def _leaky(v):
    return jnp.maximum(v, _SLOPE * v)


def _instance_norm(v, gamma, beta):
    # v: (N, C) f32 ; gamma/beta: (1, C).  Single-pass biased variance
    # (var = E[x^2] - mean^2), matching nn.InstanceNorm2d.
    inv_n = 1.0 / float(v.shape[0])
    mean = jnp.sum(v, axis=0, keepdims=True) * inv_n
    ex2 = jnp.sum(v * v, axis=0, keepdims=True) * inv_n
    var = jnp.maximum(ex2 - mean * mean, 0.0)
    rstd = lax.rsqrt(var + _EPS)
    return (v - mean) * (rstd * gamma) + beta


def _col_index(N, W):
    """Column index c = p mod W as an (N, 1) int32, computed in-kernel (no VMEM input)."""
    p = lax.broadcasted_iota(jnp.int32, (N, 1), 0)
    if W & (W - 1) == 0:
        return jnp.bitwise_and(p, W - 1)
    # TODO(synk): for non-power-of-two W verify vector integer remainder lowering
    # (never hit by StyleGAN-style power-of-two resolutions).
    return jnp.remainder(p, W)


def _fill_strip(strip_ref, h, pad, N, W, C):
    """Build the width-im2col strip for one 3x3 conv.

    strip_ref : (N + 2*pad, 3*C) bf16.  After this call, interior row pad+p holds
                [ h[p-1]*[c(p)>0] | h[p] | h[p+1]*[c(p)<W-1] ] and the W rows of halo
                above/below the interior are zero, so the dy=+-1 matmul slices need no
                row mask.  Column masks are baked in here (2 selects per conv).
    h         : (N, C) f32 activated input.
    """
    z = jnp.zeros((pad + 1, 3 * C), jnp.bfloat16)
    strip_ref[0:pad + 1, :] = z                         # top halo (+ row pad's left blk)
    strip_ref[pad + N - 1:2 * pad + N, :] = z           # bottom halo (+ last right blk)

    c = _col_index(N, W)
    ctr = h.astype(jnp.bfloat16)
    v_left = jnp.where(c < (W - 1), h, 0.0).astype(jnp.bfloat16)   # -> left block @ +1
    v_right = jnp.where(c > 0, h, 0.0).astype(jnp.bfloat16)        # -> right block @ -1

    strip_ref[pad:pad + N, C:2 * C] = ctr                          # dx = 0, aligned
    strip_ref[pad + 1:pad + 1 + N, 0:C] = v_left                   # dx = -1 block
    strip_ref[pad - 1:pad - 1 + N, 2 * C:3 * C] = v_right          # dx = +1 block


def _conv3x3(strip_ref, w_ref, pad, N, W):
    """3x3 conv as 3 matmuls with K = 3*C; value accumulation (no ref RMW)."""
    acc = jnp.dot(strip_ref[pad - W:pad - W + N, :], w_ref[0],      # dy = -1
                  preferred_element_type=jnp.float32)
    acc = acc + jnp.dot(strip_ref[pad:pad + N, :], w_ref[1],        # dy = 0
                        preferred_element_type=jnp.float32)
    acc = acc + jnp.dot(strip_ref[pad + W:pad + W + N, :], w_ref[2],  # dy = +1
                        preferred_element_type=jnp.float32)
    return acc


def _avg_pool2(src_ref, H, W):
    """2x2 average pool of an (H*W, C) ref in flattened row-major layout (f32, exact).

    Width pairs are adjacent flattened rows -> two stride-2 sublane reads; height pairs
    are Wo-row blocks offset by Wo -> static slices, unrolled over Ho.
    """
    Ho, Wo = H // 2, W // 2
    nh = H * Wo
    ws = src_ref[pl.ds(0, nh, 2), :] + src_ref[pl.ds(1, nh, 2), :]   # (H*Wo, C)
    parts = [ws[(2 * ro) * Wo:(2 * ro + 1) * Wo, :] +
             ws[(2 * ro + 1) * Wo:(2 * ro + 2) * Wo, :] for ro in range(Ho)]
    pooled = parts[0] if len(parts) == 1 else jnp.concatenate(parts, axis=0)
    return pooled * 0.25


def _make_kernel(H, W, Ho, Wo, Cin_p, Cout_p, normalize, downsample, learned_sc,
                 pad1, pad2):
    N1, N2 = H * W, Ho * Wo
    inv_sqrt2 = float(1.0 / math.sqrt(2.0))

    def kernel(*refs):
        it = iter(refs)
        x_ref = next(it)                           # (N1, Cin_p)        f32
        w1_ref = next(it)                          # (3, 3*Cin_p, Cin_p) bf16
        b1_ref = next(it)                          # (1, Cin_p)         f32
        w2_ref = next(it)                          # (3, 3*Cin_p, Cout_p) bf16
        b2_ref = next(it)                          # (1, Cout_p)        f32
        wsc_ref = next(it) if learned_sc else None # (Cin_p, Cout_p)    bf16
        if normalize:
            g1_ref, bt1_ref = next(it), next(it)   # (1, Cin_p) f32
            g2_ref, bt2_ref = next(it), next(it)
        o_ref = next(it)                           # (N2, Cout_p)       f32
        strip1_ref = next(it)                      # (N1 + 2*pad1, 3*Cin_p) bf16
        strip2_ref = next(it)                      # (N2 + 2*pad2, 3*Cin_p) bf16
        y1_ref = next(it) if downsample else None  # (N1, Cin_p)        f32

        # ---- residual, stage 1: (norm1) -> leaky -> conv1 (3 matmuls, K=3*Cin_p) ----
        h = x_ref[...]
        if normalize:
            h = _instance_norm(h, g1_ref[...], bt1_ref[...])
        h = _leaky(h)
        _fill_strip(strip1_ref, h, pad1, N1, W, Cin_p)
        y1 = _conv3x3(strip1_ref, w1_ref, pad1, N1, W) + b1_ref[...]

        # ---- avg_pool2d(2) on the residual: strided adds, no pooling matrix ----
        if downsample:
            y1_ref[...] = y1
            y2 = _avg_pool2(y1_ref, H, W)
        else:
            y2 = y1

        # ---- residual, stage 2: (norm2) -> leaky -> conv2 ----
        if normalize:
            y2 = _instance_norm(y2, g2_ref[...], bt2_ref[...])
        y2 = _leaky(y2)
        _fill_strip(strip2_ref, y2, pad2, N2, Wo, Cin_p)
        res = _conv3x3(strip2_ref, w2_ref, pad2, N2, Wo) + b2_ref[...]

        # ---- shortcut: pool (exact f32, strided adds) then optional 1x1 conv ----
        if downsample:
            sx = _avg_pool2(x_ref, H, W)
        else:
            sx = x_ref[...]
        if learned_sc:
            sc = jnp.dot(sx.astype(jnp.bfloat16), wsc_ref[...],
                         preferred_element_type=jnp.float32)
        else:
            sc = sx                                # identity, exact f32

        # ---- single fused, lane-dense store of the output block ----
        o_ref[...] = (res + sc) * inv_sqrt2

    return kernel


def resblk_pallas(x_nchw, params, *, normalize, downsample):
    """ResBlk forward. x_nchw: (B, Cin, H, W) float32, PyTorch-layout params."""
    B, Cin, H, W = x_nchw.shape
    Cout = params["w2"].shape[0]
    learned_sc = "wsc" in params
    assert learned_sc == (Cin != Cout)
    if downsample:
        assert H % 2 == 0 and W % 2 == 0, "avg_pool2d(2) requires even H and W"
    Ho, Wo = (H // 2, W // 2) if downsample else (H, W)
    N1, N2 = H * W, Ho * Wo
    Cin_p, Cout_p = _round_up(Cin, _LANE), _round_up(Cout, _LANE)
    pad1, pad2 = _round_up(W, _SUB), _round_up(Wo, _SUB)

    # NCHW -> flattened NHWC, channels zero-padded so the lane axis is dense (128).
    x = jnp.transpose(x_nchw, (0, 2, 3, 1)).astype(jnp.float32).reshape(B, N1, Cin)
    x = jnp.pad(x, ((0, 0), (0, 0), (0, Cin_p - Cin)))

    def prep_conv3(w, cpo):
        # OIHW -> (ky, kx, ci, co), zero-pad channels, merge (kx, ci) into K = 3*Cin_p.
        co, ci = w.shape[0], w.shape[1]
        t = jnp.transpose(w.astype(jnp.float32), (2, 3, 1, 0))      # (ky, kx, ci, co)
        t = jnp.pad(t, ((0, 0), (0, 0), (0, Cin_p - ci), (0, cpo - co)))
        return t.reshape(3, 3 * Cin_p, cpo).astype(jnp.bfloat16)

    def prep_row(v, cp):
        v = v.astype(jnp.float32).reshape(1, -1)
        return jnp.pad(v, ((0, 0), (0, cp - v.shape[1])))

    w1 = prep_conv3(params["w1"], Cin_p)
    w2 = prep_conv3(params["w2"], Cout_p)
    b1 = prep_row(params["b1"], Cin_p)
    b2 = prep_row(params["b2"], Cout_p)

    inputs = [x, w1, b1, w2, b2]
    if learned_sc:
        wsc = jnp.transpose(params["wsc"].reshape(Cout, Cin)).astype(jnp.float32)
        wsc = jnp.pad(wsc, ((0, Cin_p - Cin), (0, Cout_p - Cout)))
        inputs.append(wsc.astype(jnp.bfloat16))
    if normalize:
        inputs += [prep_row(params["g1"], Cin_p), prep_row(params["bt1"], Cin_p),
                   prep_row(params["g2"], Cin_p), prep_row(params["bt2"], Cin_p)]

    in_specs = [pl.BlockSpec((None, N1, Cin_p), lambda b: (b, 0, 0))]
    for a in inputs[1:]:
        in_specs.append(pl.BlockSpec(a.shape, lambda b, n=a.ndim: (0,) * n))
    out_specs = pl.BlockSpec((None, N2, Cout_p), lambda b: (b, 0, 0))

    scratch_shapes = [
        pltpu.VMEM((N1 + 2 * pad1, 3 * Cin_p), jnp.bfloat16),   # conv1 im2col strip
        pltpu.VMEM((N2 + 2 * pad2, 3 * Cin_p), jnp.bfloat16),   # conv2 im2col strip
    ]
    if downsample:
        scratch_shapes.append(pltpu.VMEM((N1, Cin_p), jnp.float32))  # conv1 out (pool src)

    # Explicit VMEM budget: scratch + double-buffered x/out blocks + (2x) constants.
    scratch_bytes = (2 * (N1 + 2 * pad1) * 3 * Cin_p
                     + 2 * (N2 + 2 * pad2) * 3 * Cin_p
                     + (4 * N1 * Cin_p if downsample else 0))
    io_bytes = 2 * (4 * N1 * Cin_p) + 2 * (4 * N2 * Cout_p)
    const_bytes = 2 * sum(int(a.size) * a.dtype.itemsize for a in inputs[1:])
    vmem_limit = int(min(128 * 2 ** 20,
                         max(32 * 2 ** 20,
                             int(1.5 * (scratch_bytes + io_bytes + const_bytes)))))

    kernel = _make_kernel(H, W, Ho, Wo, Cin_p, Cout_p,
                          normalize, downsample, learned_sc, pad1, pad2)

    out = pl.pallas_call(
        kernel,
        out_shape=jax.ShapeDtypeStruct((B, N2, Cout_p), jnp.float32),
        grid_spec=pltpu.PrefetchScalarGridSpec(
            num_scalar_prefetch=0,
            grid=(B,),
            in_specs=in_specs,
            out_specs=out_specs,
            scratch_shapes=scratch_shapes),
        compiler_params=pltpu.CompilerParams(
            dimension_semantics=("parallel",),      # no cross-step state -> safe split
            vmem_limit_bytes=vmem_limit),
    )(*inputs)

    out = out[:, :, :Cout].reshape(B, Ho, Wo, Cout)
    return jnp.transpose(out, (0, 3, 1, 2))                     # back to NCHW


# ------------------------- pure-JAX reference (NCHW) -------------------------
def resblk_reference(x, params, *, normalize, downsample):
    prec = lax.Precision.HIGHEST

    def conv3x3(v, w, b):
        y = lax.conv_general_dilated(v, w, (1, 1), ((1, 1), (1, 1)),
                                     dimension_numbers=("NCHW", "OIHW", "NCHW"),
                                     precision=prec)
        return y + b[None, :, None, None]

    def conv1x1(v, w):
        return lax.conv_general_dilated(v, w, (1, 1), "VALID",
                                        dimension_numbers=("NCHW", "OIHW", "NCHW"),
                                        precision=prec)

    def inorm(v, g, bta):
        m = v.mean(axis=(2, 3), keepdims=True)
        var = ((v - m) ** 2).mean(axis=(2, 3), keepdims=True)
        return (v - m) / jnp.sqrt(var + _EPS) * g[None, :, None, None] + bta[None, :, None, None]

    def leaky(v):
        return jnp.where(v >= 0, v, _SLOPE * v)

    def pool(v):
        B, C, H, W = v.shape
        return v.reshape(B, C, H // 2, 2, W // 2, 2).mean(axis=(3, 5))

    s = x
    if "wsc" in params:
        s = conv1x1(s, params["wsc"])
    if downsample:
        s = pool(s)

    r = x
    if normalize:
        r = inorm(r, params["g1"], params["bt1"])
    r = leaky(r)
    r = conv3x3(r, params["w1"], params["b1"])
    if downsample:
        r = pool(r)
    if normalize:
        r = inorm(r, params["g2"], params["bt2"])
    r = leaky(r)
    r = conv3x3(r, params["w2"], params["b2"])

    return (s + r) / math.sqrt(2.0)


def init_resblk_params(key, dim_in, dim_out, normalize):
    ks = jax.random.split(key, 9)
    p = {
        "w1": jax.random.normal(ks[0], (dim_in, dim_in, 3, 3), jnp.float32) / math.sqrt(9 * dim_in),
        "b1": 0.1 * jax.random.normal(ks[1], (dim_in,), jnp.float32),
        "w2": jax.random.normal(ks[2], (dim_out, dim_in, 3, 3), jnp.float32) / math.sqrt(9 * dim_in),
        "b2": 0.1 * jax.random.normal(ks[3], (dim_out,), jnp.float32),
    }
    if dim_in != dim_out:  # learned shortcut
        p["wsc"] = jax.random.normal(ks[4], (dim_out, dim_in, 1, 1), jnp.float32) / math.sqrt(dim_in)
    if normalize:
        p["g1"] = 1.0 + 0.1 * jax.random.normal(ks[5], (dim_in,), jnp.float32)
        p["bt1"] = 0.1 * jax.random.normal(ks[6], (dim_in,), jnp.float32)
        p["g2"] = 1.0 + 0.1 * jax.random.normal(ks[7], (dim_in,), jnp.float32)
        p["bt2"] = 0.1 * jax.random.normal(ks[8], (dim_in,), jnp.float32)
    return p


if __name__ == "__main__":
    key = jax.random.PRNGKey(0)
    B, H, W = 2, 16, 16
    configs = [
        dict(dim_in=4, dim_out=8, normalize=True, downsample=True),    # full-featured block
        dict(dim_in=4, dim_out=4, normalize=False, downsample=False),  # default ResBlk flags
    ]
    for i, cfg in enumerate(configs):
        kx, kp = jax.random.split(jax.random.fold_in(key, i))
        x = jax.random.normal(kx, (B, cfg["dim_in"], H, W), jnp.float32)
        params = init_resblk_params(kp, cfg["dim_in"], cfg["dim_out"], cfg["normalize"])

        out = resblk_pallas(x, params, normalize=cfg["normalize"], downsample=cfg["downsample"])
        out = jax.block_until_ready(out)

        ref = resblk_reference(x, params, normalize=cfg["normalize"], downsample=cfg["downsample"])
        assert out.shape == ref.shape, (out.shape, ref.shape)
        assert bool(jnp.allclose(out, ref, rtol=2e-2, atol=2e-2)), float(jnp.max(jnp.abs(out - ref)))

    print("KERNEL_OK")
</pallas_src>

<mosaic_0001>
module attributes {stable_mosaic.version = 11 : i64} {
  func.func @kernel(%arg0: i32, %arg1: memref<1x256x128xf32, #tpu.memory_space<vmem>>, %arg2: memref<3x384x128xbf16, #tpu.memory_space<vmem>>, %arg3: memref<1x128xf32, #tpu.memory_space<vmem>>, %arg4: memref<3x384x128xbf16, #tpu.memory_space<vmem>>, %arg5: memref<1x128xf32, #tpu.memory_space<vmem>>, %arg6: memref<128x128xbf16, #tpu.memory_space<vmem>>, %arg7: memref<1x128xf32, #tpu.memory_space<vmem>>, %arg8: memref<1x128xf32, #tpu.memory_space<vmem>>, %arg9: memref<1x128xf32, #tpu.memory_space<vmem>>, %arg10: memref<1x128xf32, #tpu.memory_space<vmem>>, %arg11: memref<1x64x128xf32, #tpu.memory_space<vmem>>, %arg12: memref<288x384xbf16, #tpu.memory_space<vmem>>, %arg13: memref<80x384xbf16, #tpu.memory_space<vmem>>, %arg14: memref<256x128xf32, #tpu.memory_space<vmem>>) attributes {dimension_semantics = [#tpu.dimension_semantics<parallel>], iteration_bounds = array<i64: 2>, scalar_prefetch = 0 : i64, scratch_operands = 3 : i64, tpu.core_type = #tpu.core_type<tc>, window_params = [{transform_indices = @transform_0, window_bounds = array<i64: 1, 256, 128>}, {pipeline_mode = #tpu.pipeline_mode<synchronous>, transform_indices = @transform_1, window_bounds = array<i64: 3, 384, 128>}, {pipeline_mode = #tpu.pipeline_mode<synchronous>, transform_indices = @transform_2, window_bounds = array<i64: 1, 128>}, {pipeline_mode = #tpu.pipeline_mode<synchronous>, transform_indices = @transform_3, window_bounds = array<i64: 3, 384, 128>}, {pipeline_mode = #tpu.pipeline_mode<synchronous>, transform_indices = @transform_4, window_bounds = array<i64: 1, 128>}, {pipeline_mode = #tpu.pipeline_mode<synchronous>, transform_indices = @transform_5, window_bounds = array<i64: 128, 128>}, {pipeline_mode = #tpu.pipeline_mode<synchronous>, transform_indices = @transform_6, window_bounds = array<i64: 1, 128>}, {pipeline_mode = #tpu.pipeline_mode<synchronous>, transform_indices = @transform_7, window_bounds = array<i64: 1, 128>}, {pipeline_mode = #tpu.pipeline_mode<synchronous>, transform_indices = @transform_8, window_bounds = array<i64: 1, 128>}, {pipeline_mode = #tpu.pipeline_mode<synchronous>, transform_indices = @transform_9, window_bounds = array<i64: 1, 128>}, {transform_indices = @transform_10, window_bounds = array<i64: 1, 64, 128>}]} {
    %c0 = arith.constant 0 : index
    %c0_0 = arith.constant 0 : index
    %c0_1 = arith.constant 0 : index
    %0 = vector.load %arg1[%c0, %c0_0, %c0_1] : memref<1x256x128xf32, #tpu.memory_space<vmem>>, vector<1x256x128xf32>
    %1 = vector.shape_cast %0 : vector<1x256x128xf32> to vector<256x128xf32>
    %c0_2 = arith.constant 0 : index
    %c0_3 = arith.constant 0 : index
    %2 = vector.load %arg7[%c0_2, %c0_3] : memref<1x128xf32, #tpu.memory_space<vmem>>, vector<1x128xf32>
    %c0_4 = arith.constant 0 : index
    %c0_5 = arith.constant 0 : index
    %3 = vector.load %arg8[%c0_4, %c0_5] : memref<1x128xf32, #tpu.memory_space<vmem>>, vector<1x128xf32>
    %cst = arith.constant dense<0.000000e+00> : vector<128xf32>
    %4 = vector.multi_reduction <add>, %1, %cst [0] : vector<256x128xf32> to vector<128xf32>
    %5 = vector.shape_cast %4 : vector<128xf32> to vector<1x128xf32>
    %cst_6 = arith.constant 3.906250e-03 : f32
    %6 = vector.broadcast %cst_6 : f32 to vector<1x128xf32>
    %7 = arith.mulf %5, %6 : vector<1x128xf32>
    %8 = arith.mulf %1, %1 : vector<256x128xf32>
    %cst_7 = arith.constant dense<0.000000e+00> : vector<128xf32>
    %9 = vector.multi_reduction <add>, %8, %cst_7 [0] : vector<256x128xf32> to vector<128xf32>
    %10 = vector.shape_cast %9 : vector<128xf32> to vector<1x128xf32>
    %cst_8 = arith.constant 3.906250e-03 : f32
    %11 = vector.broadcast %cst_8 : f32 to vector<1x128xf32>
    %12 = arith.mulf %10, %11 : vector<1x128xf32>
    %13 = arith.mulf %7, %7 : vector<1x128xf32>
    %14 = arith.subf %12, %13 : vector<1x128xf32>
    %cst_9 = arith.constant 0.000000e+00 : f32
    %15 = vector.broadcast %cst_9 : f32 to vector<1x128xf32>
    %16 = arith.maximumf %14, %15 : vector<1x128xf32>
    %cst_10 = arith.constant 9.99999974E-6 : f32
    %17 = vector.broadcast %cst_10 : f32 to vector<1x128xf32>
    %18 = arith.addf %16, %17 : vector<1x128xf32>
    %19 = math.rsqrt %18 : vector<1x128xf32>
    %20 = vector.broadcast %7 : vector<1x128xf32> to vector<256x128xf32>
    %21 = arith.subf %1, %20 : vector<256x128xf32>
    %22 = arith.mulf %19, %2 : vector<1x128xf32>
    %23 = vector.broadcast %22 : vector<1x128xf32> to vector<256x128xf32>
    %24 = arith.mulf %21, %23 : vector<256x128xf32>
    %25 = vector.broadcast %3 : vector<1x128xf32> to vector<256x128xf32>
    %26 = arith.addf %24, %25 : vector<256x128xf32>
    %cst_11 = arith.constant 2.000000e-01 : f32
    %27 = vector.broadcast %cst_11 : f32 to vector<256x128xf32>
    %28 = arith.mulf %27, %26 : vector<256x128xf32>
    %29 = arith.maximumf %26, %28 : vector<256x128xf32>
    %cst_12 = arith.constant 0.000000e+00 : bf16
    %30 = vector.broadcast %cst_12 : bf16 to vector<17x384xbf16>
    %c0_13 = arith.constant 0 : index
    %c0_14 = arith.constant 0 : index
    %31 = vector.load %arg12[%c0_13, %c0_14] : memref<288x384xbf16, #tpu.memory_space<vmem>>, vector<17x384xbf16>
    tpu.vector_store %arg12[%c0_13, %c0_14], %30 {strides = array<i32>} : memref<288x384xbf16, #tpu.memory_space<vmem>>, vector<17x384xbf16>,
    %c271 = arith.constant 271 : index
    %c0_15 = arith.constant 0 : index
    %32 = vector.load %arg12[%c271, %c0_15] : memref<288x384xbf16, #tpu.memory_space<vmem>>, vector<17x384xbf16>
    tpu.vector_store %arg12[%c271, %c0_15], %30 {strides = array<i32>} : memref<288x384xbf16, #tpu.memory_space<vmem>>, vector<17x384xbf16>,
    %33 = tpu.iota {dimensions = array<i32: 0>} : vector<256x1xi32>
    %c15_i32 = arith.constant 15 : i32
    %34 = vector.broadcast %c15_i32 : i32 to vector<256x1xi32>
    %35 = arith.andi %33, %34 : vector<256x1xi32>
    %36 = arith.truncf %29 : vector<256x128xf32> to vector<256x128xbf16>
    %c15_i32_16 = arith.constant 15 : i32
    %37 = vector.broadcast %c15_i32_16 : i32 to vector<256x1xi32>
    %38 = arith.cmpi slt, %35, %37 : vector<256x1xi32>
    %cst_17 = arith.constant 0.000000e+00 : f32
    %39 = vector.shape_cast %38 : vector<256x1xi1> to vector<256x1xi1>
    %40 = vector.broadcast %39 : vector<256x1xi1> to vector<256x128xi1>
    %41 = vector.broadcast %cst_17 : f32 to vector<256x128xf32>
    %42 = arith.select %40, %29, %41 : vector<256x128xi1>, vector<256x128xf32>
    %43 = arith.truncf %42 : vector<256x128xf32> to vector<256x128xbf16>
    %c0_i32 = arith.constant 0 : i32
    %44 = vector.broadcast %c0_i32 : i32 to vector<256x1xi32>
    %45 = arith.cmpi sgt, %35, %44 : vector<256x1xi32>
    %cst_18 = arith.constant 0.000000e+00 : f32
    %46 = vector.shape_cast %45 : vector<256x1xi1> to vector<256x1xi1>
    %47 = vector.broadcast %46 : vector<256x1xi1> to vector<256x128xi1>
    %48 = vector.broadcast %cst_18 : f32 to vector<256x128xf32>
    %49 = arith.select %47, %29, %48 : vector<256x128xi1>, vector<256x128xf32>
    %50 = arith.truncf %49 : vector<256x128xf32> to vector<256x128xbf16>
    %c16 = arith.constant 16 : index
    %c128 = arith.constant 128 : index
    %51 = vector.load %arg12[%c16, %c128] : memref<288x384xbf16, #tpu.memory_space<vmem>>, vector<256x128xbf16>
    tpu.vector_store %arg12[%c16, %c128], %36 {strides = array<i32>} : memref<288x384xbf16, #tpu.memory_space<vmem>>, vector<256x128xbf16>,
    %c17 = arith.constant 17 : index
    %c0_19 = arith.constant 0 : index
    %52 = vector.load %arg12[%c17, %c0_19] : memref<288x384xbf16, #tpu.memory_space<vmem>>, vector<256x128xbf16>
    tpu.vector_store %arg12[%c17, %c0_19], %43 {strides = array<i32>} : memref<288x384xbf16, #tpu.memory_space<vmem>>, vector<256x128xbf16>,
    %c15 = arith.constant 15 : index
    %c256 = arith.constant 256 : index
    %53 = vector.load %arg12[%c15, %c256] : memref<288x384xbf16, #tpu.memory_space<vmem>>, vector<256x128xbf16>
    tpu.vector_store %arg12[%c15, %c256], %50 {strides = array<i32>} : memref<288x384xbf16, #tpu.memory_space<vmem>>, vector<256x128xbf16>,
    %c0_20 = arith.constant 0 : index
    %c0_21 = arith.constant 0 : index
    %54 = vector.load %arg12[%c0_20, %c0_21] : memref<288x384xbf16, #tpu.memory_space<vmem>>, vector<256x384xbf16>
    %c0_22 = arith.constant 0 : index
    %c0_23 = arith.constant 0 : index
    %c0_24 = arith.constant 0 : index
    %55 = vector.load %arg2[%c0_22, %c0_23, %c0_24] : memref<3x384x128xbf16, #tpu.memory_space<vmem>>, vector<1x384x128xbf16>
    %56 = vector.shape_cast %55 : vector<1x384x128xbf16> to vector<384x128xbf16>
    %cst_25 = arith.constant dense<0.000000e+00> : vector<256x128xf32>
    %57 = tpu.matmul %54, %56, %cst_25 {dimension_numbers = #tpu.dot_dimension_numbers<[1], [0], [0], [1], [0, 0, 1, 1], [], []>} : vector<256x384xbf16>, vector<384x128xbf16>, vector<256x128xf32> -> vector<256x128xf32>
    %c16_26 = arith.constant 16 : index
    %c0_27 = arith.constant 0 : index
    %58 = vector.load %arg12[%c16_26, %c0_27] : memref<288x384xbf16, #tpu.memory_space<vmem>>, vector<256x384xbf16>
    %c1 = arith.constant 1 : index
    %c0_28 = arith.constant 0 : index
    %c0_29 = arith.constant 0 : index
    %59 = vector.load %arg2[%c1, %c0_28, %c0_29] : memref<3x384x128xbf16, #tpu.memory_space<vmem>>, vector<1x384x128xbf16>
    %60 = vector.shape_cast %59 : vector<1x384x128xbf16> to vector<384x128xbf16>
    %cst_30 = arith.constant dense<0.000000e+00> : vector<256x128xf32>
    %61 = tpu.matmul %58, %60, %cst_30 {dimension_numbers = #tpu.dot_dimension_numbers<[1], [0], [0], [1], [0, 0, 1, 1], [], []>} : vector<256x384xbf16>, vector<384x128xbf16>, vector<256x128xf32> -> vector<256x128xf32>
    %62 = arith.addf %57, %61 : vector<256x128xf32>
    %c32 = arith.constant 32 : index
    %c0_31 = arith.constant 0 : index
    %63 = vector.load %arg12[%c32, %c0_31] : memref<288x384xbf16, #tpu.memory_space<vmem>>, vector<256x384xbf16>
    %c2 = arith.constant 2 : index
    %c0_32 = arith.constant 0 : index
    %c0_33 = arith.constant 0 : index
    %64 = vector.load %arg2[%c2, %c0_32, %c0_33] : memref<3x384x128xbf16, #tpu.memory_space<vmem>>, vector<1x384x128xbf16>
    %65 = vector.shape_cast %64 : vector<1x384x128xbf16> to vector<384x128xbf16>
    %cst_34 = arith.constant dense<0.000000e+00> : vector<256x128xf32>
    %66 = tpu.matmul %63, %65, %cst_34 {dimension_numbers = #tpu.dot_dimension_numbers<[1], [0], [0], [1], [0, 0, 1, 1], [], []>} : vector<256x384xbf16>, vector<384x128xbf16>, vector<256x128xf32> -> vector<256x128xf32>
    %67 = arith.addf %62, %66 : vector<256x128xf32>
    %c0_35 = arith.constant 0 : index
    %c0_36 = arith.constant 0 : index
    %68 = vector.load %arg3[%c0_35, %c0_36] : memref<1x128xf32, #tpu.memory_space<vmem>>, vector<1x128xf32>
    %69 = vector.broadcast %68 : vector<1x128xf32> to vector<256x128xf32>
    %70 = arith.addf %67, %69 : vector<256x128xf32>
    %c0_37 = arith.constant 0 : index
    %c0_38 = arith.constant 0 : index
    %71 = vector.load %arg14[%c0_37, %c0_38] : memref<256x128xf32, #tpu.memory_space<vmem>>, vector<256x128xf32>
    tpu.vector_store %arg14[%c0_37, %c0_38], %70 {strides = array<i32>} : memref<256x128xf32, #tpu.memory_space<vmem>>, vector<256x128xf32>,
    %c0_39 = arith.constant 0 : index
    %c0_40 = arith.constant 0 : index
    %72 = tpu.strided_load %arg14[%c0_39, %c0_40] {strides = array<i32: 2, 1>} : memref<256x128xf32, #tpu.memory_space<vmem>>, vector<128x128xf32>
    %c1_41 = arith.constant 1 : index
    %c0_42 = arith.constant 0 : index
    %73 = tpu.strided_load %arg14[%c1_41, %c0_42] {strides = array<i32: 2, 1>} : memref<256x128xf32, #tpu.memory_space<vmem>>, vector<128x128xf32>
    %74 = arith.addf %72, %73 : vector<128x128xf32>
    %75 = vector.extract_strided_slice %74 {offsets = [0, 0], sizes = [8, 128], strides = [1, 1]} : vector<128x128xf32> to vector<8x128xf32>
    %76 = vector.extract_strided_slice %74 {offsets = [8, 0], sizes = [8, 128], strides = [1, 1]} : vector<128x128xf32> to vector<8x128xf32>
    %77 = arith.addf %75, %76 : vector<8x128xf32>
    %78 = vector.extract_strided_slice %74 {offsets = [16, 0], sizes = [8, 128], strides = [1, 1]} : vector<128x128xf32> to vector<8x128xf32>
    %79 = vector.extract_strided_slice %74 {offsets = [24, 0], sizes = [8, 128], strides = [1, 1]} : vector<128x128xf32> to vector<8x128xf32>
    %80 = arith.addf %78, %79 : vector<8x128xf32>
    %81 = vector.extract_strided_slice %74 {offsets = [32, 0], sizes = [8, 128], strides = [1, 1]} : vector<128x128xf32> to vector<8x128xf32>
    %82 = vector.extract_strided_slice %74 {offsets = [40, 0], sizes = [8, 128], strides = [1, 1]} : vector<128x128xf32> to vector<8x128xf32>
    %83 = arith.addf %81, %82 : vector<8x128xf32>
    %84 = vector.extract_strided_slice %74 {offsets = [48, 0], sizes = [8, 128], strides = [1, 1]} : vector<128x128xf32> to vector<8x128xf32>
    %85 = vector.extract_strided_slice %74 {offsets = [56, 0], sizes = [8, 128], strides = [1, 1]} : vector<128x128xf32> to vector<8x128xf32>
    %86 = arith.addf %84, %85 : vector<8x128xf32>
    %87 = vector.extract_strided_slice %74 {offsets = [64, 0], sizes = [8, 128], strides = [1, 1]} : vector<128x128xf32> to vector<8x128xf32>
    %88 = vector.extract_strided_slice %74 {offsets = [72, 0], sizes = [8, 128], strides = [1, 1]} : vector<128x128xf32> to vector<8x128xf32>
    %89 = arith.addf %87, %88 : vector<8x128xf32>
    %90 = vector.extract_strided_slice %74 {offsets = [80, 0], sizes = [8, 128], strides = [1, 1]} : vector<128x128xf32> to vector<8x128xf32>
    %91 = vector.extract_strided_slice %74 {offsets = [88, 0], sizes = [8, 128], strides = [1, 1]} : vector<128x128xf32> to vector<8x128xf32>
    %92 = arith.addf %90, %91 : vector<8x128xf32>
    %93 = vector.extract_strided_slice %74 {offsets = [96, 0], sizes = [8, 128], strides = [1, 1]} : vector<128x128xf32> to vector<8x128xf32>
    %94 = vector.extract_strided_slice %74 {offsets = [104, 0], sizes = [8, 128], strides = [1, 1]} : vector<128x128xf32> to vector<8x128xf32>
    %95 = arith.addf %93, %94 : vector<8x128xf32>
    %96 = vector.extract_strided_slice %74 {offsets = [112, 0], sizes = [8, 128], strides = [1, 1]} : vector<128x128xf32> to vector<8x128xf32>
    %97 = vector.extract_strided_slice %74 {offsets = [120, 0], sizes = [8, 128], strides = [1, 1]} : vector<128x128xf32> to vector<8x128xf32>
    %98 = arith.addf %96, %97 : vector<8x128xf32>
    %99 = tpu.concatenate %77, %80, %83, %86, %89, %92, %95, %98 in 0 : vector<8x128xf32>, vector<8x128xf32>, vector<8x128xf32>, vector<8x128xf32>, vector<8x128xf32>, vector<8x128xf32>, vector<8x128xf32>, vector<8x128xf32> -> vector<64x128xf32>
    %cst_43 = arith.constant 2.500000e-01 : f32
    %100 = vector.broadcast %cst_43 : f32 to vector<64x128xf32>
    %101 = arith.mulf %99, %100 : vector<64x128xf32>
    %c0_44 = arith.constant 0 : index
    %c0_45 = arith.constant 0 : index
    %102 = vector.load %arg9[%c0_44, %c0_45] : memref<1x128xf32, #tpu.memory_space<vmem>>, vector<1x128xf32>
    %c0_46 = arith.constant 0 : index
    %c0_47 = arith.constant 0 : index
    %103 = vector.load %arg10[%c0_46, %c0_47] : memref<1x128xf32, #tpu.memory_space<vmem>>, vector<1x128xf32>
    %cst_48 = arith.constant dense<0.000000e+00> : vector<128xf32>
    %104 = vector.multi_reduction <add>, %101, %cst_48 [0] : vector<64x128xf32> to vector<128xf32>
    %105 = vector.shape_cast %104 : vector<128xf32> to vector<1x128xf32>
    %cst_49 = arith.constant 1.562500e-02 : f32
    %106 = vector.broadcast %cst_49 : f32 to vector<1x128xf32>
    %107 = arith.mulf %105, %106 : vector<1x128xf32>
    %108 = arith.mulf %101, %101 : vector<64x128xf32>
    %cst_50 = arith.constant dense<0.000000e+00> : vector<128xf32>
    %109 = vector.multi_reduction <add>, %108, %cst_50 [0] : vector<64x128xf32> to vector<128xf32>
    %110 = vector.shape_cast %109 : vector<128xf32> to vector<1x128xf32>
    %cst_51 = arith.constant 1.562500e-02 : f32
    %111 = vector.broadcast %cst_51 : f32 to vector<1x128xf32>
    %112 = arith.mulf %110, %111 : vector<1x128xf32>
    %113 = arith.mulf %107, %107 : vector<1x128xf32>
    %114 = arith.subf %112, %113 : vector<1x128xf32>
    %cst_52 = arith.constant 0.000000e+00 : f32
    %115 = vector.broadcast %cst_52 : f32 to vector<1x128xf32>
    %116 = arith.maximumf %114, %115 : vector<1x128xf32>
    %cst_53 = arith.constant 9.99999974E-6 : f32
    %117 = vector.broadcast %cst_53 : f32 to vector<1x128xf32>
    %118 = arith.addf %116, %117 : vector<1x128xf32>
    %119 = math.rsqrt %118 : vector<1x128xf32>
    %120 = vector.broadcast %107 : vector<1x128xf32> to vector<64x128xf32>
    %121 = arith.subf %101, %120 : vector<64x128xf32>
    %122 = arith.mulf %119, %102 : vector<1x128xf32>
    %123 = vector.broadcast %122 : vector<1x128xf32> to vector<64x128xf32>
    %124 = arith.mulf %121, %123 : vector<64x128xf32>
    %125 = vector.broadcast %103 : vector<1x128xf32> to vector<64x128xf32>
    %126 = arith.addf %124, %125 : vector<64x128xf32>
    %cst_54 = arith.constant 2.000000e-01 : f32
    %127 = vector.broadcast %cst_54 : f32 to vector<64x128xf32>
    %128 = arith.mulf %127, %126 : vector<64x128xf32>
    %129 = arith.maximumf %126, %128 : vector<64x128xf32>
    %cst_55 = arith.constant 0.000000e+00 : bf16
    %130 = vector.broadcast %cst_55 : bf16 to vector<9x384xbf16>
    %c0_56 = arith.constant 0 : index
    %c0_57 = arith.constant 0 : index
    %131 = vector.load %arg13[%c0_56, %c0_57] : memref<80x384xbf16, #tpu.memory_space<vmem>>, vector<9x384xbf16>
    tpu.vector_store %arg13[%c0_56, %c0_57], %130 {strides = array<i32>} : memref<80x384xbf16, #tpu.memory_space<vmem>>, vector<9x384xbf16>,
    %c71 = arith.constant 71 : index
    %c0_58 = arith.constant 0 : index
    %132 = vector.load %arg13[%c71, %c0_58] : memref<80x384xbf16, #tpu.memory_space<vmem>>, vector<9x384xbf16>
    tpu.vector_store %arg13[%c71, %c0_58], %130 {strides = array<i32>} : memref<80x384xbf16, #tpu.memory_space<vmem>>, vector<9x384xbf16>,
    %133 = tpu.iota {dimensions = array<i32: 0>} : vector<64x1xi32>
    %c7_i32 = arith.constant 7 : i32
    %134 = vector.broadcast %c7_i32 : i32 to vector<64x1xi32>
    %135 = arith.andi %133, %134 : vector<64x1xi32>
    %136 = arith.truncf %129 : vector<64x128xf32> to vector<64x128xbf16>
    %c7_i32_59 = arith.constant 7 : i32
    %137 = vector.broadcast %c7_i32_59 : i32 to vector<64x1xi32>
    %138 = arith.cmpi slt, %135, %137 : vector<64x1xi32>
    %cst_60 = arith.constant 0.000000e+00 : f32
    %139 = vector.shape_cast %138 : vector<64x1xi1> to vector<64x1xi1>
    %140 = vector.broadcast %139 : vector<64x1xi1> to vector<64x128xi1>
    %141 = vector.broadcast %cst_60 : f32 to vector<64x128xf32>
    %142 = arith.select %140, %129, %141 : vector<64x128xi1>, vector<64x128xf32>
    %143 = arith.truncf %142 : vector<64x128xf32> to vector<64x128xbf16>
    %c0_i32_61 = arith.constant 0 : i32
    %144 = vector.broadcast %c0_i32_61 : i32 to vector<64x1xi32>
    %145 = arith.cmpi sgt, %135, %144 : vector<64x1xi32>
    %cst_62 = arith.constant 0.000000e+00 : f32
    %146 = vector.shape_cast %145 : vector<64x1xi1> to vector<64x1xi1>
    %147 = vector.broadcast %146 : vector<64x1xi1> to vector<64x128xi1>
    %148 = vector.broadcast %cst_62 : f32 to vector<64x128xf32>
    %149 = arith.select %147, %129, %148 : vector<64x128xi1>, vector<64x128xf32>
    %150 = arith.truncf %149 : vector<64x128xf32> to vector<64x128xbf16>
    %c8 = arith.constant 8 : index
    %c128_63 = arith.constant 128 : index
    %151 = vector.load %arg13[%c8, %c128_63] : memref<80x384xbf16, #tpu.memory_space<vmem>>, vector<64x128xbf16>
    tpu.vector_store %arg13[%c8, %c128_63], %136 {strides = array<i32>} : memref<80x384xbf16, #tpu.memory_space<vmem>>, vector<64x128xbf16>,
    %c9 = arith.constant 9 : index
    %c0_64 = arith.constant 0 : index
    %152 = vector.load %arg13[%c9, %c0_64] : memref<80x384xbf16, #tpu.memory_space<vmem>>, vector<64x128xbf16>
    tpu.vector_store %arg13[%c9, %c0_64], %143 {strides = array<i32>} : memref<80x384xbf16, #tpu.memory_space<vmem>>, vector<64x128xbf16>,
    %c7 = arith.constant 7 : index
    %c256_65 = arith.constant 256 : index
    %153 = vector.load %arg13[%c7, %c256_65] : memref<80x384xbf16, #tpu.memory_space<vmem>>, vector<64x128xbf16>
    tpu.vector_store %arg13[%c7, %c256_65], %150 {strides = array<i32>} : memref<80x384xbf16, #tpu.memory_space<vmem>>, vector<64x128xbf16>,
    %c0_66 = arith.constant 0 : index
    %c0_67 = arith.constant 0 : index
    %154 = vector.load %arg13[%c0_66, %c0_67] : memref<80x384xbf16, #tpu.memory_space<vmem>>, vector<64x384xbf16>
    %c0_68 = arith.constant 0 : index
    %c0_69 = arith.constant 0 : index
    %c0_70 = arith.constant 0 : index
    %155 = vector.load %arg4[%c0_68, %c0_69, %c0_70] : memref<3x384x128xbf16, #tpu.memory_space<vmem>>, vector<1x384x128xbf16>
    %156 = vector.shape_cast %155 : vector<1x384x128xbf16> to vector<384x128xbf16>
    %cst_71 = arith.constant dense<0.000000e+00> : vector<64x128xf32>
    %157 = tpu.matmul %154, %156, %cst_71 {dimension_numbers = #tpu.dot_dimension_numbers<[1], [0], [0], [1], [0, 0, 1, 1], [], []>} : vector<64x384xbf16>, vector<384x128xbf16>, vector<64x128xf32> -> vector<64x128xf32>
    %c8_72 = arith.constant 8 : index
    %c0_73 = arith.constant 0 : index
    %158 = vector.load %arg13[%c8_72, %c0_73] : memref<80x384xbf16, #tpu.memory_space<vmem>>, vector<64x384xbf16>
    %c1_74 = arith.constant 1 : index
    %c0_75 = arith.constant 0 : index
    %c0_76 = arith.constant 0 : index
    %159 = vector.load %arg4[%c1_74, %c0_75, %c0_76] : memref<3x384x128xbf16, #tpu.memory_space<vmem>>, vector<1x384x128xbf16>
    %160 = vector.shape_cast %159 : vector<1x384x128xbf16> to vector<384x128xbf16>
    %cst_77 = arith.constant dense<0.000000e+00> : vector<64x128xf32>
    %161 = tpu.matmul %158, %160, %cst_77 {dimension_numbers = #tpu.dot_dimension_numbers<[1], [0], [0], [1], [0, 0, 1, 1], [], []>} : vector<64x384xbf16>, vector<384x128xbf16>, vector<64x128xf32> -> vector<64x128xf32>
    %162 = arith.addf %157, %161 : vector<64x128xf32>
    %c16_78 = arith.constant 16 : index
    %c0_79 = arith.constant 0 : index
    %163 = vector.load %arg13[%c16_78, %c0_79] : memref<80x384xbf16, #tpu.memory_space<vmem>>, vector<64x384xbf16>
    %c2_80 = arith.constant 2 : index
    %c0_81 = arith.constant 0 : index
    %c0_82 = arith.constant 0 : index
    %164 = vector.load %arg4[%c2_80, %c0_81, %c0_82] : memref<3x384x128xbf16, #tpu.memory_space<vmem>>, vector<1x384x128xbf16>
    %165 = vector.shape_cast %164 : vector<1x384x128xbf16> to vector<384x128xbf16>
    %cst_83 = arith.constant dense<0.000000e+00> : vector<64x128xf32>
    %166 = tpu.matmul %163, %165, %cst_83 {dimension_numbers = #tpu.dot_dimension_numbers<[1], [0], [0], [1], [0, 0, 1, 1], [], []>} : vector<64x384xbf16>, vector<384x128xbf16>, vector<64x128xf32> -> vector<64x128xf32>
    %167 = arith.addf %162, %166 : vector<64x128xf32>
    %c0_84 = arith.constant 0 : index
    %c0_85 = arith.constant 0 : index
    %168 = vector.load %arg5[%c0_84, %c0_85] : memref<1x128xf32, #tpu.memory_space<vmem>>, vector<1x128xf32>
    %169 = vector.broadcast %168 : vector<1x128xf32> to vector<64x128xf32>
    %170 = arith.addf %167, %169 : vector<64x128xf32>
    %c0_86 = arith.constant 0 : index
    %c0_87 = arith.constant 0 : index
    %c0_88 = arith.constant 0 : index
    %171 = tpu.strided_load %arg1[%c0_86, %c0_87, %c0_88] {strides = array<i32: 1, 2, 1>} : memref<1x256x128xf32, #tpu.memory_space<vmem>>, vector<1x128x128xf32>
    %172 = vector.shape_cast %171 : vector<1x128x128xf32> to vector<128x128xf32>
    %c0_89 = arith.constant 0 : index
    %c1_90 = arith.constant 1 : index
    %c0_91 = arith.constant 0 : index
    %173 = tpu.strided_load %arg1[%c0_89, %c1_90, %c0_91] {strides = array<i32: 1, 2, 1>} : memref<1x256x128xf32, #tpu.memory_space<vmem>>, vector<1x128x128xf32>
    %174 = vector.shape_cast %173 : vector<1x128x128xf32> to vector<128x128xf32>
    %175 = arith.addf %172, %174 : vector<128x128xf32>
    %176 = vector.extract_strided_slice %175 {offsets = [0, 0], sizes = [8, 128], strides = [1, 1]} : vector<128x128xf32> to vector<8x128xf32>
    %177 = vector.extract_strided_slice %175 {offsets = [8, 0], sizes = [8, 128], strides = [1, 1]} : vector<128x128xf32> to vector<8x128xf32>
    %178 = arith.addf %176, %177 : vector<8x128xf32>
    %179 = vector.extract_strided_slice %175 {offsets = [16, 0], sizes = [8, 128], strides = [1, 1]} : vector<128x128xf32> to vector<8x128xf32>
    %180 = vector.extract_strided_slice %175 {offsets = [24, 0], sizes = [8, 128], strides = [1, 1]} : vector<128x128xf32> to vector<8x128xf32>
    %181 = arith.addf %179, %180 : vector<8x128xf32>
    %182 = vector.extract_strided_slice %175 {offsets = [32, 0], sizes = [8, 128], strides = [1, 1]} : vector<128x128xf32> to vector<8x128xf32>
    %183 = vector.extract_strided_slice %175 {offsets = [40, 0], sizes = [8, 128], strides = [1, 1]} : vector<128x128xf32> to vector<8x128xf32>
    %184 = arith.addf %182, %183 : vector<8x128xf32>
    %185 = vector.extract_strided_slice %175 {offsets = [48, 0], sizes = [8, 128], strides = [1, 1]} : vector<128x128xf32> to vector<8x128xf32>
    %186 = vector.extract_strided_slice %175 {offsets = [56, 0], sizes = [8, 128], strides = [1, 1]} : vector<128x128xf32> to vector<8x128xf32>
    %187 = arith.addf %185, %186 : vector<8x128xf32>
    %188 = vector.extract_strided_slice %175 {offsets = [64, 0], sizes = [8, 128], strides = [1, 1]} : vector<128x128xf32> to vector<8x128xf32>
    %189 = vector.extract_strided_slice %175 {offsets = [72, 0], sizes = [8, 128], strides = [1, 1]} : vector<128x128xf32> to vector<8x128xf32>
    %190 = arith.addf %188, %189 : vector<8x128xf32>
    %191 = vector.extract_strided_slice %175 {offsets = [80, 0], sizes = [8, 128], strides = [1, 1]} : vector<128x128xf32> to vector<8x128xf32>
    %192 = vector.extract_strided_slice %175 {offsets = [88, 0], sizes = [8, 128], strides = [1, 1]} : vector<128x128xf32> to vector<8x128xf32>
    %193 = arith.addf %191, %192 : vector<8x128xf32>
    %194 = vector.extract_strided_slice %175 {offsets = [96, 0], sizes = [8, 128], strides = [1, 1]} : vector<128x128xf32> to vector<8x128xf32>
    %195 = vector.extract_strided_slice %175 {offsets = [104, 0], sizes = [8, 128], strides = [1, 1]} : vector<128x128xf32> to vector<8x128xf32>
    %196 = arith.addf %194, %195 : vector<8x128xf32>
    %197 = vector.extract_strided_slice %175 {offsets = [112, 0], sizes = [8, 128], strides = [1, 1]} : vector<128x128xf32> to vector<8x128xf32>
    %198 = vector.extract_strided_slice %175 {offsets = [120, 0], sizes = [8, 128], strides = [1, 1]} : vector<128x128xf32> to vector<8x128xf32>
    %199 = arith.addf %197, %198 : vector<8x128xf32>
    %200 = tpu.concatenate %178, %181, %184, %187, %190, %193, %196, %199 in 0 : vector<8x128xf32>, vector<8x128xf32>, vector<8x128xf32>, vector<8x128xf32>, vector<8x128xf32>, vector<8x128xf32>, vector<8x128xf32>, vector<8x128xf32> -> vector<64x128xf32>
    %cst_92 = arith.constant 2.500000e-01 : f32
    %201 = vector.broadcast %cst_92 : f32 to vector<64x128xf32>
    %202 = arith.mulf %200, %201 : vector<64x128xf32>
    %203 = arith.truncf %202 : vector<64x128xf32> to vector<64x128xbf16>
    %c0_93 = arith.constant 0 : index
    %c0_94 = arith.constant 0 : index
    %204 = vector.load %arg6[%c0_93, %c0_94] : memref<128x128xbf16, #tpu.memory_space<vmem>>, vector<128x128xbf16>
    %cst_95 = arith.constant dense<0.000000e+00> : vector<64x128xf32>
    %205 = tpu.matmul %203, %204, %cst_95 {dimension_numbers = #tpu.dot_dimension_numbers<[1], [0], [0], [1], [0, 0, 1, 1], [], []>} : vector<64x128xbf16>, vector<128x128xbf16>, vector<64x128xf32> -> vector<64x128xf32>
    %206 = arith.addf %170, %205 : vector<64x128xf32>
    %cst_96 = arith.constant 0.707106769 : f32
    %207 = vector.broadcast %cst_96 : f32 to vector<64x128xf32>
    %208 = arith.mulf %206, %207 : vector<64x128xf32>
    %c0_97 = arith.constant 0 : index
    %c0_98 = arith.constant 0 : index
    %c0_99 = arith.constant 0 : index
    %209 = vector.load %arg11[%c0_97, %c0_98, %c0_99] : memref<1x64x128xf32, #tpu.memory_space<vmem>>, vector<1x64x128xf32>
    %210 = vector.shape_cast %209 : vector<1x64x128xf32> to vector<64x128xf32>
    %211 = vector.shape_cast %208 : vector<64x128xf32> to vector<1x64x128xf32>
    tpu.vector_store %arg11[%c0_97, %c0_98, %c0_99], %211 {strides = array<i32>} : memref<1x64x128xf32, #tpu.memory_space<vmem>>, vector<1x64x128xf32>,
    return
  }
  func.func @transform_0(%arg0: i32) -> (i32, i32, i32) {
    %c0_i32 = arith.constant 0 : i32
    %c0_i32_0 = arith.constant 0 : i32
    %c0_i32_1 = arith.constant 0 : i32
    return %arg0, %c0_i32, %c0_i32_0 : i32, i32, i32
  }
  func.func @transform_1(%arg0: i32) -> (i32, i32, i32) {
    %c0_i32 = arith.constant 0 : i32
    %c0_i32_0 = arith.constant 0 : i32
    %c0_i32_1 = arith.constant 0 : i32
    %c0_i32_2 = arith.constant 0 : i32
    return %c0_i32, %c0_i32_0, %c0_i32_1 : i32, i32, i32
  }
  func.func @transform_2(%arg0: i32) -> (i32, i32) {
    %c0_i32 = arith.constant 0 : i32
    %c0_i32_0 = arith.constant 0 : i32
    %c0_i32_1 = arith.constant 0 : i32
    return %c0_i32, %c0_i32_0 : i32, i32
  }
  func.func @transform_3(%arg0: i32) -> (i32, i32, i32) {
    %c0_i32 = arith.constant 0 : i32
    %c0_i32_0 = arith.constant 0 : i32
    %c0_i32_1 = arith.constant 0 : i32
    %c0_i32_2 = arith.constant 0 : i32
    return %c0_i32, %c0_i32_0, %c0_i32_1 : i32, i32, i32
  }
  func.func @transform_4(%arg0: i32) -> (i32, i32) {
    %c0_i32 = arith.constant 0 : i32
    %c0_i32_0 = arith.constant 0 : i32
    %c0_i32_1 = arith.constant 0 : i32
    return %c0_i32, %c0_i32_0 : i32, i32
  }
  func.func @transform_5(%arg0: i32) -> (i32, i32) {
    %c0_i32 = arith.constant 0 : i32
    %c0_i32_0 = arith.constant 0 : i32
    %c0_i32_1 = arith.constant 0 : i32
    return %c0_i32, %c0_i32_0 : i32, i32
  }
  func.func @transform_6(%arg0: i32) -> (i32, i32) {
    %c0_i32 = arith.constant 0 : i32
    %c0_i32_0 = arith.constant 0 : i32
    %c0_i32_1 = arith.constant 0 : i32
    return %c0_i32, %c0_i32_0 : i32, i32
  }
  func.func @transform_7(%arg0: i32) -> (i32, i32) {
    %c0_i32 = arith.constant 0 : i32
    %c0_i32_0 = arith.constant 0 : i32
    %c0_i32_1 = arith.constant 0 : i32
    return %c0_i32, %c0_i32_0 : i32, i32
  }
  func.func @transform_8(%arg0: i32) -> (i32, i32) {
    %c0_i32 = arith.constant 0 : i32
    %c0_i32_0 = arith.constant 0 : i32
    %c0_i32_1 = arith.constant 0 : i32
    return %c0_i32, %c0_i32_0 : i32, i32
  }
  func.func @transform_9(%arg0: i32) -> (i32, i32) {
    %c0_i32 = arith.constant 0 : i32
    %c0_i32_0 = arith.constant 0 : i32
    %c0_i32_1 = arith.constant 0 : i32
    return %c0_i32, %c0_i32_0 : i32, i32
  }
  func.func @transform_10(%arg0: i32) -> (i32, i32, i32) {
    %c0_i32 = arith.constant 0 : i32
    %c0_i32_0 = arith.constant 0 : i32
    %c0_i32_1 = arith.constant 0 : i32
    return %arg0, %c0_i32, %c0_i32_0 : i32, i32, i32
  }
}

</mosaic_0001>

<llo_original>
// kernel: tpu_custom_call.1
$region0: #{tpu_custom_call.1}
  #allocation0 [shape = 'u32[]', space=smem, size = 0x4, offset = 0x4, fixed_abs, tag = 'smem constant byte address 0x4 - core index']
  #allocation1 [shape = 'u32[144,128]{1,0:T(1,128)}', space=vmem, size = 0x12000, scoped, tag = 'internal scratch']
  #allocation2 [shape = 'bf16[288,384]{1,0:T(16,128)(2,1)}', space=vmem, size = 0x36000, scoped, tag = 'scratch operand']
  #allocation3 [shape = 'bf16[80,384]{1,0:T(16,128)(2,1)}', space=vmem, size = 0xf000, scoped, tag = 'scratch operand']
  #allocation4 [shape = 'f32[256,128]{1,0:T(8,128)}', space=vmem, size = 0x20000, scoped, tag = 'scratch operand']
  %s0 = inlined_call_operand.hbm [shape: f32[2,256,128], index: 0, kind: input, shape index: {}]
  %s1 = inlined_call_operand.hbm [shape: bf16[3,384,128], index: 1, kind: input, shape index: {}]
  %s2 = inlined_call_operand.vmem [shape: f32[1,128], index: 2, kind: input, shape index: {}]
  %s3 = inlined_call_operand.hbm [shape: bf16[3,384,128], index: 3, kind: input, shape index: {}]
  %s4 = inlined_call_operand.vmem [shape: f32[1,128], index: 4, kind: input, shape index: {}]
  %s5 = inlined_call_operand.hbm [shape: bf16[128,128], index: 5, kind: input, shape index: {}]
  %s6 = inlined_call_operand.vmem [shape: f32[1,128], index: 6, kind: input, shape index: {}]
  %s7 = inlined_call_operand.vmem [shape: f32[1,128], index: 7, kind: input, shape index: {}]
  %s8 = inlined_call_operand.vmem [shape: f32[1,128], index: 8, kind: input, shape index: {}]
  %s9 = inlined_call_operand.vmem [shape: f32[1,128], index: 9, kind: input, shape index: {}]
  %s10 = inlined_call_operand.hbm [shape: f32[2,64,128], index: 10, kind: output, shape index: {}]
  %s11 = sld [smem:[#allocation0]]
  $region89: #{tpu_custom_call.1} parent=0
    _
  %s13 = ssub.s32 1, %s11
  %s14 = scalar_select 0, %s13, %s11
  $region1: #{tpu_custom_call.1} parent=0
    #allocation5 [shape = 'u8[262144]{0}', space=vmem, size = 0x40000, scoped, tag = 'input window, operand 0']
    #allocation6 [shape = 's32[2]{0}', space=sflag, size = 0x8, scoped, tag = 'scoped memory for tpu_custom_call.1']
    #allocation7 [shape = 's32[2]{0}', space=sflag, size = 0x8, scoped, tag = 'scoped memory for tpu_custom_call.1']
    #allocation8 [shape = 'u8[294912]{0}', space=vmem, size = 0x48000, scoped, tag = 'input window, operand 1, single buffered']
    #allocation9 [shape = 's32[1]{0}', space=sflag, size = 0x4, scoped, tag = 'scoped memory for tpu_custom_call.1']
    #allocation10 [shape = 'u8[294912]{0}', space=vmem, size = 0x48000, scoped, tag = 'input window, operand 3, single buffered']
    #allocation11 [shape = 'u8[32768]{0}', space=vmem, size = 0x8000, scoped, tag = 'input window, operand 5, single buffered']
    #allocation12 [shape = 's32[1]{0}', space=sflag, size = 0x4, scoped, tag = 'scoped memory for tpu_custom_call.1']
    #allocation13 [shape = 'u8[65536]{0}', space=vmem, size = 0x10000, scoped, tag = 'output window, operand 0']
    %15 = vsyncpa [#allocation6], 0
    %s16 = scalar_lea.sflag [#allocation6], 1
    %17 = vsyncpa %s16, 0
    %18 = vsyncpa [#allocation9], 0
    %19 = vsyncpa [#allocation12], 0
    %20 = vsyncpa [#allocation7], 0
    %s21 = scalar_lea.sflag [#allocation7], 1
    %22 = vsyncpa %s21, 0
    loop: start=0, step=1, limit=4
    $region2: #{tpu_custom_call.1} parent=1 // loop_pre_header
      _
    $region3: #{tpu_custom_call.1} parent=1 // loop_header
      %s24 = sphi 0, %s28
      %p25 = scmp.ge.s32.totalorder %s24, 4
      %s34 = sphi 0, %s36
      %s37 = sphi 0, %s34
      %s38 = sphi 0, %s37
      %s54 = sphi 0, %s38
      %s58 = sphi 0, %s58
      %s60 = sphi 0, %s58
      %s61 = sphi 0, %s60
      %s75 = sphi 0, %s61
      %s79 = sphi 0, %s79
      %s81 = sphi 0, %s79
      %s82 = sphi 0, %s81
      %s96 = sphi 0, %s82
      %s100 = sphi 0, %s100
      %s102 = sphi 0, %s100
      %s103 = sphi 0, %s102
      %s117 = sphi 0, %s103
      %s121 = sphi 0, %s121
      %s123 = sphi 0, %s121
      %s124 = sphi 0, %s123
      %s138 = sphi 0, %s124
      %s142 = sphi 0, %s142
      %s144 = sphi 0, %s142
      %s145 = sphi 0, %s144
      %s159 = sphi 0, %s145
      %s163 = sphi 0, %s163
      %s165 = sphi 0, %s163
      %s166 = sphi 0, %s165
      %s180 = sphi 0, %s166
      %s184 = sphi 0, %s184
      %s186 = sphi 0, %s184
      %s187 = sphi 0, %s186
      %s201 = sphi 0, %s187
      %s205 = sphi 0, %s205
      %s207 = sphi 0, %s205
      %s208 = sphi 0, %s207
      %s222 = sphi 0, %s208
      %s226 = sphi 0, %s226
      %s228 = sphi 0, %s226
      %s229 = sphi 0, %s228
      %s243 = sphi 0, %s229
      %s249 = sphi 0, %s251
      %s252 = sphi 0, %s249
      %s253 = sphi 0, %s252
      %s269 = sphi 0, %s253
    $region4: #{tpu_custom_call.1} parent=1 // loop_header_branch
      %27 = sbr.rel (%p25) target = $region8
    $region5: #{tpu_custom_call.1} parent=1 // loop_body
      %s29 = ssub.s32 %s24, 1
      %s30 = ssub.s32 %s24, 2
      %s31 = sadd.s32 %s24, 1
      %s32 = ssub.s32 %s24, %s31
      %p33 = scmp.eq.s32.totalorder %s32, 0
      %s35 = sadd.s32 %s34, 1
      %s36 = scalar_select %p33, %s34, %s35
      %p39 = pneg %p33
      %p40 = scmp.eq.s32.totalorder %s24, 1
      %p41 = por %p39, %p40
      %p42 = scmp.ne.s32.totalorder %s34, %s37
      %p43 = scmp.eq.s32.totalorder %s24, 0
      %p44 = por %p42, %p43
      %p45 = scmp.ne.s32.totalorder %s34, %s37
      %p46 = scmp.eq.s32.totalorder %s29, 1
      %p47 = por %p45, %p46
      %p48 = scmp.ne.s32.totalorder %s37, %s38
      %p49 = scmp.eq.s32.totalorder %s29, 0
      %p50 = por %p48, %p49
      %p51 = scmp.ne.s32.totalorder %s37, %s38
      %p52 = scmp.eq.s32.totalorder %s30, 1
      %p53 = por %p51, %p52
      %p55 = scmp.ne.s32.totalorder %s38, %s54
      %p56 = scmp.eq.s32.totalorder %s30, 0
      %p57 = por %p55, %p56
      %s59 = sadd.s32 %s58, 1
      %p62 = scmp.eq.s32.totalorder %s24, 1
      %p63 = scmp.ne.s32.totalorder %s58, %s60
      %p64 = scmp.eq.s32.totalorder %s24, 0
      %p65 = por %p63, %p64
      %p66 = scmp.ne.s32.totalorder %s58, %s60
      %p67 = scmp.eq.s32.totalorder %s29, 1
      %p68 = por %p66, %p67
      %p69 = scmp.ne.s32.totalorder %s60, %s61
      %p70 = scmp.eq.s32.totalorder %s29, 0
      %p71 = por %p69, %p70
      %p72 = scmp.ne.s32.totalorder %s60, %s61
      %p73 = scmp.eq.s32.totalorder %s30, 1
      %p74 = por %p72, %p73
      %p76 = scmp.ne.s32.totalorder %s61, %s75
      %p77 = scmp.eq.s32.totalorder %s30, 0
      %p78 = por %p76, %p77
      %s80 = sadd.s32 %s79, 1
      %p83 = scmp.eq.s32.totalorder %s24, 1
      %p84 = scmp.ne.s32.totalorder %s79, %s81
      %p85 = scmp.eq.s32.totalorder %s24, 0
      %p86 = por %p84, %p85
      %p87 = scmp.ne.s32.totalorder %s79, %s81
      %p88 = scmp.eq.s32.totalorder %s29, 1
      %p89 = por %p87, %p88
      %p90 = scmp.ne.s32.totalorder %s81, %s82
      %p91 = scmp.eq.s32.totalorder %s29, 0
      %p92 = por %p90, %p91
      %p93 = scmp.ne.s32.totalorder %s81, %s82
      %p94 = scmp.eq.s32.totalorder %s30, 1
      %p95 = por %p93, %p94
      %p97 = scmp.ne.s32.totalorder %s82, %s96
      %p98 = scmp.eq.s32.totalorder %s30, 0
      %p99 = por %p97, %p98
      %s101 = sadd.s32 %s100, 1
      %p104 = scmp.eq.s32.totalorder %s24, 1
      %p105 = scmp.ne.s32.totalorder %s100, %s102
      %p106 = scmp.eq.s32.totalorder %s24, 0
      %p107 = por %p105, %p106
      %p108 = scmp.ne.s32.totalorder %s100, %s102
      %p109 = scmp.eq.s32.totalorder %s29, 1
      %p110 = por %p108, %p109
      %p111 = scmp.ne.s32.totalorder %s102, %s103
      %p112 = scmp.eq.s32.totalorder %s29, 0
      %p113 = por %p111, %p112
      %p114 = scmp.ne.s32.totalorder %s102, %s103
      %p115 = scmp.eq.s32.totalorder %s30, 1
      %p116 = por %p114, %p115
      %p118 = scmp.ne.s32.totalorder %s103, %s117
      %p119 = scmp.eq.s32.totalorder %s30, 0
      %p120 = por %p118, %p119
      %s122 = sadd.s32 %s121, 1
      %p125 = scmp.eq.s32.totalorder %s24, 1
      %p126 = scmp.ne.s32.totalorder %s121, %s123
      %p127 = scmp.eq.s32.totalorder %s24, 0
      %p128 = por %p126, %p127
      %p129 = scmp.ne.s32.totalorder %s121, %s123
      %p130 = scmp.eq.s32.totalorder %s29, 1
      %p131 = por %p129, %p130
      %p132 = scmp.ne.s32.totalorder %s123, %s124
      %p133 = scmp.eq.s32.totalorder %s29, 0
      %p134 = por %p132, %p133
      %p135 = scmp.ne.s32.totalorder %s123, %s124
      %p136 = scmp.eq.s32.totalorder %s30, 1
      %p137 = por %p135, %p136
      %p139 = scmp.ne.s32.totalorder %s124, %s138
      %p140 = scmp.eq.s32.totalorder %s30, 0
      %p141 = por %p139, %p140
      %s143 = sadd.s32 %s142, 1
      %p146 = scmp.eq.s32.totalorder %s24, 1
      %p147 = scmp.ne.s32.totalorder %s142, %s144
      %p148 = scmp.eq.s32.totalorder %s24, 0
      %p149 = por %p147, %p148
      %p150 = scmp.ne.s32.totalorder %s142, %s144
      %p151 = scmp.eq.s32.totalorder %s29, 1
      %p152 = por %p150, %p151
      %p153 = scmp.ne.s32.totalorder %s144, %s145
      %p154 = scmp.eq.s32.totalorder %s29, 0
      %p155 = por %p153, %p154
      %p156 = scmp.ne.s32.totalorder %s144, %s145
      %p157 = scmp.eq.s32.totalorder %s30, 1
      %p158 = por %p156, %p157
      %p160 = scmp.ne.s32.totalorder %s145, %s159
      %p161 = scmp.eq.s32.totalorder %s30, 0
      %p162 = por %p160, %p161
      %s164 = sadd.s32 %s163, 1
      %p167 = scmp.eq.s32.totalorder %s24, 1
      %p168 = scmp.ne.s32.totalorder %s163, %s165
      %p169 = scmp.eq.s32.totalorder %s24, 0
      %p170 = por %p168, %p169
      %p171 = scmp.ne.s32.totalorder %s163, %s165
      %p172 = scmp.eq.s32.totalorder %s29, 1
      %p173 = por %p171, %p172
      %p174 = scmp.ne.s32.totalorder %s165, %s166
      %p175 = scmp.eq.s32.totalorder %s29, 0
      %p176 = por %p174, %p175
      %p177 = scmp.ne.s32.totalorder %s165, %s166
      %p178 = scmp.eq.s32.totalorder %s30, 1
      %p179 = por %p177, %p178
      %p181 = scmp.ne.s32.totalorder %s166, %s180
      %p182 = scmp.eq.s32.totalorder %s30, 0
      %p183 = por %p181, %p182
      %s185 = sadd.s32 %s184, 1
      %p188 = scmp.eq.s32.totalorder %s24, 1
      %p189 = scmp.ne.s32.totalorder %s184, %s186
      %p190 = scmp.eq.s32.totalorder %s24, 0
      %p191 = por %p189, %p190
      %p192 = scmp.ne.s32.totalorder %s184, %s186
      %p193 = scmp.eq.s32.totalorder %s29, 1
      %p194 = por %p192, %p193
      %p195 = scmp.ne.s32.totalorder %s186, %s187
      %p196 = scmp.eq.s32.totalorder %s29, 0
      %p197 = por %p195, %p196
      %p198 = scmp.ne.s32.totalorder %s186, %s187
      %p199 = scmp.eq.s32.totalorder %s30, 1
      %p200 = por %p198, %p199
      %p202 = scmp.ne.s32.totalorder %s187, %s201
      %p203 = scmp.eq.s32.totalorder %s30, 0
      %p204 = por %p202, %p203
      %s206 = sadd.s32 %s205, 1
      %p209 = scmp.eq.s32.totalorder %s24, 1
      %p210 = scmp.ne.s32.totalorder %s205, %s207
      %p211 = scmp.eq.s32.totalorder %s24, 0
      %p212 = por %p210, %p211
      %p213 = scmp.ne.s32.totalorder %s205, %s207
      %p214 = scmp.eq.s32.totalorder %s29, 1
      %p215 = por %p213, %p214
      %p216 = scmp.ne.s32.totalorder %s207, %s208
      %p217 = scmp.eq.s32.totalorder %s29, 0
      %p218 = por %p216, %p217
      %p219 = scmp.ne.s32.totalorder %s207, %s208
      %p220 = scmp.eq.s32.totalorder %s30, 1
      %p221 = por %p219, %p220
      %p223 = scmp.ne.s32.totalorder %s208, %s222
      %p224 = scmp.eq.s32.totalorder %s30, 0
      %p225 = por %p223, %p224
      %s227 = sadd.s32 %s226, 1
      %p230 = scmp.eq.s32.totalorder %s24, 1
      %p231 = scmp.ne.s32.totalorder %s226, %s228
      %p232 = scmp.eq.s32.totalorder %s24, 0
      %p233 = por %p231, %p232
      %p234 = scmp.ne.s32.totalorder %s226, %s228
      %p235 = scmp.eq.s32.totalorder %s29, 1
      %p236 = por %p234, %p235
      %p237 = scmp.ne.s32.totalorder %s228, %s229
      %p238 = scmp.eq.s32.totalorder %s29, 0
      %p239 = por %p237, %p238
      %p240 = scmp.ne.s32.totalorder %s228, %s229
      %p241 = scmp.eq.s32.totalorder %s30, 1
      %p242 = por %p240, %p241
      %p244 = scmp.ne.s32.totalorder %s229, %s243
      %p245 = scmp.eq.s32.totalorder %s30, 0
      %p246 = por %p244, %p245
      %s247 = ssub.s32 %s24, %s31
      %p248 = scmp.eq.s32.totalorder %s247, 0
      %s250 = sadd.s32 %s249, 1
      %s251 = scalar_select %p248, %s249, %s250
      %p254 = pneg %p248
      %p255 = scmp.eq.s32.totalorder %s24, 1
      %p256 = por %p254, %p255
      %p257 = scmp.ne.s32.totalorder %s249, %s252
      %p258 = scmp.eq.s32.totalorder %s24, 0
      %p259 = por %p257, %p258
      %p260 = scmp.ne.s32.totalorder %s249, %s252
      %p261 = scmp.eq.s32.totalorder %s29, 1
      %p262 = por %p260, %p261
      %p263 = scmp.ne.s32.totalorder %s252, %s253
      %p264 = scmp.eq.s32.totalorder %s29, 0
      %p265 = por %p263, %p264
      %p266 = scmp.ne.s32.totalorder %s252, %s253
      %p267 = scmp.eq.s32.totalorder %s30, 1
      %p268 = por %p266, %p267
      %p270 = scmp.ne.s32.totalorder %s253, %s269
      %p271 = scmp.eq.s32.totalorder %s30, 0
      %p272 = por %p270, %p271
      %p273 = scmp.le.s32.totalorder 1, %s24
      %p274 = scmp.lt.s32.totalorder %s24, 3
      %p275 = pnand %p273, %p274
      %p276 = pneg %p275
      // Predicated region
      $region9: #{tpu_custom_call.1} parent=5 // pred_check
        _
      $region10: #{tpu_custom_call.1} parent=5 // pred_check_branch
        %278 = sbr.rel (%p275) target = $region12
      $region11: #{tpu_custom_call.1} parent=5 // pred_region
        %s279 = ssub.s32 %s24, 1
        // Predicated region
        $region13: #{tpu_custom_call.1} parent=11 // pred_check
          %p280 = pneg %p71
        $region14: #{tpu_custom_call.1} parent=11 // pred_check_branch
          %282 = sbr.rel (%p280) target = $region16
        $region15: #{tpu_custom_call.1} parent=11 // pred_region
          %s284 = ssub.s32 9216, 9216
          %285 = vsyncadd [#allocation9], %s284
          %s286 = sshll.u32 [#allocation8], 4
          %s287 = int_to_ptr.vmem [resolvable:$true] %s286
          %292 = dma.hbm_to_vmem [thread:$0]  %s1, 9216, %s287, [#allocation9], 64, 64, 4
        $region16: #{tpu_custom_call.1} parent=11 // pred_fallthru
          _
        // Predicated region
        $region17: #{tpu_custom_call.1} parent=11 // pred_check
          %p293 = pneg %p92
        $region18: #{tpu_custom_call.1} parent=11 // pred_check_branch
          %295 = sbr.rel (%p293) target = $region20
        $region19: #{tpu_custom_call.1} parent=11 // pred_region
          _
        $region20: #{tpu_custom_call.1} parent=11 // pred_fallthru
          _
        // Predicated region
        $region21: #{tpu_custom_call.1} parent=11 // pred_check
          %p296 = pneg %p113
        $region22: #{tpu_custom_call.1} parent=11 // pred_check_branch
          %298 = sbr.rel (%p296) target = $region24
        $region23: #{tpu_custom_call.1} parent=11 // pred_region
          %s300 = ssub.s32 9216, 9216
          %301 = vsyncadd [#allocation9], %s300
          %s302 = sshll.u32 [#allocation10], 4
          %s303 = int_to_ptr.vmem [resolvable:$true] %s302
          %308 = dma.hbm_to_vmem [thread:$0]  %s3, 9216, %s303, [#allocation9], 64, 64, 4
        $region24: #{tpu_custom_call.1} parent=11 // pred_fallthru
          _
        // Predicated region
        $region25: #{tpu_custom_call.1} parent=11 // pred_check
          %p309 = pneg %p134
        $region26: #{tpu_custom_call.1} parent=11 // pred_check_branch
          %311 = sbr.rel (%p309) target = $region28
        $region27: #{tpu_custom_call.1} parent=11 // pred_region
          _
        $region28: #{tpu_custom_call.1} parent=11 // pred_fallthru
          _
        // Predicated region
        $region29: #{tpu_custom_call.1} parent=11 // pred_check
          %p312 = pneg %p155
        $region30: #{tpu_custom_call.1} parent=11 // pred_check_branch
          %314 = sbr.rel (%p312) target = $region32
        $region31: #{tpu_custom_call.1} parent=11 // pred_region
          %s316 = ssub.s32 1024, 1024
          %317 = vsyncadd [#allocation12], %s316
          %s318 = sshll.u32 [#allocation11], 4
          %s319 = int_to_ptr.vmem [resolvable:$true] %s318
          %324 = dma.hbm_to_vmem [thread:$0]  %s5, 1024, %s319, [#allocation12], 64, 64, 4
        $region32: #{tpu_custom_call.1} parent=11 // pred_fallthru
          _
        // Predicated region
        $region33: #{tpu_custom_call.1} parent=11 // pred_check
          %p325 = pneg %p176
        $region34: #{tpu_custom_call.1} parent=11 // pred_check_branch
          %327 = sbr.rel (%p325) target = $region36
        $region35: #{tpu_custom_call.1} parent=11 // pred_region
          _
        $region36: #{tpu_custom_call.1} parent=11 // pred_fallthru
          _
        // Predicated region
        $region37: #{tpu_custom_call.1} parent=11 // pred_check
          %p328 = pneg %p197
        $region38: #{tpu_custom_call.1} parent=11 // pred_check_branch
          %330 = sbr.rel (%p328) target = $region40
        $region39: #{tpu_custom_call.1} parent=11 // pred_region
          _
        $region40: #{tpu_custom_call.1} parent=11 // pred_fallthru
          _
        // Predicated region
        $region41: #{tpu_custom_call.1} parent=11 // pred_check
          %p331 = pneg %p218
        $region42: #{tpu_custom_call.1} parent=11 // pred_check_branch
          %333 = sbr.rel (%p331) target = $region44
        $region43: #{tpu_custom_call.1} parent=11 // pred_region
          _
        $region44: #{tpu_custom_call.1} parent=11 // pred_fallthru
          _
        // Predicated region
        $region45: #{tpu_custom_call.1} parent=11 // pred_check
          %p334 = pneg %p239
        $region46: #{tpu_custom_call.1} parent=11 // pred_check_branch
          %336 = sbr.rel (%p334) target = $region48
        $region47: #{tpu_custom_call.1} parent=11 // pred_region
          _
        $region48: #{tpu_custom_call.1} parent=11 // pred_fallthru
          _
      $region12: #{tpu_custom_call.1} parent=5 // pred_fallthru
        _
      %p337 = scmp.lt.s32.totalorder %s24, 2
      // Predicated region
      $region49: #{tpu_custom_call.1} parent=5 // pred_check
        %p338 = pneg %p337
      $region50: #{tpu_custom_call.1} parent=5 // pred_check_branch
        %340 = sbr.rel (%p338) target = $region52
      $region51: #{tpu_custom_call.1} parent=5 // pred_region
        // Predicated region
        $region53: #{tpu_custom_call.1} parent=51 // pred_check
          %p341 = pneg %p44
        $region54: #{tpu_custom_call.1} parent=51 // pred_check_branch
          %343 = sbr.rel (%p341) target = $region56
        $region55: #{tpu_custom_call.1} parent=51 // pred_region
          %s344 = sand.u32 %s34, 1
          %s345 = scalar_lea.sflag [#allocation6], %s344
          %s346 = sand.u32 %s34, 1
          %s347 = smul.addr %s346, 256
          %s348 = scalar_lea.vmem [#allocation5], %s347
          %s350 = ssub.s32 4096, 4096
          %351 = vsyncadd %s345, %s350
          %s352 = smul.addr %s24, 32
          %s353 = smul.addr %s352, 128
          %s354 = scalar_lea.hbm %s0, %s353
          %s355 = sshll.u32 %s348, 4
          %s356 = int_to_ptr.vmem [resolvable:$true] %s355
          %361 = dma.hbm_to_vmem [thread:$0]  %s354, 4096, %s356, %s345, 128, 128, 8
        $region56: #{tpu_custom_call.1} parent=51 // pred_fallthru
          _
      $region52: #{tpu_custom_call.1} parent=5 // pred_fallthru
        _
      %p362 = scmp.le.s32.totalorder 1, %s24
      %p363 = scmp.lt.s32.totalorder %s24, 3
      %p364 = pnand %p362, %p363
      %p365 = pneg %p364
      // Predicated region
      $region57: #{tpu_custom_call.1} parent=5 // pred_check
        _
      $region58: #{tpu_custom_call.1} parent=5 // pred_check_branch
        %367 = sbr.rel (%p364) target = $region60
      $region59: #{tpu_custom_call.1} parent=5 // pred_region
        %s368 = ssub.s32 %s24, 1
        %s369 = sand.u32 %s37, 1
        %s370 = scalar_lea.sflag [#allocation6], %s369
        %s371 = sand.u32 %s37, 1
        %s372 = smul.addr %s371, 256
        %s373 = scalar_lea.vmem [#allocation5], %s372
        // Predicated region
        $region61: #{tpu_custom_call.1} parent=59 // pred_check
          %p374 = pneg %p50
        $region62: #{tpu_custom_call.1} parent=59 // pred_check_branch
          %376 = sbr.rel (%p374) target = $region64
        $region63: #{tpu_custom_call.1} parent=59 // pred_region
          %377 = dma.done %s370, 4096
        $region64: #{tpu_custom_call.1} parent=59 // pred_fallthru
          _
        // Predicated region
        $region65: #{tpu_custom_call.1} parent=59 // pred_check
          %p378 = pneg %p71
        $region66: #{tpu_custom_call.1} parent=59 // pred_check_branch
          %380 = sbr.rel (%p378) target = $region68
        $region67: #{tpu_custom_call.1} parent=59 // pred_region
          %381 = dma.done [#allocation9], 9216
        $region68: #{tpu_custom_call.1} parent=59 // pred_fallthru
          _
        // Predicated region
        $region69: #{tpu_custom_call.1} parent=59 // pred_check
          %p382 = pneg %p113
        $region70: #{tpu_custom_call.1} parent=59 // pred_check_branch
          %384 = sbr.rel (%p382) target = $region72
        $region71: #{tpu_custom_call.1} parent=59 // pred_region
          %385 = dma.done [#allocation9], 9216
        $region72: #{tpu_custom_call.1} parent=59 // pred_fallthru
          _
        // Predicated region
        $region73: #{tpu_custom_call.1} parent=59 // pred_check
          %p386 = pneg %p155
        $region74: #{tpu_custom_call.1} parent=59 // pred_check_branch
          %388 = sbr.rel (%p386) target = $region76
        $region75: #{tpu_custom_call.1} parent=59 // pred_region
          %389 = dma.done [#allocation12], 1024
        $region76: #{tpu_custom_call.1} parent=59 // pred_fallthru
          _
        %s390 = sand.u32 %s37, 1
        %s391 = scalar_lea.sflag [#allocation6], %s390
        %s392 = sand.u32 %s37, 1
        %s393 = smul.addr %s392, 256
        %s394 = scalar_lea.vmem [#allocation5], %s393
        %p395 = pneg %p50
        %p396 = pneg %p47
        %p397 = pneg %p71
        %p398 = pneg %p68
        %p399 = pneg %p92
        %p400 = pneg %p89
        %p401 = pneg %p113
        %p402 = pneg %p110
        %p403 = pneg %p134
        %p404 = pneg %p131
        %p405 = pneg %p155
        %p406 = pneg %p152
        %p407 = pneg %p176
        %p408 = pneg %p173
        %p409 = pneg %p197
        %p410 = pneg %p194
        %p411 = pneg %p218
        %p412 = pneg %p215
        %p413 = pneg %p239
        %p414 = pneg %p236
        %p415 = pneg %p265
        %p416 = pneg %p262
        %s417 = sand.u32 %s252, 1
        %s418 = scalar_lea.sflag [#allocation7], %s417
        %s419 = sand.u32 %s252, 1
        %s420 = smul.addr %s419, 64
        %s421 = scalar_lea.vmem [#allocation13], %s420
        %v423 = vld [vmem:[%s373] sm:$0xff]
        %v424 = vld [vmem:[%s373 + $0x8] sm:$0xff]
        %v425 = vld [vmem:[%s373 + $0x10] sm:$0xff]
        %v426 = vld [vmem:[%s373 + $0x18] sm:$0xff]
        %v427 = vld [vmem:[%s373 + $0x20] sm:$0xff]
        %v428 = vld [vmem:[%s373 + $0x28] sm:$0xff]
        %v429 = vld [vmem:[%s373 + $0x30] sm:$0xff]
        %v430 = vld [vmem:[%s373 + $0x38] sm:$0xff]
        %v431 = vld [vmem:[%s373 + $0x40] sm:$0xff]
        %v432 = vld [vmem:[%s373 + $0x48] sm:$0xff]
        %v433 = vld [vmem:[%s373 + $0x50] sm:$0xff]
        %v434 = vld [vmem:[%s373 + $0x58] sm:$0xff]
        %v435 = vld [vmem:[%s373 + $0x60] sm:$0xff]
        %v436 = vld [vmem:[%s373 + $0x68] sm:$0xff]
        %v437 = vld [vmem:[%s373 + $0x70] sm:$0xff]
        %v438 = vld [vmem:[%s373 + $0x78] sm:$0xff]
        %v439 = vld [vmem:[%s373 + $0x80] sm:$0xff]
        %v440 = vld [vmem:[%s373 + $0x88] sm:$0xff]
        %v441 = vld [vmem:[%s373 + $0x90] sm:$0xff]
        %v442 = vld [vmem:[%s373 + $0x98] sm:$0xff]
        %v443 = vld [vmem:[%s373 + $0xa0] sm:$0xff]
        %v444 = vld [vmem:[%s373 + $0xa8] sm:$0xff]
        %v445 = vld [vmem:[%s373 + $0xb0] sm:$0xff]
        %v446 = vld [vmem:[%s373 + $0xb8] sm:$0xff]
        %v447 = vld [vmem:[%s373 + $0xc0] sm:$0xff]
        %v448 = vld [vmem:[%s373 + $0xc8] sm:$0xff]
        %v449 = vld [vmem:[%s373 + $0xd0] sm:$0xff]
        %v450 = vld [vmem:[%s373 + $0xd8] sm:$0xff]
        %v451 = vld [vmem:[%s373 + $0xe0] sm:$0xff]
        %v452 = vld [vmem:[%s373 + $0xe8] sm:$0xff]
        %v453 = vld [vmem:[%s373 + $0xf0] sm:$0xff]
        %v454 = vld [vmem:[%s373 + $0xf8] sm:$0xff]
        %v455 = vld [vmem:[%s6] sm:$0x1]
        %v456 = vld [vmem:[%s7] sm:$0x1]
        %v457 = vadd.f32 %v423, %v424
        %v458 = vadd.f32 %v457, %v425
        %v459 = vadd.f32 %v458, %v426
        %v460 = vadd.f32 %v459, %v427
        %v461 = vadd.f32 %v460, %v428
        %v462 = vadd.f32 %v461, %v429
        %v463 = vadd.f32 %v462, %v430
        %v464 = vadd.f32 %v463, %v431
        %v465 = vadd.f32 %v464, %v432
        %v466 = vadd.f32 %v465, %v433
        %v467 = vadd.f32 %v466, %v434
        %v468 = vadd.f32 %v467, %v435
        %v469 = vadd.f32 %v468, %v436
        %v470 = vadd.f32 %v469, %v437
        %v471 = vadd.f32 %v470, %v438
        %v472 = vadd.f32 %v471, %v439
        %v473 = vadd.f32 %v472, %v440
        %v474 = vadd.f32 %v473, %v441
        %v475 = vadd.f32 %v474, %v442
        %v476 = vadd.f32 %v475, %v443
        %v477 = vadd.f32 %v476, %v444
        %v478 = vadd.f32 %v477, %v445
        %v479 = vadd.f32 %v478, %v446
        %v480 = vadd.f32 %v479, %v447
        %v481 = vadd.f32 %v480, %v448
        %v482 = vadd.f32 %v481, %v449
        %v483 = vadd.f32 %v482, %v450
        %v484 = vadd.f32 %v483, %v451
        %v485 = vadd.f32 %v484, %v452
        %v486 = vadd.f32 %v485, %v453
        %v487 = vadd.f32 %v486, %v454
        %v488 = vrot.slane %v487, 4
        %v489 = vadd.f32 %v487, %v488
        %v490 = vrot.slane %v489, 2
        %v491 = vadd.f32 %v489, %v490
        %v492 = vrot.slane %v491, 1
        %v493 = vadd.f32 %v491, %v492
        %v494 = vmul.f32 %v493, 0.00390625
        %v495 = vmul.f32 %v423, %v423
        %v496 = vmul.f32 %v424, %v424
        %v497 = vmul.f32 %v425, %v425
        %v498 = vmul.f32 %v426, %v426
        %v499 = vmul.f32 %v427, %v427
        %v500 = vmul.f32 %v428, %v428
        %v501 = vmul.f32 %v429, %v429
        %v502 = vmul.f32 %v430, %v430
        %v503 = vmul.f32 %v431, %v431
        %v504 = vmul.f32 %v432, %v432
        %v505 = vmul.f32 %v433, %v433
        %v506 = vmul.f32 %v434, %v434
        %v507 = vmul.f32 %v435, %v435
        %v508 = vmul.f32 %v436, %v436
        %v509 = vmul.f32 %v437, %v437
        %v510 = vmul.f32 %v438, %v438
        %v511 = vmul.f32 %v439, %v439
        %v512 = vmul.f32 %v440, %v440
        %v513 = vmul.f32 %v441, %v441
        %v514 = vmul.f32 %v442, %v442
        %v515 = vmul.f32 %v443, %v443
        %v516 = vmul.f32 %v444, %v444
        %v517 = vmul.f32 %v445, %v445
        %v518 = vmul.f32 %v446, %v446
        %v519 = vmul.f32 %v447, %v447
        %v520 = vmul.f32 %v448, %v448
        %v521 = vmul.f32 %v449, %v449
        %v522 = vmul.f32 %v450, %v450
        %v523 = vmul.f32 %v451, %v451
        %v524 = vmul.f32 %v452, %v452
        %v525 = vmul.f32 %v453, %v453
        %v526 = vmul.f32 %v454, %v454
        %v527 = vadd.f32 %v495, %v496
        %v528 = vadd.f32 %v527, %v497
        %v529 = vadd.f32 %v528, %v498
        %v530 = vadd.f32 %v529, %v499
        %v531 = vadd.f32 %v530, %v500
        %v532 = vadd.f32 %v531, %v501
        %v533 = vadd.f32 %v532, %v502
        %v534 = vadd.f32 %v533, %v503
        %v535 = vadd.f32 %v534, %v504
        %v536 = vadd.f32 %v535, %v505
        %v537 = vadd.f32 %v536, %v506
        %v538 = vadd.f32 %v537, %v507
        %v539 = vadd.f32 %v538, %v508
        %v540 = vadd.f32 %v539, %v509
        %v541 = vadd.f32 %v540, %v510
        %v542 = vadd.f32 %v541, %v511
        %v543 = vadd.f32 %v542, %v512
        %v544 = vadd.f32 %v543, %v513
        %v545 = vadd.f32 %v544, %v514
        %v546 = vadd.f32 %v545, %v515
        %v547 = vadd.f32 %v546, %v516
        %v548 = vadd.f32 %v547, %v517
        %v549 = vadd.f32 %v548, %v518
        %v550 = vadd.f32 %v549, %v519
        %v551 = vadd.f32 %v550, %v520
        %v552 = vadd.f32 %v551, %v521
        %v553 = vadd.f32 %v552, %v522
        %v554 = vadd.f32 %v553, %v523
        %v555 = vadd.f32 %v554, %v524
        %v556 = vadd.f32 %v555, %v525
        %v557 = vadd.f32 %v556, %v526
        %v558 = vrot.slane %v557, 4
        %v559 = vadd.f32 %v557, %v558
        %v560 = vrot.slane %v559, 2
        %v561 = vadd.f32 %v559, %v560
        %v562 = vrot.slane %v561, 1
        %v563 = vadd.f32 %v561, %v562
        %v564 = vmul.f32 %v563, 0.00390625
        %v565 = vmul.f32 %v494, %v494
        %v566 = vsub.f32 %v564, %v565
        %v567 = vmax.f32 %v566, 0.0
        %v568 = vadd.f32 %v567, 1e-05
        %v569 = vrsqrt.pop %v568
        %v570 = vsub.f32 %v423, %v494
        %v571 = vsub.f32 %v424, %v494
        %v572 = vsub.f32 %v425, %v494
        %v573 = vsub.f32 %v426, %v494
        %v574 = vsub.f32 %v427, %v494
        %v575 = vsub.f32 %v428, %v494
        %v576 = vsub.f32 %v429, %v494
        %v577 = vsub.f32 %v430, %v494
        %v578 = vsub.f32 %v431, %v494
        %v579 = vsub.f32 %v432, %v494
        %v580 = vsub.f32 %v433, %v494
        %v581 = vsub.f32 %v434, %v494
        %v582 = vsub.f32 %v435, %v494
        %v583 = vsub.f32 %v436, %v494
        %v584 = vsub.f32 %v437, %v494
        %v585 = vsub.f32 %v438, %v494
        %v586 = vsub.f32 %v439, %v494
        %v587 = vsub.f32 %v440, %v494
        %v588 = vsub.f32 %v441, %v494
        %v589 = vsub.f32 %v442, %v494
        %v590 = vsub.f32 %v443, %v494
        %v591 = vsub.f32 %v444, %v494
        %v592 = vsub.f32 %v445, %v494
        %v593 = vsub.f32 %v446, %v494
        %v594 = vsub.f32 %v447, %v494
        %v595 = vsub.f32 %v448, %v494
        %v596 = vsub.f32 %v449, %v494
        %v597 = vsub.f32 %v450, %v494
        %v598 = vsub.f32 %v451, %v494
        %v599 = vsub.f32 %v452, %v494
        %v600 = vsub.f32 %v453, %v494
        %v601 = vsub.f32 %v454, %v494
        %v602 = vmul.f32 %v569, %v455
        %v603 = vlaneseq
        %v604 = vshrl.u32 %v603, 7
        %v605 = vsub.s32 0, %v604
        %v606 = vrot.slane %v602, %v605
        %v607 = vmul.f32 %v570, %v606
        %v608 = vmul.f32 %v571, %v606
        %v609 = vmul.f32 %v572, %v606
        %v610 = vmul.f32 %v573, %v606
        %v611 = vmul.f32 %v574, %v606
        %v612 = vmul.f32 %v575, %v606
        %v613 = vmul.f32 %v576, %v606
        %v614 = vmul.f32 %v577, %v606
        %v615 = vmul.f32 %v578, %v606
        %v616 = vmul.f32 %v579, %v606
        %v617 = vmul.f32 %v580, %v606
        %v618 = vmul.f32 %v581, %v606
        %v619 = vmul.f32 %v582, %v606
        %v620 = vmul.f32 %v583, %v606
        %v621 = vmul.f32 %v584, %v606
        %v622 = vmul.f32 %v585, %v606
        %v623 = vmul.f32 %v586, %v606
        %v624 = vmul.f32 %v587, %v606
        %v625 = vmul.f32 %v588, %v606
        %v626 = vmul.f32 %v589, %v606
        %v627 = vmul.f32 %v590, %v606
        %v628 = vmul.f32 %v591, %v606
        %v629 = vmul.f32 %v592, %v606
        %v630 = vmul.f32 %v593, %v606
        %v631 = vmul.f32 %v594, %v606
        %v632 = vmul.f32 %v595, %v606
        %v633 = vmul.f32 %v596, %v606
        %v634 = vmul.f32 %v597, %v606
        %v635 = vmul.f32 %v598, %v606
        %v636 = vmul.f32 %v599, %v606
        %v637 = vmul.f32 %v600, %v606
        %v638 = vmul.f32 %v601, %v606
        %v640 = vlaneseq
        %v641 = vshrl.u32 %v640, 7
        %v642 = vsub.s32 0, %v641
        %v643 = vrot.slane %v456, %v642
        %v645 = vadd.f32 %v607, %v643
        %v646 = vadd.f32 %v608, %v643
        %v647 = vadd.f32 %v609, %v643
        %v648 = vadd.f32 %v610, %v643
        %v649 = vadd.f32 %v611, %v643
        %v650 = vadd.f32 %v612, %v643
        %v651 = vadd.f32 %v613, %v643
        %v652 = vadd.f32 %v614, %v643
        %v653 = vadd.f32 %v615, %v643
        %v654 = vadd.f32 %v616, %v643
        %v655 = vadd.f32 %v617, %v643
        %v656 = vadd.f32 %v618, %v643
        %v657 = vadd.f32 %v619, %v643
        %v658 = vadd.f32 %v620, %v643
        %v659 = vadd.f32 %v621, %v643
        %v660 = vadd.f32 %v622, %v643
        %v661 = vadd.f32 %v623, %v643
        %v662 = vadd.f32 %v624, %v643
        %v663 = vadd.f32 %v625, %v643
        %v664 = vadd.f32 %v626, %v643
        %v665 = vadd.f32 %v627, %v643
        %v666 = vadd.f32 %v628, %v643
        %v667 = vadd.f32 %v629, %v643
        %v668 = vadd.f32 %v630, %v643
        %v669 = vadd.f32 %v631, %v643
        %v670 = vadd.f32 %v632, %v643
        %v671 = vadd.f32 %v633, %v643
        %v672 = vadd.f32 %v634, %v643
        %v673 = vadd.f32 %v635, %v643
        %v674 = vadd.f32 %v636, %v643
        %v675 = vadd.f32 %v637, %v643
        %v676 = vadd.f32 %v638, %v643
        %v677 = vmul.f32 %v645, 0.2
        %v678 = vmul.f32 %v646, 0.2
        %v679 = vmul.f32 %v647, 0.2
        %v680 = vmul.f32 %v648, 0.2
        %v681 = vmul.f32 %v649, 0.2
        %v682 = vmul.f32 %v650, 0.2
        %v683 = vmul.f32 %v651, 0.2
        %v684 = vmul.f32 %v652, 0.2
        %v685 = vmul.f32 %v653, 0.2
        %v686 = vmul.f32 %v654, 0.2
        %v687 = vmul.f32 %v655, 0.2
        %v688 = vmul.f32 %v656, 0.2
        %v689 = vmul.f32 %v657, 0.2
        %v690 = vmul.f32 %v658, 0.2
        %v691 = vmul.f32 %v659, 0.2
        %v692 = vmul.f32 %v660, 0.2
        %v693 = vmul.f32 %v661, 0.2
        %v694 = vmul.f32 %v662, 0.2
        %v695 = vmul.f32 %v663, 0.2
        %v696 = vmul.f32 %v664, 0.2
        %v697 = vmul.f32 %v665, 0.2
        %v698 = vmul.f32 %v666, 0.2
        %v699 = vmul.f32 %v667, 0.2
        %v700 = vmul.f32 %v668, 0.2
        %v701 = vmul.f32 %v669, 0.2
        %v702 = vmul.f32 %v670, 0.2
        %v703 = vmul.f32 %v671, 0.2
        %v704 = vmul.f32 %v672, 0.2
        %v705 = vmul.f32 %v673, 0.2
        %v706 = vmul.f32 %v674, 0.2
        %v707 = vmul.f32 %v675, 0.2
        %v708 = vmul.f32 %v676, 0.2
        %v709 = vmax.f32 %v645, %v677
        %v710 = vmax.f32 %v646, %v678
        %v711 = vmax.f32 %v647, %v679
        %v712 = vmax.f32 %v648, %v680
        %v713 = vmax.f32 %v649, %v681
        %v714 = vmax.f32 %v650, %v682
        %v715 = vmax.f32 %v651, %v683
        %v716 = vmax.f32 %v652, %v684
        %v717 = vmax.f32 %v653, %v685
        %v718 = vmax.f32 %v654, %v686
        %v719 = vmax.f32 %v655, %v687
        %v720 = vmax.f32 %v656, %v688
        %v721 = vmax.f32 %v657, %v689
        %v722 = vmax.f32 %v658, %v690
        %v723 = vmax.f32 %v659, %v691
        %v724 = vmax.f32 %v660, %v692
        %v725 = vmax.f32 %v661, %v693
        %v726 = vmax.f32 %v662, %v694
        %v727 = vmax.f32 %v663, %v695
        %v728 = vmax.f32 %v664, %v696
        %v729 = vmax.f32 %v665, %v697
        %v730 = vmax.f32 %v666, %v698
        %v731 = vmax.f32 %v667, %v699
        %v732 = vmax.f32 %v668, %v700
        %v733 = vmax.f32 %v669, %v701
        %v734 = vmax.f32 %v670, %v702
        %v735 = vmax.f32 %v671, %v703
        %v736 = vmax.f32 %v672, %v704
        %v737 = vmax.f32 %v673, %v705
        %v738 = vmax.f32 %v674, %v706
        %v739 = vmax.f32 %v675, %v707
        %v740 = vmax.f32 %v676, %v708
        %741 = vst [vmem:[#allocation2] sm:$0xff] 0
        %742 = vst [vmem:[#allocation2 + $0x8] sm:$0xff] 0
        %743 = vst [vmem:[#allocation2 + $0x10] sm:$0xff] 0
        %vm744 = vcmask 1040384
        %vm745 = vsmask.f32 256
        %vm746 = vmand %vm744, %vm745
        %v747 = vld [vmem:[#allocation2 + $0x18] sm:$0x1]
        %v748 = vsel %vm746, 0, %v747
        %749 = vst [vmem:[#allocation2 + $0x18] sm:$0x1] %v748
        %v750 = vld [vmem:[#allocation2 + $0x20] sm:$0x1]
        %v751 = vsel %vm746, 0, %v750
        %752 = vst [vmem:[#allocation2 + $0x20] sm:$0x1] %v751
        %v753 = vld [vmem:[#allocation2 + $0x28] sm:$0x1]
        %v754 = vsel %vm746, 0, %v753
        %755 = vst [vmem:[#allocation2 + $0x28] sm:$0x1] %v754
        %vm756 = vcmask 1047559
        %vm757 = vsmask.f32 7966
        %vm758 = vmand %vm756, %vm757
        %v759 = vld [vmem:[#allocation2 + $0x180] sm:$0x80]
        %v760 = vsel %vm758, 0, %v759
        %761 = vst [vmem:[#allocation2 + $0x180] sm:$0x80] %v760
        %v762 = vld [vmem:[#allocation2 + $0x188] sm:$0x80]
        %v763 = vsel %vm758, 0, %v762
        %764 = vst [vmem:[#allocation2 + $0x188] sm:$0x80] %v763
        %v765 = vld [vmem:[#allocation2 + $0x190] sm:$0x80]
        %v766 = vsel %vm758, 0, %v765
        %767 = vst [vmem:[#allocation2 + $0x190] sm:$0x80] %v766
        %768 = vst [vmem:[#allocation2 + $0x198] sm:$0xff] 0
        %769 = vst [vmem:[#allocation2 + $0x1a0] sm:$0xff] 0
        %770 = vst [vmem:[#allocation2 + $0x1a8] sm:$0xff] 0
        %v771 = vlaneseq
        %v772 = vshrl.u32 %v771, 7
        %v773 = vadd.s32 %v772, 8
        %v774 = vadd.s32 %v772, 16
        %v775 = vadd.s32 %v772, 24
        %v776 = vadd.s32 %v772, 32
        %v777 = vadd.s32 %v772, 40
        %v778 = vadd.s32 %v772, 48
        %v779 = vadd.s32 %v772, 56
        %v780 = vadd.s32 %v772, 64
        %v781 = vadd.s32 %v772, 72
        %v782 = vadd.s32 %v772, 80
        %v783 = vadd.s32 %v772, 88
        %v784 = vadd.s32 %v772, 96
        %v785 = vadd.s32 %v772, 104
        %v786 = vadd.s32 %v772, 112
        %v787 = vadd.s32 %v772, 120
        %v788 = vadd.s32 %v772, 128
        %v789 = vadd.s32 %v772, 136
        %v790 = vadd.s32 %v772, 144
        %v791 = vadd.s32 %v772, 152
        %v792 = vadd.s32 %v772, 160
        %v793 = vadd.s32 %v772, 168
        %v794 = vadd.s32 %v772, 176
        %v795 = vadd.s32 %v772, 184
        %v796 = vadd.s32 %v772, 192
        %v797 = vadd.s32 %v772, 200
        %v798 = vadd.s32 %v772, 208
        %v799 = vadd.s32 %v772, 216
        %v800 = vadd.s32 %v772, 224
        %v801 = vadd.s32 %v772, 232
        %v802 = vadd.s32 %v772, 240
        %v803 = vadd.s32 %v772, 248
        %v804 = vand.u32 %v772, 15
        %v805 = vand.u32 %v773, 15
        %v806 = vand.u32 %v774, 15
        %v807 = vand.u32 %v775, 15
        %v808 = vand.u32 %v776, 15
        %v809 = vand.u32 %v777, 15
        %v810 = vand.u32 %v778, 15
        %v811 = vand.u32 %v779, 15
        %v812 = vand.u32 %v780, 15
        %v813 = vand.u32 %v781, 15
        %v814 = vand.u32 %v782, 15
        %v815 = vand.u32 %v783, 15
        %v816 = vand.u32 %v784, 15
        %v817 = vand.u32 %v785, 15
        %v818 = vand.u32 %v786, 15
        %v819 = vand.u32 %v787, 15
        %v820 = vand.u32 %v788, 15
        %v821 = vand.u32 %v789, 15
        %v822 = vand.u32 %v790, 15
        %v823 = vand.u32 %v791, 15
        %v824 = vand.u32 %v792, 15
        %v825 = vand.u32 %v793, 15
        %v826 = vand.u32 %v794, 15
        %v827 = vand.u32 %v795, 15
        %v828 = vand.u32 %v796, 15
        %v829 = vand.u32 %v797, 15
        %v830 = vand.u32 %v798, 15
        %v831 = vand.u32 %v799, 15
        %v832 = vand.u32 %v800, 15
        %v833 = vand.u32 %v801, 15
        %v834 = vand.u32 %v802, 15
        %v835 = vand.u32 %v803, 15
        %v836 = vpack.c.bf16 %v710, %v709
        %v837 = vpack.c.bf16 %v712, %v711
        %v838 = vpack.c.bf16 %v714, %v713
        %v839 = vpack.c.bf16 %v716, %v715
        %v840 = vpack.c.bf16 %v718, %v717
        %v841 = vpack.c.bf16 %v720, %v719
        %v842 = vpack.c.bf16 %v722, %v721
        %v843 = vpack.c.bf16 %v724, %v723
        %v844 = vpack.c.bf16 %v726, %v725
        %v845 = vpack.c.bf16 %v728, %v727
        %v846 = vpack.c.bf16 %v730, %v729
        %v847 = vpack.c.bf16 %v732, %v731
        %v848 = vpack.c.bf16 %v734, %v733
        %v849 = vpack.c.bf16 %v736, %v735
        %v850 = vpack.c.bf16 %v738, %v737
        %v851 = vpack.c.bf16 %v740, %v739
        %vm852 = vcmp.lt.s32.totalorder %v804, 15
        %vm853 = vcmp.lt.s32.totalorder %v805, 15
        %vm854 = vcmp.lt.s32.totalorder %v806, 15
        %vm855 = vcmp.lt.s32.totalorder %v807, 15
        %vm856 = vcmp.lt.s32.totalorder %v808, 15
        %vm857 = vcmp.lt.s32.totalorder %v809, 15
        %vm858 = vcmp.lt.s32.totalorder %v810, 15
        %vm859 = vcmp.lt.s32.totalorder %v811, 15
        %vm860 = vcmp.lt.s32.totalorder %v812, 15
        %vm861 = vcmp.lt.s32.totalorder %v813, 15
        %vm862 = vcmp.lt.s32.totalorder %v814, 15
        %vm863 = vcmp.lt.s32.totalorder %v815, 15
        %vm864 = vcmp.lt.s32.totalorder %v816, 15
        %vm865 = vcmp.lt.s32.totalorder %v817, 15
        %vm866 = vcmp.lt.s32.totalorder %v818, 15
        %vm867 = vcmp.lt.s32.totalorder %v819, 15
        %vm868 = vcmp.lt.s32.totalorder %v820, 15
        %vm869 = vcmp.lt.s32.totalorder %v821, 15
        %vm870 = vcmp.lt.s32.totalorder %v822, 15
        %vm871 = vcmp.lt.s32.totalorder %v823, 15
        %vm872 = vcmp.lt.s32.totalorder %v824, 15
        %vm873 = vcmp.lt.s32.totalorder %v825, 15
        %vm874 = vcmp.lt.s32.totalorder %v826, 15
        %vm875 = vcmp.lt.s32.totalorder %v827, 15
        %vm876 = vcmp.lt.s32.totalorder %v828, 15
        %vm877 = vcmp.lt.s32.totalorder %v829, 15
        %vm878 = vcmp.lt.s32.totalorder %v830, 15
        %vm879 = vcmp.lt.s32.totalorder %v831, 15
        %vm880 = vcmp.lt.s32.totalorder %v832, 15
        %vm881 = vcmp.lt.s32.totalorder %v833, 15
        %vm882 = vcmp.lt.s32.totalorder %v834, 15
        %vm883 = vcmp.lt.s32.totalorder %v835, 15
        %v884 = vsel %vm852, 1, 0
        %v885 = vsel %vm853, 1, 0
        %v886 = vsel %vm854, 1, 0
        %v887 = vsel %vm855, 1, 0
        %v888 = vsel %vm856, 1, 0
        %v889 = vsel %vm857, 1, 0
        %v890 = vsel %vm858, 1, 0
        %v891 = vsel %vm859, 1, 0
        %v892 = vsel %vm860, 1, 0
        %v893 = vsel %vm861, 1, 0
        %v894 = vsel %vm862, 1, 0
        %v895 = vsel %vm863, 1, 0
        %v896 = vsel %vm864, 1, 0
        %v897 = vsel %vm865, 1, 0
        %v898 = vsel %vm866, 1, 0
        %v899 = vsel %vm867, 1, 0
        %v900 = vsel %vm868, 1, 0
        %v901 = vsel %vm869, 1, 0
        %v902 = vsel %vm870, 1, 0
        %v903 = vsel %vm871, 1, 0
        %v904 = vsel %vm872, 1, 0
        %v905 = vsel %vm873, 1, 0
        %v906 = vsel %vm874, 1, 0
        %v907 = vsel %vm875, 1, 0
        %v908 = vsel %vm876, 1, 0
        %v909 = vsel %vm877, 1, 0
        %v910 = vsel %vm878, 1, 0
        %v911 = vsel %vm879, 1, 0
        %v912 = vsel %vm880, 1, 0
        %v913 = vsel %vm881, 1, 0
        %v914 = vsel %vm882, 1, 0
        %v915 = vsel %vm883, 1, 0
        %vm916 = vcmp.eq.s32.totalorder %v884, 1
        %vm917 = vcmp.eq.s32.totalorder %v885, 1
        %vm918 = vcmp.eq.s32.totalorder %v886, 1
        %vm919 = vcmp.eq.s32.totalorder %v887, 1
        %vm920 = vcmp.eq.s32.totalorder %v888, 1
        %vm921 = vcmp.eq.s32.totalorder %v889, 1
        %vm922 = vcmp.eq.s32.totalorder %v890, 1
        %vm923 = vcmp.eq.s32.totalorder %v891, 1
        %vm924 = vcmp.eq.s32.totalorder %v892, 1
        %vm925 = vcmp.eq.s32.totalorder %v893, 1
        %vm926 = vcmp.eq.s32.totalorder %v894, 1
        %vm927 = vcmp.eq.s32.totalorder %v895, 1
        %vm928 = vcmp.eq.s32.totalorder %v896, 1
        %vm929 = vcmp.eq.s32.totalorder %v897, 1
        %vm930 = vcmp.eq.s32.totalorder %v898, 1
        %vm931 = vcmp.eq.s32.totalorder %v899, 1
        %vm932 = vcmp.eq.s32.totalorder %v900, 1
        %vm933 = vcmp.eq.s32.totalorder %v901, 1
        %vm934 = vcmp.eq.s32.totalorder %v902, 1
        %vm935 = vcmp.eq.s32.totalorder %v903, 1
        %vm936 = vcmp.eq.s32.totalorder %v904, 1
        %vm937 = vcmp.eq.s32.totalorder %v905, 1
        %vm938 = vcmp.eq.s32.totalorder %v906, 1
        %vm939 = vcmp.eq.s32.totalorder %v907, 1
        %vm940 = vcmp.eq.s32.totalorder %v908, 1
        %vm941 = vcmp.eq.s32.totalorder %v909, 1
        %vm942 = vcmp.eq.s32.totalorder %v910, 1
        %vm943 = vcmp.eq.s32.totalorder %v911, 1
        %vm944 = vcmp.eq.s32.totalorder %v912, 1
        %vm945 = vcmp.eq.s32.totalorder %v913, 1
        %vm946 = vcmp.eq.s32.totalorder %v914, 1
        %vm947 = vcmp.eq.s32.totalorder %v915, 1
        %v948 = vsel %vm916, %v709, 0.0
        %v949 = vsel %vm917, %v710, 0.0
        %v950 = vsel %vm918, %v711, 0.0
        %v951 = vsel %vm919, %v712, 0.0
        %v952 = vsel %vm920, %v713, 0.0
        %v953 = vsel %vm921, %v714, 0.0
        %v954 = vsel %vm922, %v715, 0.0
        %v955 = vsel %vm923, %v716, 0.0
        %v956 = vsel %vm924, %v717, 0.0
        %v957 = vsel %vm925, %v718, 0.0
        %v958 = vsel %vm926, %v719, 0.0
        %v959 = vsel %vm927, %v720, 0.0
        %v960 = vsel %vm928, %v721, 0.0
        %v961 = vsel %vm929, %v722, 0.0
        %v962 = vsel %vm930, %v723, 0.0
        %v963 = vsel %vm931, %v724, 0.0
        %v964 = vsel %vm932, %v725, 0.0
        %v965 = vsel %vm933, %v726, 0.0
        %v966 = vsel %vm934, %v727, 0.0
        %v967 = vsel %vm935, %v728, 0.0
        %v968 = vsel %vm936, %v729, 0.0
        %v969 = vsel %vm937, %v730, 0.0
        %v970 = vsel %vm938, %v731, 0.0
        %v971 = vsel %vm939, %v732, 0.0
        %v972 = vsel %vm940, %v733, 0.0
        %v973 = vsel %vm941, %v734, 0.0
        %v974 = vsel %vm942, %v735, 0.0
        %v975 = vsel %vm943, %v736, 0.0
        %v976 = vsel %vm944, %v737, 0.0
        %v977 = vsel %vm945, %v738, 0.0
        %v978 = vsel %vm946, %v739, 0.0
        %v979 = vsel %vm947, %v740, 0.0
        %v980 = vpack.c.bf16 %v949, %v948
        %v981 = vpack.c.bf16 %v951, %v950
        %v982 = vpack.c.bf16 %v953, %v952
        %v983 = vpack.c.bf16 %v955, %v954
        %v984 = vpack.c.bf16 %v957, %v956
        %v985 = vpack.c.bf16 %v959, %v958
        %v986 = vpack.c.bf16 %v961, %v960
        %v987 = vpack.c.bf16 %v963, %v962
        %v988 = vpack.c.bf16 %v965, %v964
        %v989 = vpack.c.bf16 %v967, %v966
        %v990 = vpack.c.bf16 %v969, %v968
        %v991 = vpack.c.bf16 %v971, %v970
        %v992 = vpack.c.bf16 %v973, %v972
        %v993 = vpack.c.bf16 %v975, %v974
        %v994 = vpack.c.bf16 %v977, %v976
        %v995 = vpack.c.bf16 %v979, %v978
        %vm996 = vcmp.gt.s32.totalorder %v804, 0
        %vm997 = vcmp.gt.s32.totalorder %v805, 0
        %vm998 = vcmp.gt.s32.totalorder %v806, 0
        %vm999 = vcmp.gt.s32.totalorder %v807, 0
        %vm1000 = vcmp.gt.s32.totalorder %v808, 0
        %vm1001 = vcmp.gt.s32.totalorder %v809, 0
        %vm1002 = vcmp.gt.s32.totalorder %v810, 0
        %vm1003 = vcmp.gt.s32.totalorder %v811, 0
        %vm1004 = vcmp.gt.s32.totalorder %v812, 0
        %vm1005 = vcmp.gt.s32.totalorder %v813, 0
        %vm1006 = vcmp.gt.s32.totalorder %v814, 0
        %vm1007 = vcmp.gt.s32.totalorder %v815, 0
        %vm1008 = vcmp.gt.s32.totalorder %v816, 0
        %vm1009 = vcmp.gt.s32.totalorder %v817, 0
        %vm1010 = vcmp.gt.s32.totalorder %v818, 0
        %vm1011 = vcmp.gt.s32.totalorder %v819, 0
        %vm1012 = vcmp.gt.s32.totalorder %v820, 0
        %vm1013 = vcmp.gt.s32.totalorder %v821, 0
        %vm1014 = vcmp.gt.s32.totalorder %v822, 0
        %vm1015 = vcmp.gt.s32.totalorder %v823, 0
        %vm1016 = vcmp.gt.s32.totalorder %v824, 0
        %vm1017 = vcmp.gt.s32.totalorder %v825, 0
        %vm1018 = vcmp.gt.s32.totalorder %v826, 0
        %vm1019 = vcmp.gt.s32.totalorder %v827, 0
        %vm1020 = vcmp.gt.s32.totalorder %v828, 0
        %vm1021 = vcmp.gt.s32.totalorder %v829, 0
        %vm1022 = vcmp.gt.s32.totalorder %v830, 0
        %vm1023 = vcmp.gt.s32.totalorder %v831, 0
        %vm1024 = vcmp.gt.s32.totalorder %v832, 0
        %vm1025 = vcmp.gt.s32.totalorder %v833, 0
        %vm1026 = vcmp.gt.s32.totalorder %v834, 0
        %vm1027 = vcmp.gt.s32.totalorder %v835, 0
        %v1028 = vsel %vm996, 1, 0
        %v1029 = vsel %vm997, 1, 0
        %v1030 = vsel %vm998, 1, 0
        %v1031 = vsel %vm999, 1, 0
        %v1032 = vsel %vm1000, 1, 0
        %v1033 = vsel %vm1001, 1, 0
        %v1034 = vsel %vm1002, 1, 0
        %v1035 = vsel %vm1003, 1, 0
        %v1036 = vsel %vm1004, 1, 0
        %v1037 = vsel %vm1005, 1, 0
        %v1038 = vsel %vm1006, 1, 0
        %v1039 = vsel %vm1007, 1, 0
        %v1040 = vsel %vm1008, 1, 0
        %v1041 = vsel %vm1009, 1, 0
        %v1042 = vsel %vm1010, 1, 0
        %v1043 = vsel %vm1011, 1, 0
        %v1044 = vsel %vm1012, 1, 0
        %v1045 = vsel %vm1013, 1, 0
        %v1046 = vsel %vm1014, 1, 0
        %v1047 = vsel %vm1015, 1, 0
        %v1048 = vsel %vm1016, 1, 0
        %v1049 = vsel %vm1017, 1, 0
        %v1050 = vsel %vm1018, 1, 0
        %v1051 = vsel %vm1019, 1, 0
        %v1052 = vsel %vm1020, 1, 0
        %v1053 = vsel %vm1021, 1, 0
        %v1054 = vsel %vm1022, 1, 0
        %v1055 = vsel %vm1023, 1, 0
        %v1056 = vsel %vm1024, 1, 0
        %v1057 = vsel %vm1025, 1, 0
        %v1058 = vsel %vm1026, 1, 0
        %v1059 = vsel %vm1027, 1, 0
        %vm1060 = vcmp.eq.s32.totalorder %v1028, 1
        %vm1061 = vcmp.eq.s32.totalorder %v1029, 1
        %vm1062 = vcmp.eq.s32.totalorder %v1030, 1
        %vm1063 = vcmp.eq.s32.totalorder %v1031, 1
        %vm1064 = vcmp.eq.s32.totalorder %v1032, 1
        %vm1065 = vcmp.eq.s32.totalorder %v1033, 1
        %vm1066 = vcmp.eq.s32.totalorder %v1034, 1
        %vm1067 = vcmp.eq.s32.totalorder %v1035, 1
        %vm1068 = vcmp.eq.s32.totalorder %v1036, 1
        %vm1069 = vcmp.eq.s32.totalorder %v1037, 1
        %vm1070 = vcmp.eq.s32.totalorder %v1038, 1
        %vm1071 = vcmp.eq.s32.totalorder %v1039, 1
        %vm1072 = vcmp.eq.s32.totalorder %v1040, 1
        %vm1073 = vcmp.eq.s32.totalorder %v1041, 1
        %vm1074 = vcmp.eq.s32.totalorder %v1042, 1
        %vm1075 = vcmp.eq.s32.totalorder %v1043, 1
        %vm1076 = vcmp.eq.s32.totalorder %v1044, 1
        %vm1077 = vcmp.eq.s32.totalorder %v1045, 1
        %vm1078 = vcmp.eq.s32.totalorder %v1046, 1
        %vm1079 = vcmp.eq.s32.totalorder %v1047, 1
        %vm1080 = vcmp.eq.s32.totalorder %v1048, 1
        %vm1081 = vcmp.eq.s32.totalorder %v1049, 1
        %vm1082 = vcmp.eq.s32.totalorder %v1050, 1
        %vm1083 = vcmp.eq.s32.totalorder %v1051, 1
        %vm1084 = vcmp.eq.s32.totalorder %v1052, 1
        %vm1085 = vcmp.eq.s32.totalorder %v1053, 1
        %vm1086 = vcmp.eq.s32.totalorder %v1054, 1
        %vm1087 = vcmp.eq.s32.totalorder %v1055, 1
        %vm1088 = vcmp.eq.s32.totalorder %v1056, 1
        %vm1089 = vcmp.eq.s32.totalorder %v1057, 1
        %vm1090 = vcmp.eq.s32.totalorder %v1058, 1
        %vm1091 = vcmp.eq.s32.totalorder %v1059, 1
        %v1092 = vsel %vm1060, %v709, 0.0
        %v1093 = vsel %vm1061, %v710, 0.0
        %v1094 = vsel %vm1062, %v711, 0.0
        %v1095 = vsel %vm1063, %v712, 0.0
        %v1096 = vsel %vm1064, %v713, 0.0
        %v1097 = vsel %vm1065, %v714, 0.0
        %v1098 = vsel %vm1066, %v715, 0.0
        %v1099 = vsel %vm1067, %v716, 0.0
        %v1100 = vsel %vm1068, %v717, 0.0
        %v1101 = vsel %vm1069, %v718, 0.0
        %v1102 = vsel %vm1070, %v719, 0.0
        %v1103 = vsel %vm1071, %v720, 0.0
        %v1104 = vsel %vm1072, %v721, 0.0
        %v1105 = vsel %vm1073, %v722, 0.0
        %v1106 = vsel %vm1074, %v723, 0.0
        %v1107 = vsel %vm1075, %v724, 0.0
        %v1108 = vsel %vm1076, %v725, 0.0
        %v1109 = vsel %vm1077, %v726, 0.0
        %v1110 = vsel %vm1078, %v727, 0.0
        %v1111 = vsel %vm1079, %v728, 0.0
        %v1112 = vsel %vm1080, %v729, 0.0
        %v1113 = vsel %vm1081, %v730, 0.0
        %v1114 = vsel %vm1082, %v731, 0.0
        %v1115 = vsel %vm1083, %v732, 0.0
        %v1116 = vsel %vm1084, %v733, 0.0
        %v1117 = vsel %vm1085, %v734, 0.0
        %v1118 = vsel %vm1086, %v735, 0.0
        %v1119 = vsel %vm1087, %v736, 0.0
        %v1120 = vsel %vm1088, %v737, 0.0
        %v1121 = vsel %vm1089, %v738, 0.0
        %v1122 = vsel %vm1090, %v739, 0.0
        %v1123 = vsel %vm1091, %v740, 0.0
        %v1124 = vpack.c.bf16 %v1093, %v1092
        %v1125 = vpack.c.bf16 %v1095, %v1094
        %v1126 = vpack.c.bf16 %v1097, %v1096
        %v1127 = vpack.c.bf16 %v1099, %v1098
        %v1128 = vpack.c.bf16 %v1101, %v1100
        %v1129 = vpack.c.bf16 %v1103, %v1102
        %v1130 = vpack.c.bf16 %v1105, %v1104
        %v1131 = vpack.c.bf16 %v1107, %v1106
        %v1132 = vpack.c.bf16 %v1109, %v1108
        %v1133 = vpack.c.bf16 %v1111, %v1110
        %v1134 = vpack.c.bf16 %v1113, %v1112
        %v1135 = vpack.c.bf16 %v1115, %v1114
        %v1136 = vpack.c.bf16 %v1117, %v1116
        %v1137 = vpack.c.bf16 %v1119, %v1118
        %v1138 = vpack.c.bf16 %v1121, %v1120
        %v1139 = vpack.c.bf16 %v1123, %v1122
        %1140 = vst [vmem:[#allocation2 + $0x20] sm:$0xff] %v836
        %1141 = vst [vmem:[#allocation2 + $0x38] sm:$0xff] %v837
        %1142 = vst [vmem:[#allocation2 + $0x50] sm:$0xff] %v838
        %1143 = vst [vmem:[#allocation2 + $0x68] sm:$0xff] %v839
        %1144 = vst [vmem:[#allocation2 + $0x80] sm:$0xff] %v840
        %1145 = vst [vmem:[#allocation2 + $0x98] sm:$0xff] %v841
        %1146 = vst [vmem:[#allocation2 + $0xb0] sm:$0xff] %v842
        %1147 = vst [vmem:[#allocation2 + $0xc8] sm:$0xff] %v843
        %1148 = vst [vmem:[#allocation2 + $0xe0] sm:$0xff] %v844
        %1149 = vst [vmem:[#allocation2 + $0xf8] sm:$0xff] %v845
        %1150 = vst [vmem:[#allocation2 + $0x110] sm:$0xff] %v846
        %1151 = vst [vmem:[#allocation2 + $0x128] sm:$0xff] %v847
        %1152 = vst [vmem:[#allocation2 + $0x140] sm:$0xff] %v848
        %1153 = vst [vmem:[#allocation2 + $0x158] sm:$0xff] %v849
        %1154 = vst [vmem:[#allocation2 + $0x170] sm:$0xff] %v850
        %1155 = vst [vmem:[#allocation2 + $0x188] sm:$0xff] %v851
        %v1157 = vshrl.u32 %v980, 16
        %v1159 = vrot.slane %v1157, 7
        %v1160 = vshll.u32 %v980, 16
        %v1162 = vor.u32 %v1159, %v1160
        %v1164 = vshrl.u32 %v981, 16
        %v1166 = vrot.slane %v1164, 7
        %v1167 = vshll.u32 %v981, 16
        %v1169 = vor.u32 %v1166, %v1167
        %v1170 = vsel %vm745, %v1159, %v1169
        %v1172 = vshrl.u32 %v982, 16
        %v1174 = vrot.slane %v1172, 7
        %v1175 = vshll.u32 %v982, 16
        %v1177 = vor.u32 %v1174, %v1175
        %v1178 = vsel %vm745, %v1166, %v1177
        %v1180 = vshrl.u32 %v983, 16
        %v1182 = vrot.slane %v1180, 7
        %v1183 = vshll.u32 %v983, 16
        %v1185 = vor.u32 %v1182, %v1183
        %v1186 = vsel %vm745, %v1174, %v1185
        %v1188 = vshrl.u32 %v984, 16
        %v1190 = vrot.slane %v1188, 7
        %v1191 = vshll.u32 %v984, 16
        %v1193 = vor.u32 %v1190, %v1191
        %v1194 = vsel %vm745, %v1182, %v1193
        %v1196 = vshrl.u32 %v985, 16
        %v1198 = vrot.slane %v1196, 7
        %v1199 = vshll.u32 %v985, 16
        %v1201 = vor.u32 %v1198, %v1199
        %v1202 = vsel %vm745, %v1190, %v1201
        %v1204 = vshrl.u32 %v986, 16
        %v1206 = vrot.slane %v1204, 7
        %v1207 = vshll.u32 %v986, 16
        %v1209 = vor.u32 %v1206, %v1207
        %v1210 = vsel %vm745, %v1198, %v1209
        %v1212 = vshrl.u32 %v987, 16
        %v1214 = vrot.slane %v1212, 7
        %v1215 = vshll.u32 %v987, 16
        %v1217 = vor.u32 %v1214, %v1215
        %v1218 = vsel %vm745, %v1206, %v1217
        %v1220 = vshrl.u32 %v988, 16
        %v1222 = vrot.slane %v1220, 7
        %v1223 = vshll.u32 %v988, 16
        %v1225 = vor.u32 %v1222, %v1223
        %v1226 = vsel %vm745, %v1214, %v1225
        %v1228 = vshrl.u32 %v989, 16
        %v1230 = vrot.slane %v1228, 7
        %v1231 = vshll.u32 %v989, 16
        %v1233 = vor.u32 %v1230, %v1231
        %v1234 = vsel %vm745, %v1222, %v1233
        %v1236 = vshrl.u32 %v990, 16
        %v1238 = vrot.slane %v1236, 7
        %v1239 = vshll.u32 %v990, 16
        %v1241 = vor.u32 %v1238, %v1239
        %v1242 = vsel %vm745, %v1230, %v1241
        %v1244 = vshrl.u32 %v991, 16
        %v1246 = vrot.slane %v1244, 7
        %v1247 = vshll.u32 %v991, 16
        %v1249 = vor.u32 %v1246, %v1247
        %v1250 = vsel %vm745, %v1238, %v1249
        %v1252 = vshrl.u32 %v992, 16
        %v1254 = vrot.slane %v1252, 7
        %v1255 = vshll.u32 %v992, 16
        %v1257 = vor.u32 %v1254, %v1255
        %v1258 = vsel %vm745, %v1246, %v1257
        %v1260 = vshrl.u32 %v993, 16
        %v1262 = vrot.slane %v1260, 7
        %v1263 = vshll.u32 %v993, 16
        %v1265 = vor.u32 %v1262, %v1263
        %v1266 = vsel %vm745, %v1254, %v1265
        %v1268 = vshrl.u32 %v994, 16
        %v1270 = vrot.slane %v1268, 7
        %v1271 = vshll.u32 %v994, 16
        %v1273 = vor.u32 %v1270, %v1271
        %v1274 = vsel %vm745, %v1262, %v1273
        %v1276 = vshrl.u32 %v995, 16
        %v1278 = vrot.slane %v1276, 7
        %v1279 = vshll.u32 %v995, 16
        %v1281 = vor.u32 %v1278, %v1279
        %v1282 = vsel %vm745, %v1270, %v1281
        %vm1300 = vcmask 1047552
        %vm1301 = vsmask.f32 7938
        %vm1302 = vmand %vm1300, %vm1301
        %v1303 = vld [vmem:[#allocation2 + $0x18] sm:$0xff]
        %v1304 = vsel %vm1302, %v1162, %v1303
        %1305 = vst [vmem:[#allocation2 + $0x18] sm:$0xff] %v1304
        %1306 = vst [vmem:[#allocation2 + $0x30] sm:$0xff] %v1170
        %1307 = vst [vmem:[#allocation2 + $0x48] sm:$0xff] %v1178
        %1308 = vst [vmem:[#allocation2 + $0x60] sm:$0xff] %v1186
        %1309 = vst [vmem:[#allocation2 + $0x78] sm:$0xff] %v1194
        %1310 = vst [vmem:[#allocation2 + $0x90] sm:$0xff] %v1202
        %1311 = vst [vmem:[#allocation2 + $0xa8] sm:$0xff] %v1210
        %1312 = vst [vmem:[#allocation2 + $0xc0] sm:$0xff] %v1218
        %1313 = vst [vmem:[#allocation2 + $0xd8] sm:$0xff] %v1226
        %1314 = vst [vmem:[#allocation2 + $0xf0] sm:$0xff] %v1234
        %1315 = vst [vmem:[#allocation2 + $0x108] sm:$0xff] %v1242
        %1316 = vst [vmem:[#allocation2 + $0x120] sm:$0xff] %v1250
        %1317 = vst [vmem:[#allocation2 + $0x138] sm:$0xff] %v1258
        %1318 = vst [vmem:[#allocation2 + $0x150] sm:$0xff] %v1266
        %1319 = vst [vmem:[#allocation2 + $0x168] sm:$0xff] %v1274
        %1320 = vst [vmem:[#allocation2 + $0x180] sm:$0xff] %v1282
        %v1321 = vld [vmem:[#allocation2 + $0x198] sm:$0x1]
        %v1322 = vsel %vm746, %v1278, %v1321
        %1323 = vst [vmem:[#allocation2 + $0x198] sm:$0x1] %v1322
        %vm1324 = vsmask.f32 7424
        %v1326 = vshll.u32 %v1124, 16
        %v1328 = vrot.slane %v1326, 1
        %v1329 = vshrl.u32 %v1124, 16
        %v1331 = vor.u32 %v1329, %v1328
        %v1333 = vshll.u32 %v1125, 16
        %v1335 = vrot.slane %v1333, 1
        %v1336 = vsel %vm1324, %v1331, %v1335
        %v1337 = vshrl.u32 %v1125, 16
        %v1339 = vor.u32 %v1337, %v1335
        %v1341 = vshll.u32 %v1126, 16
        %v1343 = vrot.slane %v1341, 1
        %v1344 = vsel %vm1324, %v1339, %v1343
        %v1345 = vshrl.u32 %v1126, 16
        %v1347 = vor.u32 %v1345, %v1343
        %v1349 = vshll.u32 %v1127, 16
        %v1351 = vrot.slane %v1349, 1
        %v1352 = vsel %vm1324, %v1347, %v1351
        %v1353 = vshrl.u32 %v1127, 16
        %v1355 = vor.u32 %v1353, %v1351
        %v1357 = vshll.u32 %v1128, 16
        %v1359 = vrot.slane %v1357, 1
        %v1360 = vsel %vm1324, %v1355, %v1359
        %v1361 = vshrl.u32 %v1128, 16
        %v1363 = vor.u32 %v1361, %v1359
        %v1365 = vshll.u32 %v1129, 16
        %v1367 = vrot.slane %v1365, 1
        %v1368 = vsel %vm1324, %v1363, %v1367
        %v1369 = vshrl.u32 %v1129, 16
        %v1371 = vor.u32 %v1369, %v1367
        %v1373 = vshll.u32 %v1130, 16
        %v1375 = vrot.slane %v1373, 1
        %v1376 = vsel %vm1324, %v1371, %v1375
        %v1377 = vshrl.u32 %v1130, 16
        %v1379 = vor.u32 %v1377, %v1375
        %v1381 = vshll.u32 %v1131, 16
        %v1383 = vrot.slane %v1381, 1
        %v1384 = vsel %vm1324, %v1379, %v1383
        %v1385 = vshrl.u32 %v1131, 16
        %v1387 = vor.u32 %v1385, %v1383
        %v1389 = vshll.u32 %v1132, 16
        %v1391 = vrot.slane %v1389, 1
        %v1392 = vsel %vm1324, %v1387, %v1391
        %v1393 = vshrl.u32 %v1132, 16
        %v1395 = vor.u32 %v1393, %v1391
        %v1397 = vshll.u32 %v1133, 16
        %v1399 = vrot.slane %v1397, 1
        %v1400 = vsel %vm1324, %v1395, %v1399
        %v1401 = vshrl.u32 %v1133, 16
        %v1403 = vor.u32 %v1401, %v1399
        %v1405 = vshll.u32 %v1134, 16
        %v1407 = vrot.slane %v1405, 1
        %v1408 = vsel %vm1324, %v1403, %v1407
        %v1409 = vshrl.u32 %v1134, 16
        %v1411 = vor.u32 %v1409, %v1407
        %v1413 = vshll.u32 %v1135, 16
        %v1415 = vrot.slane %v1413, 1
        %v1416 = vsel %vm1324, %v1411, %v1415
        %v1417 = vshrl.u32 %v1135, 16
        %v1419 = vor.u32 %v1417, %v1415
        %v1421 = vshll.u32 %v1136, 16
        %v1423 = vrot.slane %v1421, 1
        %v1424 = vsel %vm1324, %v1419, %v1423
        %v1425 = vshrl.u32 %v1136, 16
        %v1427 = vor.u32 %v1425, %v1423
        %v1429 = vshll.u32 %v1137, 16
        %v1431 = vrot.slane %v1429, 1
        %v1432 = vsel %vm1324, %v1427, %v1431
        %v1433 = vshrl.u32 %v1137, 16
        %v1435 = vor.u32 %v1433, %v1431
        %v1437 = vshll.u32 %v1138, 16
        %v1439 = vrot.slane %v1437, 1
        %v1440 = vsel %vm1324, %v1435, %v1439
        %v1441 = vshrl.u32 %v1138, 16
        %v1443 = vor.u32 %v1441, %v1439
        %v1445 = vshll.u32 %v1139, 16
        %v1447 = vrot.slane %v1445, 1
        %v1448 = vsel %vm1324, %v1443, %v1447
        %v1449 = vshrl.u32 %v1139, 16
        %v1451 = vor.u32 %v1449, %v1447
        %v1469 = vld [vmem:[#allocation2 + $0x10] sm:$0x80]
        %v1470 = vsel %vm758, %v1328, %v1469
        %1471 = vst [vmem:[#allocation2 + $0x10] sm:$0x80] %v1470
        %1472 = vst [vmem:[#allocation2 + $0x28] sm:$0xff] %v1336
        %1473 = vst [vmem:[#allocation2 + $0x40] sm:$0xff] %v1344
        %1474 = vst [vmem:[#allocation2 + $0x58] sm:$0xff] %v1352
        %1475 = vst [vmem:[#allocation2 + $0x70] sm:$0xff] %v1360
        %1476 = vst [vmem:[#allocation2 + $0x88] sm:$0xff] %v1368
        %1477 = vst [vmem:[#allocation2 + $0xa0] sm:$0xff] %v1376
        %1478 = vst [vmem:[#allocation2 + $0xb8] sm:$0xff] %v1384
        %1479 = vst [vmem:[#allocation2 + $0xd0] sm:$0xff] %v1392
        %1480 = vst [vmem:[#allocation2 + $0xe8] sm:$0xff] %v1400
        %1481 = vst [vmem:[#allocation2 + $0x100] sm:$0xff] %v1408
        %1482 = vst [vmem:[#allocation2 + $0x118] sm:$0xff] %v1416
        %1483 = vst [vmem:[#allocation2 + $0x130] sm:$0xff] %v1424
        %1484 = vst [vmem:[#allocation2 + $0x148] sm:$0xff] %v1432
        %1485 = vst [vmem:[#allocation2 + $0x160] sm:$0xff] %v1440
        %1486 = vst [vmem:[#allocation2 + $0x178] sm:$0xff] %v1448
        %vm1487 = vmand %vm1300, %vm1324
        %v1488 = vld [vmem:[#allocation2 + $0x190] sm:$0xff]
        %v1489 = vsel %vm1487, %v1451, %v1488
        %1490 = vst [vmem:[#allocation2 + $0x190] sm:$0xff] %v1489
        %v1491 = vld [vmem:[#allocation2] sm:$0xff]
        %v1492 = vld [vmem:[#allocation2 + $0x8] sm:$0xff]
        %v1493 = vld [vmem:[#allocation2 + $0x10] sm:$0xff]
        %v1494 = vld [vmem:[#allocation2 + $0x18] sm:$0xff]
        %v1495 = vld [vmem:[#allocation2 + $0x20] sm:$0xff]
        %v1496 = vld [vmem:[#allocation2 + $0x28] sm:$0xff]
        %v1497 = vld [vmem:[#allocation2 + $0x30] sm:$0xff]
        %v1498 = vld [vmem:[#allocation2 + $0x38] sm:$0xff]
        %v1499 = vld [vmem:[#allocation2 + $0x40] sm:$0xff]
        %v1500 = vld [vmem:[#allocation2 + $0x48] sm:$0xff]
        %v1501 = vld [vmem:[#allocation2 + $0x50] sm:$0xff]
        %v1502 = vld [vmem:[#allocation2 + $0x58] sm:$0xff]
        %v1503 = vld [vmem:[#allocation2 + $0x60] sm:$0xff]
        %v1504 = vld [vmem:[#allocation2 + $0x68] sm:$0xff]
        %v1505 = vld [vmem:[#allocation2 + $0x70] sm:$0xff]
        %v1506 = vld [vmem:[#allocation2 + $0x78] sm:$0xff]
        %v1507 = vld [vmem:[#allocation2 + $0x80] sm:$0xff]
        %v1508 = vld [vmem:[#allocation2 + $0x88] sm:$0xff]
        %v1509 = vld [vmem:[#allocation2 + $0x90] sm:$0xff]
        %v1510 = vld [vmem:[#allocation2 + $0x98] sm:$0xff]
        %v1511 = vld [vmem:[#allocation2 + $0xa0] sm:$0xff]
        %v1512 = vld [vmem:[#allocation2 + $0xa8] sm:$0xff]
        %v1513 = vld [vmem:[#allocation2 + $0xb0] sm:$0xff]
        %v1514 = vld [vmem:[#allocation2 + $0xb8] sm:$0xff]
        %v1515 = vld [vmem:[#allocation2 + $0xc0] sm:$0xff]
        %v1516 = vld [vmem:[#allocation2 + $0xc8] sm:$0xff]
        %v1517 = vld [vmem:[#allocation2 + $0xd0] sm:$0xff]
        %v1518 = vld [vmem:[#allocation2 + $0xd8] sm:$0xff]
        %v1519 = vld [vmem:[#allocation2 + $0xe0] sm:$0xff]
        %v1520 = vld [vmem:[#allocation2 + $0xe8] sm:$0xff]
        %v1521 = vld [vmem:[#allocation2 + $0xf0] sm:$0xff]
        %v1522 = vld [vmem:[#allocation2 + $0xf8] sm:$0xff]
        %v1523 = vld [vmem:[#allocation2 + $0x100] sm:$0xff]
        %v1524 = vld [vmem:[#allocation2 + $0x108] sm:$0xff]
        %v1525 = vld [vmem:[#allocation2 + $0x110] sm:$0xff]
        %v1526 = vld [vmem:[#allocation2 + $0x118] sm:$0xff]
        %v1527 = vld [vmem:[#allocation2 + $0x120] sm:$0xff]
        %v1528 = vld [vmem:[#allocation2 + $0x128] sm:$0xff]
        %v1529 = vld [vmem:[#allocation2 + $0x130] sm:$0xff]
        %v1530 = vld [vmem:[#allocation2 + $0x138] sm:$0xff]
        %v1531 = vld [vmem:[#allocation2 + $0x140] sm:$0xff]
        %v1532 = vld [vmem:[#allocation2 + $0x148] sm:$0xff]
        %v1533 = vld [vmem:[#allocation2 + $0x150] sm:$0xff]
        %v1534 = vld [vmem:[#allocation2 + $0x158] sm:$0xff]
        %v1535 = vld [vmem:[#allocation2 + $0x160] sm:$0xff]
        %v1536 = vld [vmem:[#allocation2 + $0x168] sm:$0xff]
        %v1537 = vld [vmem:[#allocation2 + $0x170] sm:$0xff]
        %v1538 = vld [vmem:[#allocation2 + $0x178] sm:$0xff]
        %v1539 = vld [vmem:[#allocation8] sm:$0xf]
        %v1540 = vld [vmem:[#allocation8 + $0x4] sm:$0xf]
        %v1541 = vld [vmem:[#allocation8 + $0x8] sm:$0xf]
        %v1542 = vld [vmem:[#allocation8 + $0xc] sm:$0xf]
        %v1543 = vld [vmem:[#allocation8 + $0x10] sm:$0xf]
        %v1544 = vld [vmem:[#allocation8 + $0x14] sm:$0xf]
        %v1545 = vld [vmem:[#allocation8 + $0x18] sm:$0xf]
        %v1546 = vld [vmem:[#allocation8 + $0x1c] sm:$0xf]
        %v1547 = vld [vmem:[#allocation8 + $0x20] sm:$0xf]
        %v1548 = vld [vmem:[#allocation8 + $0x24] sm:$0xf]
        %v1549 = vld [vmem:[#allocation8 + $0x28] sm:$0xf]
        %v1550 = vld [vmem:[#allocation8 + $0x2c] sm:$0xf]
        %v1551 = vld [vmem:[#allocation8 + $0x30] sm:$0xf]
        %v1552 = vld [vmem:[#allocation8 + $0x34] sm:$0xf]
        %v1553 = vld [vmem:[#allocation8 + $0x38] sm:$0xf]
        %v1554 = vld [vmem:[#allocation8 + $0x3c] sm:$0xf]
        %v1555 = vld [vmem:[#allocation8 + $0x40] sm:$0xf]
        %v1556 = vld [vmem:[#allocation8 + $0x44] sm:$0xf]
        %v1557 = vld [vmem:[#allocation8 + $0x48] sm:$0xf]
        %v1558 = vld [vmem:[#allocation8 + $0x4c] sm:$0xf]
        %v1559 = vld [vmem:[#allocation8 + $0x50] sm:$0xf]
        %v1560 = vld [vmem:[#allocation8 + $0x54] sm:$0xf]
        %v1561 = vld [vmem:[#allocation8 + $0x58] sm:$0xf]
        %v1562 = vld [vmem:[#allocation8 + $0x5c] sm:$0xf]
        %v1563 = vld [vmem:[#allocation8 + $0x60] sm:$0xf]
        %v1564 = vld [vmem:[#allocation8 + $0x64] sm:$0xf]
        %v1565 = vld [vmem:[#allocation8 + $0x68] sm:$0xf]
        %v1566 = vld [vmem:[#allocation8 + $0x6c] sm:$0xf]
        %v1567 = vld [vmem:[#allocation8 + $0x70] sm:$0xf]
        %v1568 = vld [vmem:[#allocation8 + $0x74] sm:$0xf]
        %v1569 = vld [vmem:[#allocation8 + $0x78] sm:$0xf]
        %v1570 = vld [vmem:[#allocation8 + $0x7c] sm:$0xf]
        %v1571 = vld [vmem:[#allocation8 + $0x80] sm:$0xf]
        %v1572 = vld [vmem:[#allocation8 + $0x84] sm:$0xf]
        %v1573 = vld [vmem:[#allocation8 + $0x88] sm:$0xf]
        %v1574 = vld [vmem:[#allocation8 + $0x8c] sm:$0xf]
        %v1575 = vld [vmem:[#allocation8 + $0x90] sm:$0xf]
        %v1576 = vld [vmem:[#allocation8 + $0x94] sm:$0xf]
        %v1577 = vld [vmem:[#allocation8 + $0x98] sm:$0xf]
        %v1578 = vld [vmem:[#allocation8 + $0x9c] sm:$0xf]
        %v1579 = vld [vmem:[#allocation8 + $0xa0] sm:$0xf]
        %v1580 = vld [vmem:[#allocation8 + $0xa4] sm:$0xf]
        %v1581 = vld [vmem:[#allocation8 + $0xa8] sm:$0xf]
        %v1582 = vld [vmem:[#allocation8 + $0xac] sm:$0xf]
        %v1583 = vld [vmem:[#allocation8 + $0xb0] sm:$0xf]
        %v1584 = vld [vmem:[#allocation8 + $0xb4] sm:$0xf]
        %v1585 = vld [vmem:[#allocation8 + $0xb8] sm:$0xf]
        %v1586 = vld [vmem:[#allocation8 + $0xbc] sm:$0xf]
        %v1587 = vld [vmem:[#allocation2 + $0x180] sm:$0xff]
        %v1588 = vld [vmem:[#allocation2 + $0x188] sm:$0xff]
        %v1589 = vld [vmem:[#allocation2 + $0x190] sm:$0xff]
        %s1590 = scalar_lea.vmem [#allocation8], 192
        %v1591 = vld [vmem:[%s1590] sm:$0xf]
        %v1592 = vld [vmem:[%s1590 + $0x4] sm:$0xf]
        %v1593 = vld [vmem:[%s1590 + $0x8] sm:$0xf]
        %v1594 = vld [vmem:[%s1590 + $0xc] sm:$0xf]
        %v1595 = vld [vmem:[%s1590 + $0x10] sm:$0xf]
        %v1596 = vld [vmem:[%s1590 + $0x14] sm:$0xf]
        %v1597 = vld [vmem:[%s1590 + $0x18] sm:$0xf]
        %v1598 = vld [vmem:[%s1590 + $0x1c] sm:$0xf]
        %v1599 = vld [vmem:[%s1590 + $0x20] sm:$0xf]
        %v1600 = vld [vmem:[%s1590 + $0x24] sm:$0xf]
        %v1601 = vld [vmem:[%s1590 + $0x28] sm:$0xf]
        %v1602 = vld [vmem:[%s1590 + $0x2c] sm:$0xf]
        %v1603 = vld [vmem:[%s1590 + $0x30] sm:$0xf]
        %v1604 = vld [vmem:[%s1590 + $0x34] sm:$0xf]
        %v1605 = vld [vmem:[%s1590 + $0x38] sm:$0xf]
        %v1606 = vld [vmem:[%s1590 + $0x3c] sm:$0xf]
        %v1607 = vld [vmem:[%s1590 + $0x40] sm:$0xf]
        %v1608 = vld [vmem:[%s1590 + $0x44] sm:$0xf]
        %v1609 = vld [vmem:[%s1590 + $0x48] sm:$0xf]
        %v1610 = vld [vmem:[%s1590 + $0x4c] sm:$0xf]
        %v1611 = vld [vmem:[%s1590 + $0x50] sm:$0xf]
        %v1612 = vld [vmem:[%s1590 + $0x54] sm:$0xf]
        %v1613 = vld [vmem:[%s1590 + $0x58] sm:$0xf]
        %v1614 = vld [vmem:[%s1590 + $0x5c] sm:$0xf]
        %v1615 = vld [vmem:[%s1590 + $0x60] sm:$0xf]
        %v1616 = vld [vmem:[%s1590 + $0x64] sm:$0xf]
        %v1617 = vld [vmem:[%s1590 + $0x68] sm:$0xf]
        %v1618 = vld [vmem:[%s1590 + $0x6c] sm:$0xf]
        %v1619 = vld [vmem:[%s1590 + $0x70] sm:$0xf]
        %v1620 = vld [vmem:[%s1590 + $0x74] sm:$0xf]
        %v1621 = vld [vmem:[%s1590 + $0x78] sm:$0xf]
        %v1622 = vld [vmem:[%s1590 + $0x7c] sm:$0xf]
        %v1623 = vld [vmem:[%s1590 + $0x80] sm:$0xf]
        %v1624 = vld [vmem:[%s1590 + $0x84] sm:$0xf]
        %v1625 = vld [vmem:[%s1590 + $0x88] sm:$0xf]
        %v1626 = vld [vmem:[%s1590 + $0x8c] sm:$0xf]
        %v1627 = vld [vmem:[%s1590 + $0x90] sm:$0xf]
        %v1628 = vld [vmem:[%s1590 + $0x94] sm:$0xf]
        %v1629 = vld [vmem:[%s1590 + $0x98] sm:$0xf]
        %v1630 = vld [vmem:[%s1590 + $0x9c] sm:$0xf]
        %v1631 = vld [vmem:[%s1590 + $0xa0] sm:$0xf]
        %v1632 = vld [vmem:[%s1590 + $0xa4] sm:$0xf]
        %v1633 = vld [vmem:[%s1590 + $0xa8] sm:$0xf]
        %v1634 = vld [vmem:[%s1590 + $0xac] sm:$0xf]
        %v1635 = vld [vmem:[%s1590 + $0xb0] sm:$0xf]
        %v1636 = vld [vmem:[%s1590 + $0xb4] sm:$0xf]
        %v1637 = vld [vmem:[%s1590 + $0xb8] sm:$0xf]
        %v1638 = vld [vmem:[%s1590 + $0xbc] sm:$0xf]
        %v1687 = vunpack.c.l.b16 %v1591
        %v1688 = vunpack.c.l.b16 %v1592
        %v1689 = vunpack.c.l.b16 %v1593
        %v1690 = vunpack.c.l.b16 %v1594
        %v1691 = vunpack.c.l.b16 %v1595
        %v1692 = vunpack.c.l.b16 %v1596
        %v1693 = vunpack.c.l.b16 %v1597
        %v1694 = vunpack.c.l.b16 %v1598
        %v1695 = vunpack.c.l.b16 %v1599
        %v1696 = vunpack.c.l.b16 %v1600
        %v1697 = vunpack.c.l.b16 %v1601
        %v1698 = vunpack.c.l.b16 %v1602
        %v1699 = vunpack.c.l.b16 %v1603
        %v1700 = vunpack.c.l.b16 %v1604
        %v1701 = vunpack.c.l.b16 %v1605
        %v1702 = vunpack.c.l.b16 %v1606
        %v1703 = vunpack.c.l.b16 %v1607
        %v1704 = vunpack.c.l.b16 %v1608
        %v1705 = vunpack.c.l.b16 %v1609
        %v1706 = vunpack.c.l.b16 %v1610
        %v1707 = vunpack.c.l.b16 %v1611
        %v1708 = vunpack.c.l.b16 %v1612
        %v1709 = vunpack.c.l.b16 %v1613
        %v1710 = vunpack.c.l.b16 %v1614
        %v1711 = vunpack.c.l.b16 %v1615
        %v1712 = vunpack.c.l.b16 %v1616
        %v1713 = vunpack.c.l.b16 %v1617
        %v1714 = vunpack.c.l.b16 %v1618
        %v1715 = vunpack.c.l.b16 %v1619
        %v1716 = vunpack.c.l.b16 %v1620
        %v1717 = vunpack.c.l.b16 %v1621
        %v1718 = vunpack.c.l.b16 %v1622
        %v1719 = vunpack.c.l.b16 %v1623
        %v1720 = vunpack.c.l.b16 %v1624
        %v1721 = vunpack.c.l.b16 %v1625
        %v1722 = vunpack.c.l.b16 %v1626
        %v1723 = vunpack.c.l.b16 %v1627
        %v1724 = vunpack.c.l.b16 %v1628
        %v1725 = vunpack.c.l.b16 %v1629
        %v1726 = vunpack.c.l.b16 %v1630
        %v1727 = vunpack.c.l.b16 %v1631
        %v1728 = vunpack.c.l.b16 %v1632
        %v1729 = vunpack.c.l.b16 %v1633
        %v1730 = vunpack.c.l.b16 %v1634
        %v1731 = vunpack.c.l.b16 %v1635
        %v1732 = vunpack.c.l.b16 %v1636
        %v1733 = vunpack.c.l.b16 %v1637
        %v1734 = vunpack.c.l.b16 %v1638
        %v1735 = vpack.c.b16 %v1688, %v1687
        %v1736 = vpack.c.b16 %v1690, %v1689
        %v1737 = vpack.c.b16 %v1692, %v1691
        %v1738 = vpack.c.b16 %v1694, %v1693
        %v1739 = vpack.c.b16 %v1696, %v1695
        %v1740 = vpack.c.b16 %v1698, %v1697
        %v1741 = vpack.c.b16 %v1700, %v1699
        %v1742 = vpack.c.b16 %v1702, %v1701
        %v1743 = vpack.c.b16 %v1704, %v1703
        %v1744 = vpack.c.b16 %v1706, %v1705
        %v1745 = vpack.c.b16 %v1708, %v1707
        %v1746 = vpack.c.b16 %v1710, %v1709
        %v1747 = vpack.c.b16 %v1712, %v1711
        %v1748 = vpack.c.b16 %v1714, %v1713
        %v1749 = vpack.c.b16 %v1716, %v1715
        %v1750 = vpack.c.b16 %v1718, %v1717
        %v1751 = vpack.c.b16 %v1720, %v1719
        %v1752 = vpack.c.b16 %v1722, %v1721
        %v1753 = vpack.c.b16 %v1724, %v1723
        %v1754 = vpack.c.b16 %v1726, %v1725
        %v1755 = vpack.c.b16 %v1728, %v1727
        %v1756 = vpack.c.b16 %v1730, %v1729
        %v1757 = vpack.c.b16 %v1732, %v1731
        %v1758 = vpack.c.b16 %v1734, %v1733
        %1783 = vmatprep.subr.bf16.mxu0 0
        %1784 = vmatpush1.bf16.msra.mxu0 %v1735
        %1785 = vmatprep.subr.bf16.mxu0 0
        %1786 = vmatpush1.bf16.msra.mxu0 %v1736
        %1787 = vmatprep.subr.bf16.mxu0 0
        %1788 = vmatpush1.bf16.msra.mxu0 %v1737
        %1789 = vmatprep.subr.bf16.mxu0 0
        %1790 = vmatpush1.bf16.msra.mxu0 %v1738
        %1791 = vmatprep.subr.bf16.mxu0 0
        %1792 = vmatpush1.bf16.msra.mxu0 %v1739
        %1793 = vmatprep.subr.bf16.mxu0 0
        %1794 = vmatpush1.bf16.msra.mxu0 %v1740
        %1795 = vmatprep.subr.bf16.mxu0 0
        %1796 = vmatpush1.bf16.msra.mxu0 %v1741
        %1797 = vmatprep.subr.bf16.mxu0 0
        %1798 = vmatpush1.bf16.msra.mxu0 %v1742
        %1799 = vmatprep.subr.bf16.mxu0 0
        %1800 = vmatpush1.bf16.msra.mxu0 %v1743
        %1801 = vmatprep.subr.bf16.mxu0 0
        %1802 = vmatpush1.bf16.msra.mxu0 %v1744
        %1803 = vmatprep.subr.bf16.mxu0 0
        %1804 = vmatpush1.bf16.msra.mxu0 %v1745
        %1805 = vmatprep.subr.bf16.mxu0 0
        %1806 = vmatpush1.bf16.msra.mxu0 %v1746
        %1807 = vmatprep.subr.bf16.mxu0 0
        %1808 = vmatpush1.bf16.msra.mxu0 %v1747
        %1809 = vmatprep.subr.bf16.mxu0 0
        %1810 = vmatpush1.bf16.msra.mxu0 %v1748
        %1811 = vmatprep.subr.bf16.mxu0 0
        %1812 = vmatpush1.bf16.msra.mxu0 %v1749
        %1813 = vmatprep.subr.bf16.mxu0 0
        %1814 = vmatpush1.bf16.msra.mxu0 %v1750
        %1815 = vmatprep.mubr.bf16.mxu0 %v1495
        %1816 = vmatmul.mubr.bf16.gmra.mrb[0].mxu0 %v1494
        %v1817 = vpop.f32.mrb[0].mxu0
        %v1818 = vadd.f32 0.0, %v1817
        %v1819 = vpop.f32.mrb[0].mxu0
        %v1820 = vpop.f32.mrb[0].mxu0
        %v1821 = vadd.f32 0.0, %v1820
        %v1822 = vpop.f32.mrb[0].mxu0
        %1823 = vmatprep.mubr.bf16.mxu0 %v1498
        %1824 = vmatmul.mubr.bf16.gmra.mrb[0].mxu0 %v1497
        %v1825 = vpop.f32.mrb[0].mxu0
        %v1826 = vadd.f32 0.0, %v1825
        %v1827 = vpop.f32.mrb[0].mxu0
        %v1828 = vpop.f32.mrb[0].mxu0
        %v1829 = vadd.f32 0.0, %v1828
        %v1830 = vpop.f32.mrb[0].mxu0
        %1831 = vmatprep.mubr.bf16.mxu0 %v1501
        %1832 = vmatmul.mubr.bf16.gmra.mrb[0].mxu0 %v1500
        %v1833 = vpop.f32.mrb[0].mxu0
        %v1834 = vadd.f32 0.0, %v1833
        %v1835 = vpop.f32.mrb[0].mxu0
        %v1836 = vpop.f32.mrb[0].mxu0
        %v1837 = vadd.f32 0.0, %v1836
        %v1838 = vpop.f32.mrb[0].mxu0
        %1839 = vmatprep.mubr.bf16.mxu0 %v1504
        %1840 = vmatmul.mubr.bf16.gmra.mrb[0].mxu0 %v1503
        %v1841 = vpop.f32.mrb[0].mxu0
        %v1842 = vadd.f32 0.0, %v1841
        %v1843 = vpop.f32.mrb[0].mxu0
        %v1844 = vpop.f32.mrb[0].mxu0
        %v1845 = vadd.f32 0.0, %v1844
        %v1846 = vpop.f32.mrb[0].mxu0
        %1847 = vmatprep.mubr.bf16.mxu0 %v1507
        %1848 = vmatmul.mubr.bf16.gmra.mrb[0].mxu0 %v1506
        %v1849 = vpop.f32.mrb[0].mxu0
        %v1850 = vadd.f32 0.0, %v1849
        %v1851 = vpop.f32.mrb[0].mxu0
        %v1852 = vpop.f32.mrb[0].mxu0
        %v1853 = vadd.f32 0.0, %v1852
        %v1854 = vpop.f32.mrb[0].mxu0
        %1855 = vmatprep.mubr.bf16.mxu0 %v1510
        %1856 = vmatmul.mubr.bf16.gmra.mrb[0].mxu0 %v1509
        %v1857 = vpop.f32.mrb[0].mxu0
        %v1858 = vadd.f32 0.0, %v1857
        %v1859 = vpop.f32.mrb[0].mxu0
        %v1860 = vpop.f32.mrb[0].mxu0
        %v1861 = vadd.f32 0.0, %v1860
        %v1862 = vpop.f32.mrb[0].mxu0
        %1863 = vmatprep.mubr.bf16.mxu0 %v1513
        %1864 = vmatmul.mubr.bf16.gmra.mrb[0].mxu0 %v1512
        %v1865 = vpop.f32.mrb[0].mxu0
        %v1866 = vadd.f32 0.0, %v1865
        %v1867 = vpop.f32.mrb[0].mxu0
        %v1868 = vpop.f32.mrb[0].mxu0
        %v1869 = vadd.f32 0.0, %v1868
        %v1870 = vpop.f32.mrb[0].mxu0
        %1871 = vmatprep.mubr.bf16.mxu0 %v1516
        %1872 = vmatmul.mubr.bf16.gmra.mrb[0].mxu0 %v1515
        %v1873 = vpop.f32.mrb[0].mxu0
        %v1874 = vadd.f32 0.0, %v1873
        %v1875 = vpop.f32.mrb[0].mxu0
        %v1876 = vpop.f32.mrb[0].mxu0
        %v1877 = vadd.f32 0.0, %v1876
        %v1878 = vpop.f32.mrb[0].mxu0
        %1879 = vmatprep.mubr.bf16.mxu0 %v1519
        %1880 = vmatmul.mubr.bf16.gmra.mrb[0].mxu0 %v1518
        %v1881 = vpop.f32.mrb[0].mxu0
        %v1882 = vadd.f32 0.0, %v1881
        %v1883 = vpop.f32.mrb[0].mxu0
        %v1884 = vpop.f32.mrb[0].mxu0
        %v1885 = vadd.f32 0.0, %v1884
        %v1886 = vpop.f32.mrb[0].mxu0
        %1887 = vmatprep.mubr.bf16.mxu0 %v1522
        %1888 = vmatmul.mubr.bf16.gmra.mrb[0].mxu0 %v1521
        %v1889 = vpop.f32.mrb[0].mxu0
        %v1890 = vadd.f32 0.0, %v1889
        %v1891 = vpop.f32.mrb[0].mxu0
        %v1892 = vpop.f32.mrb[0].mxu0
        %v1893 = vadd.f32 0.0, %v1892
        %v1894 = vpop.f32.mrb[0].mxu0
        %1895 = vmatprep.mubr.bf16.mxu0 %v1525
        %1896 = vmatmul.mubr.bf16.gmra.mrb[0].mxu0 %v1524
        %v1897 = vpop.f32.mrb[0].mxu0
        %v1898 = vadd.f32 0.0, %v1897
        %v1899 = vpop.f32.mrb[0].mxu0
        %v1900 = vpop.f32.mrb[0].mxu0
        %v1901 = vadd.f32 0.0, %v1900
        %v1902 = vpop.f32.mrb[0].mxu0
        %1903 = vmatprep.mubr.bf16.mxu0 %v1528
        %1904 = vmatmul.mubr.bf16.gmra.mrb[0].mxu0 %v1527
        %v1905 = vpop.f32.mrb[0].mxu0
        %v1906 = vadd.f32 0.0, %v1905
        %v1907 = vpop.f32.mrb[0].mxu0
        %v1908 = vpop.f32.mrb[0].mxu0
        %v1909 = vadd.f32 0.0, %v1908
        %v1910 = vpop.f32.mrb[0].mxu0
        %1911 = vmatprep.mubr.bf16.mxu0 %v1531
        %1912 = vmatmul.mubr.bf16.gmra.mrb[0].mxu0 %v1530
        %v1913 = vpop.f32.mrb[0].mxu0
        %v1914 = vadd.f32 0.0, %v1913
        %v1915 = vpop.f32.mrb[0].mxu0
        %v1916 = vpop.f32.mrb[0].mxu0
        %v1917 = vadd.f32 0.0, %v1916
        %v1918 = vpop.f32.mrb[0].mxu0
        %1919 = vmatprep.mubr.bf16.mxu0 %v1534
        %1920 = vmatmul.mubr.bf16.gmra.mrb[0].mxu0 %v1533
        %v1921 = vpop.f32.mrb[0].mxu0
        %v1922 = vadd.f32 0.0, %v1921
        %v1923 = vpop.f32.mrb[0].mxu0
        %v1924 = vpop.f32.mrb[0].mxu0
        %v1925 = vadd.f32 0.0, %v1924
        %v1926 = vpop.f32.mrb[0].mxu0
        %1927 = vmatprep.mubr.bf16.mxu0 %v1537
        %1928 = vmatmul.mubr.bf16.gmra.mrb[0].mxu0 %v1536
        %v1929 = vpop.f32.mrb[0].mxu0
        %v1930 = vadd.f32 0.0, %v1929
        %v1931 = vpop.f32.mrb[0].mxu0
        %v1932 = vpop.f32.mrb[0].mxu0
        %v1933 = vadd.f32 0.0, %v1932
        %v1934 = vpop.f32.mrb[0].mxu0
        %1935 = vmatprep.mubr.bf16.mxu0 %v1588
        %1936 = vmatmul.mubr.bf16.gmra.mrb[0].mxu0 %v1587
        %v1937 = vpop.f32.mrb[0].mxu0
        %v1938 = vadd.f32 0.0, %v1937
        %v1939 = vpop.f32.mrb[0].mxu0
        %v1940 = vpop.f32.mrb[0].mxu0
        %v1941 = vadd.f32 0.0, %v1940
        %v1942 = vpop.f32.mrb[0].mxu0
        %1943 = vdwg.mxu0
        %1944 = vmatprep.subr.bf16.mxu0 0
        %1945 = vmatpush1.bf16.msra.mxu0 %v1751
        %1946 = vmatprep.subr.bf16.mxu0 0
        %1947 = vmatpush1.bf16.msra.mxu0 %v1752
        %1948 = vmatprep.subr.bf16.mxu0 0
        %1949 = vmatpush1.bf16.msra.mxu0 %v1753
        %1950 = vmatprep.subr.bf16.mxu0 0
        %1951 = vmatpush1.bf16.msra.mxu0 %v1754
        %1952 = vmatprep.subr.bf16.mxu0 0
        %1953 = vmatpush1.bf16.msra.mxu0 %v1755
        %1954 = vmatprep.subr.bf16.mxu0 0
        %1955 = vmatpush1.bf16.msra.mxu0 %v1756
        %1956 = vmatprep.subr.bf16.mxu0 0
        %1957 = vmatpush1.bf16.msra.mxu0 %v1757
        %1958 = vmatprep.subr.bf16.mxu0 0
        %1959 = vmatpush1.bf16.msra.mxu0 %v1758
        %1960 = vmatprep.subr.bf16.mxu0 0
        %1961 = vmatpush1.bf16.msra.mxu0 0
        %1962 = vmatprep.subr.bf16.mxu0 0
        %1963 = vmatpush1.bf16.msra.mxu0 0
        %1964 = vmatprep.subr.bf16.mxu0 0
        %1965 = vmatpush1.bf16.msra.mxu0 0
        %1966 = vmatprep.subr.bf16.mxu0 0
        %1967 = vmatpush1.bf16.msra.mxu0 0
        %1968 = vmatprep.subr.bf16.mxu0 0
        %1969 = vmatpush1.bf16.msra.mxu0 0
        %1970 = vmatprep.subr.bf16.mxu0 0
        %1971 = vmatpush1.bf16.msra.mxu0 0
        %1972 = vmatprep.subr.bf16.mxu0 0
        %1973 = vmatpush1.bf16.msra.mxu0 0
        %1974 = vmatprep.subr.bf16.mxu0 0
        %1975 = vmatpush1.bf16.msra.mxu0 0
        %1976 = vmatprep.mubr.bf16.mxu0 0
        %1977 = vmatmul.mubr.bf16.gmra.mrb[0].mxu0 %v1496
        %v1978 = vpop.f32.mrb[0].mxu0
        %v1979 = vadd.f32 %v1818, %v1978
        %v1980 = vpop.f32.mrb[0].mxu0
        %v1981 = vpop.f32.mrb[0].mxu0
        %v1982 = vadd.f32 %v1821, %v1981
        %v1983 = vpop.f32.mrb[0].mxu0
        %1984 = vmatprep.mubr.bf16.mxu0 0
        %1985 = vmatmul.mubr.bf16.gmra.mrb[0].mxu0 %v1499
        %v1986 = vpop.f32.mrb[0].mxu0
        %v1987 = vadd.f32 %v1826, %v1986
        %v1988 = vpop.f32.mrb[0].mxu0
        %v1989 = vpop.f32.mrb[0].mxu0
        %v1990 = vadd.f32 %v1829, %v1989
        %v1991 = vpop.f32.mrb[0].mxu0
        %1992 = vmatprep.mubr.bf16.mxu0 0
        %1993 = vmatmul.mubr.bf16.gmra.mrb[0].mxu0 %v1502
        %v1994 = vpop.f32.mrb[0].mxu0
        %v1995 = vadd.f32 %v1834, %v1994
        %v1996 = vpop.f32.mrb[0].mxu0
        %v1997 = vpop.f32.mrb[0].mxu0
        %v1998 = vadd.f32 %v1837, %v1997
        %v1999 = vpop.f32.mrb[0].mxu0
        %2000 = vmatprep.mubr.bf16.mxu0 0
        %2001 = vmatmul.mubr.bf16.gmra.mrb[0].mxu0 %v1505
        %v2002 = vpop.f32.mrb[0].mxu0
        %v2003 = vadd.f32 %v1842, %v2002
        %v2004 = vpop.f32.mrb[0].mxu0
        %v2005 = vpop.f32.mrb[0].mxu0
        %v2006 = vadd.f32 %v1845, %v2005
        %v2007 = vpop.f32.mrb[0].mxu0
        %2008 = vmatprep.mubr.bf16.mxu0 0
        %2009 = vmatmul.mubr.bf16.gmra.mrb[0].mxu0 %v1508
        %v2010 = vpop.f32.mrb[0].mxu0
        %v2011 = vadd.f32 %v1850, %v2010
        %v2012 = vpop.f32.mrb[0].mxu0
        %v2013 = vpop.f32.mrb[0].mxu0
        %v2014 = vadd.f32 %v1853, %v2013
        %v2015 = vpop.f32.mrb[0].mxu0
        %2016 = vmatprep.mubr.bf16.mxu0 0
        %2017 = vmatmul.mubr.bf16.gmra.mrb[0].mxu0 %v1511
        %v2018 = vpop.f32.mrb[0].mxu0
        %v2019 = vadd.f32 %v1858, %v2018
        %v2020 = vpop.f32.mrb[0].mxu0
        %v2021 = vpop.f32.mrb[0].mxu0
        %v2022 = vadd.f32 %v1861, %v2021
        %v2023 = vpop.f32.mrb[0].mxu0
        %2024 = vmatprep.mubr.bf16.mxu0 0
        %2025 = vmatmul.mubr.bf16.gmra.mrb[0].mxu0 %v1514
        %v2026 = vpop.f32.mrb[0].mxu0
        %v2027 = vadd.f32 %v1866, %v2026
        %v2028 = vpop.f32.mrb[0].mxu0
        %v2029 = vpop.f32.mrb[0].mxu0
        %v2030 = vadd.f32 %v1869, %v2029
        %v2031 = vpop.f32.mrb[0].mxu0
        %2032 = vmatprep.mubr.bf16.mxu0 0
        %2033 = vmatmul.mubr.bf16.gmra.mrb[0].mxu0 %v1517
        %v2034 = vpop.f32.mrb[0].mxu0
        %v2035 = vadd.f32 %v1874, %v2034
        %v2036 = vpop.f32.mrb[0].mxu0
        %v2037 = vpop.f32.mrb[0].mxu0
        %v2038 = vadd.f32 %v1877, %v2037
        %v2039 = vpop.f32.mrb[0].mxu0
        %2040 = vmatprep.mubr.bf16.mxu0 0
        %2041 = vmatmul.mubr.bf16.gmra.mrb[0].mxu0 %v1520
        %v2042 = vpop.f32.mrb[0].mxu0
        %v2043 = vadd.f32 %v1882, %v2042
        %v2044 = vpop.f32.mrb[0].mxu0
        %v2045 = vpop.f32.mrb[0].mxu0
        %v2046 = vadd.f32 %v1885, %v2045
        %v2047 = vpop.f32.mrb[0].mxu0
        %2048 = vmatprep.mubr.bf16.mxu0 0
        %2049 = vmatmul.mubr.bf16.gmra.mrb[0].mxu0 %v1523
        %v2050 = vpop.f32.mrb[0].mxu0
        %v2051 = vadd.f32 %v1890, %v2050
        %v2052 = vpop.f32.mrb[0].mxu0
        %v2053 = vpop.f32.mrb[0].mxu0
        %v2054 = vadd.f32 %v1893, %v2053
        %v2055 = vpop.f32.mrb[0].mxu0
        %2056 = vmatprep.mubr.bf16.mxu0 0
        %2057 = vmatmul.mubr.bf16.gmra.mrb[0].mxu0 %v1526
        %v2058 = vpop.f32.mrb[0].mxu0
        %v2059 = vadd.f32 %v1898, %v2058
        %v2060 = vpop.f32.mrb[0].mxu0
        %v2061 = vpop.f32.mrb[0].mxu0
        %v2062 = vadd.f32 %v1901, %v2061
        %v2063 = vpop.f32.mrb[0].mxu0
        %2064 = vmatprep.mubr.bf16.mxu0 0
        %2065 = vmatmul.mubr.bf16.gmra.mrb[0].mxu0 %v1529
        %v2066 = vpop.f32.mrb[0].mxu0
        %v2067 = vadd.f32 %v1906, %v2066
        %v2068 = vpop.f32.mrb[0].mxu0
        %v2069 = vpop.f32.mrb[0].mxu0
        %v2070 = vadd.f32 %v1909, %v2069
        %v2071 = vpop.f32.mrb[0].mxu0
        %2072 = vmatprep.mubr.bf16.mxu0 0
        %2073 = vmatmul.mubr.bf16.gmra.mrb[0].mxu0 %v1532
        %v2074 = vpop.f32.mrb[0].mxu0
        %v2075 = vadd.f32 %v1914, %v2074
        %v2076 = vpop.f32.mrb[0].mxu0
        %v2077 = vpop.f32.mrb[0].mxu0
        %v2078 = vadd.f32 %v1917, %v2077
        %v2079 = vpop.f32.mrb[0].mxu0
        %2080 = vmatprep.mubr.bf16.mxu0 0
        %2081 = vmatmul.mubr.bf16.gmra.mrb[0].mxu0 %v1535
        %v2082 = vpop.f32.mrb[0].mxu0
        %v2083 = vadd.f32 %v1922, %v2082
        %v2084 = vpop.f32.mrb[0].mxu0
        %v2085 = vpop.f32.mrb[0].mxu0
        %v2086 = vadd.f32 %v1925, %v2085
        %v2087 = vpop.f32.mrb[0].mxu0
        %2088 = vmatprep.mubr.bf16.mxu0 0
        %2089 = vmatmul.mubr.bf16.gmra.mrb[0].mxu0 %v1538
        %v2090 = vpop.f32.mrb[0].mxu0
        %v2091 = vadd.f32 %v1930, %v2090
        %v2092 = vpop.f32.mrb[0].mxu0
        %v2093 = vpop.f32.mrb[0].mxu0
        %v2094 = vadd.f32 %v1933, %v2093
        %v2095 = vpop.f32.mrb[0].mxu0
        %2096 = vmatprep.mubr.bf16.mxu0 0
        %2097 = vmatmul.mubr.bf16.gmra.mrb[0].mxu0 %v1589
        %v2098 = vpop.f32.mrb[0].mxu0
        %v2099 = vadd.f32 %v1938, %v2098
        %v2100 = vpop.f32.mrb[0].mxu0
        %v2101 = vpop.f32.mrb[0].mxu0
        %v2102 = vadd.f32 %v1941, %v2101
        %v2103 = vpop.f32.mrb[0].mxu0
        %2104 = vdwg.mxu0
        %v2153 = vunpack.c.l.b16 %v1539
        %v2154 = vunpack.c.l.b16 %v1540
        %v2155 = vunpack.c.l.b16 %v1541
        %v2156 = vunpack.c.l.b16 %v1542
        %v2157 = vunpack.c.l.b16 %v1543
        %v2158 = vunpack.c.l.b16 %v1544
        %v2159 = vunpack.c.l.b16 %v1545
        %v2160 = vunpack.c.l.b16 %v1546
        %v2161 = vunpack.c.l.b16 %v1547
        %v2162 = vunpack.c.l.b16 %v1548
        %v2163 = vunpack.c.l.b16 %v1549
        %v2164 = vunpack.c.l.b16 %v1550
        %v2165 = vunpack.c.l.b16 %v1551
        %v2166 = vunpack.c.l.b16 %v1552
        %v2167 = vunpack.c.l.b16 %v1553
        %v2168 = vunpack.c.l.b16 %v1554
        %v2169 = vunpack.c.l.b16 %v1555
        %v2170 = vunpack.c.l.b16 %v1556
        %v2171 = vunpack.c.l.b16 %v1557
        %v2172 = vunpack.c.l.b16 %v1558
        %v2173 = vunpack.c.l.b16 %v1559
        %v2174 = vunpack.c.l.b16 %v1560
        %v2175 = vunpack.c.l.b16 %v1561
        %v2176 = vunpack.c.l.b16 %v1562
        %v2177 = vunpack.c.l.b16 %v1563
        %v2178 = vunpack.c.l.b16 %v1564
        %v2179 = vunpack.c.l.b16 %v1565
        %v2180 = vunpack.c.l.b16 %v1566
        %v2181 = vunpack.c.l.b16 %v1567
        %v2182 = vunpack.c.l.b16 %v1568
        %v2183 = vunpack.c.l.b16 %v1569
        %v2184 = vunpack.c.l.b16 %v1570
        %v2185 = vunpack.c.l.b16 %v1571
        %v2186 = vunpack.c.l.b16 %v1572
        %v2187 = vunpack.c.l.b16 %v1573
        %v2188 = vunpack.c.l.b16 %v1574
        %v2189 = vunpack.c.l.b16 %v1575
        %v2190 = vunpack.c.l.b16 %v1576
        %v2191 = vunpack.c.l.b16 %v1577
        %v2192 = vunpack.c.l.b16 %v1578
        %v2193 = vunpack.c.l.b16 %v1579
        %v2194 = vunpack.c.l.b16 %v1580
        %v2195 = vunpack.c.l.b16 %v1581
        %v2196 = vunpack.c.l.b16 %v1582
        %v2197 = vunpack.c.l.b16 %v1583
        %v2198 = vunpack.c.l.b16 %v1584
        %v2199 = vunpack.c.l.b16 %v1585
        %v2200 = vunpack.c.l.b16 %v1586
        %v2201 = vpack.c.b16 %v2154, %v2153
        %v2202 = vpack.c.b16 %v2156, %v2155
        %v2203 = vpack.c.b16 %v2158, %v2157
        %v2204 = vpack.c.b16 %v2160, %v2159
        %v2205 = vpack.c.b16 %v2162, %v2161
        %v2206 = vpack.c.b16 %v2164, %v2163
        %v2207 = vpack.c.b16 %v2166, %v2165
        %v2208 = vpack.c.b16 %v2168, %v2167
        %v2209 = vpack.c.b16 %v2170, %v2169
        %v2210 = vpack.c.b16 %v2172, %v2171
        %v2211 = vpack.c.b16 %v2174, %v2173
        %v2212 = vpack.c.b16 %v2176, %v2175
        %v2213 = vpack.c.b16 %v2178, %v2177
        %v2214 = vpack.c.b16 %v2180, %v2179
        %v2215 = vpack.c.b16 %v2182, %v2181
        %v2216 = vpack.c.b16 %v2184, %v2183
        %v2217 = vpack.c.b16 %v2186, %v2185
        %v2218 = vpack.c.b16 %v2188, %v2187
        %v2219 = vpack.c.b16 %v2190, %v2189
        %v2220 = vpack.c.b16 %v2192, %v2191
        %v2221 = vpack.c.b16 %v2194, %v2193
        %v2222 = vpack.c.b16 %v2196, %v2195
        %v2223 = vpack.c.b16 %v2198, %v2197
        %v2224 = vpack.c.b16 %v2200, %v2199
        %2249 = vmatprep.subr.bf16.mxu0 0
        %2250 = vmatpush1.bf16.msra.mxu0 %v2201
        %2251 = vmatprep.subr.bf16.mxu0 0
        %2252 = vmatpush1.bf16.msra.mxu0 %v2202
        %2253 = vmatprep.subr.bf16.mxu0 0
        %2254 = vmatpush1.bf16.msra.mxu0 %v2203
        %2255 = vmatprep.subr.bf16.mxu0 0
        %2256 = vmatpush1.bf16.msra.mxu0 %v2204
        %2257 = vmatprep.subr.bf16.mxu0 0
        %2258 = vmatpush1.bf16.msra.mxu0 %v2205
        %2259 = vmatprep.subr.bf16.mxu0 0
        %2260 = vmatpush1.bf16.msra.mxu0 %v2206
        %2261 = vmatprep.subr.bf16.mxu0 0
        %2262 = vmatpush1.bf16.msra.mxu0 %v2207
        %2263 = vmatprep.subr.bf16.mxu0 0
        %2264 = vmatpush1.bf16.msra.mxu0 %v2208
        %2265 = vmatprep.subr.bf16.mxu0 0
        %2266 = vmatpush1.bf16.msra.mxu0 %v2209
        %2267 = vmatprep.subr.bf16.mxu0 0
        %2268 = vmatpush1.bf16.msra.mxu0 %v2210
        %2269 = vmatprep.subr.bf16.mxu0 0
        %2270 = vmatpush1.bf16.msra.mxu0 %v2211
        %2271 = vmatprep.subr.bf16.mxu0 0
        %2272 = vmatpush1.bf16.msra.mxu0 %v2212
        %2273 = vmatprep.subr.bf16.mxu0 0
        %2274 = vmatpush1.bf16.msra.mxu0 %v2213
        %2275 = vmatprep.subr.bf16.mxu0 0
        %2276 = vmatpush1.bf16.msra.mxu0 %v2214
        %2277 = vmatprep.subr.bf16.mxu0 0
        %2278 = vmatpush1.bf16.msra.mxu0 %v2215
        %2279 = vmatprep.subr.bf16.mxu0 0
        %2280 = vmatpush1.bf16.msra.mxu0 %v2216
        %2281 = vmatprep.mubr.bf16.mxu0 %v1492
        %2282 = vmatmul.mubr.bf16.gmra.mrb[0].mxu0 %v1491
        %v2283 = vpop.f32.mrb[0].mxu0
        %v2284 = vadd.f32 %v1979, %v2283
        %v2285 = vpop.f32.mrb[0].mxu0
        %v2286 = vpop.f32.mrb[0].mxu0
        %v2287 = vadd.f32 %v1982, %v2286
        %v2288 = vpop.f32.mrb[0].mxu0
        %2289 = vmatprep.mubr.bf16.mxu0 %v1495
        %2290 = vmatmul.mubr.bf16.gmra.mrb[0].mxu0 %v1494
        %v2291 = vpop.f32.mrb[0].mxu0
        %v2292 = vadd.f32 %v1987, %v2291
        %v2293 = vpop.f32.mrb[0].mxu0
        %v2294 = vpop.f32.mrb[0].mxu0
        %v2295 = vadd.f32 %v1990, %v2294
        %v2296 = vpop.f32.mrb[0].mxu0
        %2297 = vmatprep.mubr.bf16.mxu0 %v1498
        %2298 = vmatmul.mubr.bf16.gmra.mrb[0].mxu0 %v1497
        %v2299 = vpop.f32.mrb[0].mxu0
        %v2300 = vadd.f32 %v1995, %v2299
        %v2301 = vpop.f32.mrb[0].mxu0
        %v2302 = vpop.f32.mrb[0].mxu0
        %v2303 = vadd.f32 %v1998, %v2302
        %v2304 = vpop.f32.mrb[0].mxu0
        %2305 = vmatprep.mubr.bf16.mxu0 %v1501
        %2306 = vmatmul.mubr.bf16.gmra.mrb[0].mxu0 %v1500
        %v2307 = vpop.f32.mrb[0].mxu0
        %v2308 = vadd.f32 %v2003, %v2307
        %v2309 = vpop.f32.mrb[0].mxu0
        %v2310 = vpop.f32.mrb[0].mxu0
        %v2311 = vadd.f32 %v2006, %v2310
        %v2312 = vpop.f32.mrb[0].mxu0
        %2313 = vmatprep.mubr.bf16.mxu0 %v1504
        %2314 = vmatmul.mubr.bf16.gmra.mrb[0].mxu0 %v1503
        %v2315 = vpop.f32.mrb[0].mxu0
        %v2316 = vadd.f32 %v2011, %v2315
        %v2317 = vpop.f32.mrb[0].mxu0
        %v2318 = vpop.f32.mrb[0].mxu0
        %v2319 = vadd.f32 %v2014, %v2318
        %v2320 = vpop.f32.mrb[0].mxu0
        %2321 = vmatprep.mubr.bf16.mxu0 %v1507
        %2322 = vmatmul.mubr.bf16.gmra.mrb[0].mxu0 %v1506
        %v2323 = vpop.f32.mrb[0].mxu0
        %v2324 = vadd.f32 %v2019, %v2323
        %v2325 = vpop.f32.mrb[0].mxu0
        %v2326 = vpop.f32.mrb[0].mxu0
        %v2327 = vadd.f32 %v2022, %v2326
        %v2328 = vpop.f32.mrb[0].mxu0
        %2329 = vmatprep.mubr.bf16.mxu0 %v1510
        %2330 = vmatmul.mubr.bf16.gmra.mrb[0].mxu0 %v1509
        %v2331 = vpop.f32.mrb[0].mxu0
        %v2332 = vadd.f32 %v2027, %v2331
        %v2333 = vpop.f32.mrb[0].mxu0
        %v2334 = vpop.f32.mrb[0].mxu0
        %v2335 = vadd.f32 %v2030, %v2334
        %v2336 = vpop.f32.mrb[0].mxu0
        %2337 = vmatprep.mubr.bf16.mxu0 %v1513
        %2338 = vmatmul.mubr.bf16.gmra.mrb[0].mxu0 %v1512
        %v2339 = vpop.f32.mrb[0].mxu0
        %v2340 = vadd.f32 %v2035, %v2339
        %v2341 = vpop.f32.mrb[0].mxu0
        %v2342 = vpop.f32.mrb[0].mxu0
        %v2343 = vadd.f32 %v2038, %v2342
        %v2344 = vpop.f32.mrb[0].mxu0
        %2345 = vmatprep.mubr.bf16.mxu0 %v1516
        %2346 = vmatmul.mubr.bf16.gmra.mrb[0].mxu0 %v1515
        %v2347 = vpop.f32.mrb[0].mxu0
        %v2348 = vadd.f32 %v2043, %v2347
        %v2349 = vpop.f32.mrb[0].mxu0
        %v2350 = vpop.f32.mrb[0].mxu0
        %v2351 = vadd.f32 %v2046, %v2350
        %v2352 = vpop.f32.mrb[0].mxu0
        %2353 = vmatprep.mubr.bf16.mxu0 %v1519
        %2354 = vmatmul.mubr.bf16.gmra.mrb[0].mxu0 %v1518
        %v2355 = vpop.f32.mrb[0].mxu0
        %v2356 = vadd.f32 %v2051, %v2355
        %v2357 = vpop.f32.mrb[0].mxu0
        %v2358 = vpop.f32.mrb[0].mxu0
        %v2359 = vadd.f32 %v2054, %v2358
        %v2360 = vpop.f32.mrb[0].mxu0
        %2361 = vmatprep.mubr.bf16.mxu0 %v1522
        %2362 = vmatmul.mubr.bf16.gmra.mrb[0].mxu0 %v1521
        %v2363 = vpop.f32.mrb[0].mxu0
        %v2364 = vadd.f32 %v2059, %v2363
        %v2365 = vpop.f32.mrb[0].mxu0
        %v2366 = vpop.f32.mrb[0].mxu0
        %v2367 = vadd.f32 %v2062, %v2366
        %v2368 = vpop.f32.mrb[0].mxu0
        %2369 = vmatprep.mubr.bf16.mxu0 %v1525
        %2370 = vmatmul.mubr.bf16.gmra.mrb[0].mxu0 %v1524
        %v2371 = vpop.f32.mrb[0].mxu0
        %v2372 = vadd.f32 %v2067, %v2371
        %v2373 = vpop.f32.mrb[0].mxu0
        %v2374 = vpop.f32.mrb[0].mxu0
        %v2375 = vadd.f32 %v2070, %v2374
        %v2376 = vpop.f32.mrb[0].mxu0
        %2377 = vmatprep.mubr.bf16.mxu0 %v1528
        %2378 = vmatmul.mubr.bf16.gmra.mrb[0].mxu0 %v1527
        %v2379 = vpop.f32.mrb[0].mxu0
        %v2380 = vadd.f32 %v2075, %v2379
        %v2381 = vpop.f32.mrb[0].mxu0
        %v2382 = vpop.f32.mrb[0].mxu0
        %v2383 = vadd.f32 %v2078, %v2382
        %v2384 = vpop.f32.mrb[0].mxu0
        %2385 = vmatprep.mubr.bf16.mxu0 %v1531
        %2386 = vmatmul.mubr.bf16.gmra.mrb[0].mxu0 %v1530
        %v2387 = vpop.f32.mrb[0].mxu0
        %v2388 = vadd.f32 %v2083, %v2387
        %v2389 = vpop.f32.mrb[0].mxu0
        %v2390 = vpop.f32.mrb[0].mxu0
        %v2391 = vadd.f32 %v2086, %v2390
        %v2392 = vpop.f32.mrb[0].mxu0
        %2393 = vmatprep.mubr.bf16.mxu0 %v1534
        %2394 = vmatmul.mubr.bf16.gmra.mrb[0].mxu0 %v1533
        %v2395 = vpop.f32.mrb[0].mxu0
        %v2396 = vadd.f32 %v2091, %v2395
        %v2397 = vpop.f32.mrb[0].mxu0
        %v2398 = vpop.f32.mrb[0].mxu0
        %v2399 = vadd.f32 %v2094, %v2398
        %v2400 = vpop.f32.mrb[0].mxu0
        %2401 = vmatprep.mubr.bf16.mxu0 %v1537
        %2402 = vmatmul.mubr.bf16.gmra.mrb[0].mxu0 %v1536
        %v2403 = vpop.f32.mrb[0].mxu0
        %v2404 = vadd.f32 %v2099, %v2403
        %v2405 = vpop.f32.mrb[0].mxu0
        %v2406 = vpop.f32.mrb[0].mxu0
        %v2407 = vadd.f32 %v2102, %v2406
        %v2408 = vpop.f32.mrb[0].mxu0
        %2409 = vdwg.mxu0
        %2410 = vmatprep.subr.bf16.mxu0 0
        %2411 = vmatpush1.bf16.msra.mxu0 %v2217
        %2412 = vmatprep.subr.bf16.mxu0 0
        %2413 = vmatpush1.bf16.msra.mxu0 %v2218
        %2414 = vmatprep.subr.bf16.mxu0 0
        %2415 = vmatpush1.bf16.msra.mxu0 %v2219
        %2416 = vmatprep.subr.bf16.mxu0 0
        %2417 = vmatpush1.bf16.msra.mxu0 %v2220
        %2418 = vmatprep.subr.bf16.mxu0 0
        %2419 = vmatpush1.bf16.msra.mxu0 %v2221
        %2420 = vmatprep.subr.bf16.mxu0 0
        %2421 = vmatpush1.bf16.msra.mxu0 %v2222
        %2422 = vmatprep.subr.bf16.mxu0 0
        %2423 = vmatpush1.bf16.msra.mxu0 %v2223
        %2424 = vmatprep.subr.bf16.mxu0 0
        %2425 = vmatpush1.bf16.msra.mxu0 %v2224
        %2426 = vmatprep.subr.bf16.mxu0 0
        %2427 = vmatpush1.bf16.msra.mxu0 0
        %2428 = vmatprep.subr.bf16.mxu0 0
        %2429 = vmatpush1.bf16.msra.mxu0 0
        %2430 = vmatprep.subr.bf16.mxu0 0
        %2431 = vmatpush1.bf16.msra.mxu0 0
        %2432 = vmatprep.subr.bf16.mxu0 0
        %2433 = vmatpush1.bf16.msra.mxu0 0
        %2434 = vmatprep.subr.bf16.mxu0 0
        %2435 = vmatpush1.bf16.msra.mxu0 0
        %2436 = vmatprep.subr.bf16.mxu0 0
        %2437 = vmatpush1.bf16.msra.mxu0 0
        %2438 = vmatprep.subr.bf16.mxu0 0
        %2439 = vmatpush1.bf16.msra.mxu0 0
        %2440 = vmatprep.subr.bf16.mxu0 0
        %2441 = vmatpush1.bf16.msra.mxu0 0
        %2442 = vmatprep.mubr.bf16.mxu0 0
        %2443 = vmatmul.mubr.bf16.gmra.mrb[0].mxu0 %v1493
        %v2444 = vpop.f32.mrb[0].mxu0
        %v2445 = vadd.f32 %v2284, %v2444
        %v2446 = vpop.f32.mrb[0].mxu0
        %v2447 = vpop.f32.mrb[0].mxu0
        %v2448 = vadd.f32 %v2287, %v2447
        %v2449 = vpop.f32.mrb[0].mxu0
        %2450 = vmatprep.mubr.bf16.mxu0 0
        %2451 = vmatmul.mubr.bf16.gmra.mrb[0].mxu0 %v1496
        %v2452 = vpop.f32.mrb[0].mxu0
        %v2453 = vadd.f32 %v2292, %v2452
        %v2454 = vpop.f32.mrb[0].mxu0
        %v2455 = vpop.f32.mrb[0].mxu0
        %v2456 = vadd.f32 %v2295, %v2455
        %v2457 = vpop.f32.mrb[0].mxu0
        %2458 = vmatprep.mubr.bf16.mxu0 0
        %2459 = vmatmul.mubr.bf16.gmra.mrb[0].mxu0 %v1499
        %v2460 = vpop.f32.mrb[0].mxu0
        %v2461 = vadd.f32 %v2300, %v2460
        %v2462 = vpop.f32.mrb[0].mxu0
        %v2463 = vpop.f32.mrb[0].mxu0
        %v2464 = vadd.f32 %v2303, %v2463
        %v2465 = vpop.f32.mrb[0].mxu0
        %2466 = vmatprep.mubr.bf16.mxu0 0
        %2467 = vmatmul.mubr.bf16.gmra.mrb[0].mxu0 %v1502
        %v2468 = vpop.f32.mrb[0].mxu0
        %v2469 = vadd.f32 %v2308, %v2468
        %v2470 = vpop.f32.mrb[0].mxu0
        %v2471 = vpop.f32.mrb[0].mxu0
        %v2472 = vadd.f32 %v2311, %v2471
        %v2473 = vpop.f32.mrb[0].mxu0
        %2474 = vmatprep.mubr.bf16.mxu0 0
        %2475 = vmatmul.mubr.bf16.gmra.mrb[0].mxu0 %v1505
        %v2476 = vpop.f32.mrb[0].mxu0
        %v2477 = vadd.f32 %v2316, %v2476
        %v2478 = vpop.f32.mrb[0].mxu0
        %v2479 = vpop.f32.mrb[0].mxu0
        %v2480 = vadd.f32 %v2319, %v2479
        %v2481 = vpop.f32.mrb[0].mxu0
        %2482 = vmatprep.mubr.bf16.mxu0 0
        %2483 = vmatmul.mubr.bf16.gmra.mrb[0].mxu0 %v1508
        %v2484 = vpop.f32.mrb[0].mxu0
        %v2485 = vadd.f32 %v2324, %v2484
        %v2486 = vpop.f32.mrb[0].mxu0
        %v2487 = vpop.f32.mrb[0].mxu0
        %v2488 = vadd.f32 %v2327, %v2487
        %v2489 = vpop.f32.mrb[0].mxu0
        %2490 = vmatprep.mubr.bf16.mxu0 0
        %2491 = vmatmul.mubr.bf16.gmra.mrb[0].mxu0 %v1511
        %v2492 = vpop.f32.mrb[0].mxu0
        %v2493 = vadd.f32 %v2332, %v2492
        %v2494 = vpop.f32.mrb[0].mxu0
        %v2495 = vpop.f32.mrb[0].mxu0
        %v2496 = vadd.f32 %v2335, %v2495
        %v2497 = vpop.f32.mrb[0].mxu0
        %2498 = vmatprep.mubr.bf16.mxu0 0
        %2499 = vmatmul.mubr.bf16.gmra.mrb[0].mxu0 %v1514
        %v2500 = vpop.f32.mrb[0].mxu0
        %v2501 = vadd.f32 %v2340, %v2500
        %v2502 = vpop.f32.mrb[0].mxu0
        %v2503 = vpop.f32.mrb[0].mxu0
        %v2504 = vadd.f32 %v2343, %v2503
        %v2505 = vpop.f32.mrb[0].mxu0
        %2506 = vmatprep.mubr.bf16.mxu0 0
        %2507 = vmatmul.mubr.bf16.gmra.mrb[0].mxu0 %v1517
        %v2508 = vpop.f32.mrb[0].mxu0
        %v2509 = vadd.f32 %v2348, %v2508
        %v2510 = vpop.f32.mrb[0].mxu0
        %v2511 = vpop.f32.mrb[0].mxu0
        %v2512 = vadd.f32 %v2351, %v2511
        %v2513 = vpop.f32.mrb[0].mxu0
        %2514 = vmatprep.mubr.bf16.mxu0 0
        %2515 = vmatmul.mubr.bf16.gmra.mrb[0].mxu0 %v1520
        %v2516 = vpop.f32.mrb[0].mxu0
        %v2517 = vadd.f32 %v2356, %v2516
        %v2518 = vpop.f32.mrb[0].mxu0
        %v2519 = vpop.f32.mrb[0].mxu0
        %v2520 = vadd.f32 %v2359, %v2519
        %v2521 = vpop.f32.mrb[0].mxu0
        %2522 = vmatprep.mubr.bf16.mxu0 0
        %2523 = vmatmul.mubr.bf16.gmra.mrb[0].mxu0 %v1523
        %v2524 = vpop.f32.mrb[0].mxu0
        %v2525 = vadd.f32 %v2364, %v2524
        %v2526 = vpop.f32.mrb[0].mxu0
        %v2527 = vpop.f32.mrb[0].mxu0
        %v2528 = vadd.f32 %v2367, %v2527
        %v2529 = vpop.f32.mrb[0].mxu0
        %2530 = vmatprep.mubr.bf16.mxu0 0
        %2531 = vmatmul.mubr.bf16.gmra.mrb[0].mxu0 %v1526
        %v2532 = vpop.f32.mrb[0].mxu0
        %v2533 = vadd.f32 %v2372, %v2532
        %v2534 = vpop.f32.mrb[0].mxu0
        %v2535 = vpop.f32.mrb[0].mxu0
        %v2536 = vadd.f32 %v2375, %v2535
        %v2537 = vpop.f32.mrb[0].mxu0
        %2538 = vmatprep.mubr.bf16.mxu0 0
        %2539 = vmatmul.mubr.bf16.gmra.mrb[0].mxu0 %v1529
        %v2540 = vpop.f32.mrb[0].mxu0
        %v2541 = vadd.f32 %v2380, %v2540
        %v2542 = vpop.f32.mrb[0].mxu0
        %v2543 = vpop.f32.mrb[0].mxu0
        %v2544 = vadd.f32 %v2383, %v2543
        %v2545 = vpop.f32.mrb[0].mxu0
        %2546 = vmatprep.mubr.bf16.mxu0 0
        %2547 = vmatmul.mubr.bf16.gmra.mrb[0].mxu0 %v1532
        %v2548 = vpop.f32.mrb[0].mxu0
        %v2549 = vadd.f32 %v2388, %v2548
        %v2550 = vpop.f32.mrb[0].mxu0
        %v2551 = vpop.f32.mrb[0].mxu0
        %v2552 = vadd.f32 %v2391, %v2551
        %v2553 = vpop.f32.mrb[0].mxu0
        %2554 = vmatprep.mubr.bf16.mxu0 0
        %2555 = vmatmul.mubr.bf16.gmra.mrb[0].mxu0 %v1535
        %v2556 = vpop.f32.mrb[0].mxu0
        %v2557 = vadd.f32 %v2396, %v2556
        %v2558 = vpop.f32.mrb[0].mxu0
        %v2559 = vpop.f32.mrb[0].mxu0
        %v2560 = vadd.f32 %v2399, %v2559
        %v2561 = vpop.f32.mrb[0].mxu0
        %2562 = vmatprep.mubr.bf16.mxu0 0
        %2563 = vmatmul.mubr.bf16.gmra.mrb[0].mxu0 %v1538
        %v2564 = vpop.f32.mrb[0].mxu0
        %v2565 = vadd.f32 %v2404, %v2564
        %v2566 = vpop.f32.mrb[0].mxu0
        %v2567 = vpop.f32.mrb[0].mxu0
        %v2568 = vadd.f32 %v2407, %v2567
        %v2569 = vpop.f32.mrb[0].mxu0
        %2570 = vdwg.mxu0
        %v2571 = vld [vmem:[#allocation2 + $0x30] sm:$0xff]
        %v2572 = vld [vmem:[#allocation2 + $0x38] sm:$0xff]
        %v2573 = vld [vmem:[#allocation2 + $0x40] sm:$0xff]
        %v2574 = vld [vmem:[#allocation2 + $0x48] sm:$0xff]
        %v2575 = vld [vmem:[#allocation2 + $0x50] sm:$0xff]
        %v2576 = vld [vmem:[#allocation2 + $0x58] sm:$0xff]
        %v2577 = vld [vmem:[#allocation2 + $0x60] sm:$0xff]
        %v2578 = vld [vmem:[#allocation2 + $0x68] sm:$0xff]
        %v2579 = vld [vmem:[#allocation2 + $0x70] sm:$0xff]
        %v2580 = vld [vmem:[#allocation2 + $0x78] sm:$0xff]
        %v2581 = vld [vmem:[#allocation2 + $0x80] sm:$0xff]
        %v2582 = vld [vmem:[#allocation2 + $0x88] sm:$0xff]
        %v2583 = vld [vmem:[#allocation2 + $0x90] sm:$0xff]
        %v2584 = vld [vmem:[#allocation2 + $0x98] sm:$0xff]
        %v2585 = vld [vmem:[#allocation2 + $0xa0] sm:$0xff]
        %v2586 = vld [vmem:[#allocation2 + $0xa8] sm:$0xff]
        %v2587 = vld [vmem:[#allocation2 + $0xb0] sm:$0xff]
        %v2588 = vld [vmem:[#allocation2 + $0xb8] sm:$0xff]
        %v2589 = vld [vmem:[#allocation2 + $0xc0] sm:$0xff]
        %v2590 = vld [vmem:[#allocation2 + $0xc8] sm:$0xff]
        %v2591 = vld [vmem:[#allocation2 + $0xd0] sm:$0xff]
        %v2592 = vld [vmem:[#allocation2 + $0xd8] sm:$0xff]
        %v2593 = vld [vmem:[#allocation2 + $0xe0] sm:$0xff]
        %v2594 = vld [vmem:[#allocation2 + $0xe8] sm:$0xff]
        %v2595 = vld [vmem:[#allocation2 + $0xf0] sm:$0xff]
        %v2596 = vld [vmem:[#allocation2 + $0xf8] sm:$0xff]
        %v2597 = vld [vmem:[#allocation2 + $0x100] sm:$0xff]
        %v2598 = vld [vmem:[#allocation2 + $0x108] sm:$0xff]
        %v2599 = vld [vmem:[#allocation2 + $0x110] sm:$0xff]
        %v2600 = vld [vmem:[#allocation2 + $0x118] sm:$0xff]
        %v2601 = vld [vmem:[#allocation2 + $0x120] sm:$0xff]
        %v2602 = vld [vmem:[#allocation2 + $0x128] sm:$0xff]
        %v2603 = vld [vmem:[#allocation2 + $0x130] sm:$0xff]
        %v2604 = vld [vmem:[#allocation2 + $0x138] sm:$0xff]
        %v2605 = vld [vmem:[#allocation2 + $0x140] sm:$0xff]
        %v2606 = vld [vmem:[#allocation2 + $0x148] sm:$0xff]
        %v2607 = vld [vmem:[#allocation2 + $0x150] sm:$0xff]
        %v2608 = vld [vmem:[#allocation2 + $0x158] sm:$0xff]
        %v2609 = vld [vmem:[#allocation2 + $0x160] sm:$0xff]
        %v2610 = vld [vmem:[#allocation2 + $0x168] sm:$0xff]
        %v2611 = vld [vmem:[#allocation2 + $0x170] sm:$0xff]
        %v2612 = vld [vmem:[#allocation2 + $0x178] sm:$0xff]
        %v2613 = vld [vmem:[#allocation2 + $0x180] sm:$0xff]
        %v2614 = vld [vmem:[#allocation2 + $0x188] sm:$0xff]
        %v2615 = vld [vmem:[#allocation2 + $0x190] sm:$0xff]
        %v2616 = vld [vmem:[#allocation2 + $0x198] sm:$0xff]
        %v2617 = vld [vmem:[#allocation2 + $0x1a0] sm:$0xff]
        %v2618 = vld [vmem:[#allocation2 + $0x1a8] sm:$0xff]
        %s2619 = scalar_lea.vmem [#allocation8], 384
        %v2620 = vld [vmem:[%s2619] sm:$0xf]
        %v2621 = vld [vmem:[%s2619 + $0x4] sm:$0xf]
        %v2622 = vld [vmem:[%s2619 + $0x8] sm:$0xf]
        %v2623 = vld [vmem:[%s2619 + $0xc] sm:$0xf]
        %v2624 = vld [vmem:[%s2619 + $0x10] sm:$0xf]
        %v2625 = vld [vmem:[%s2619 + $0x14] sm:$0xf]
        %v2626 = vld [vmem:[%s2619 + $0x18] sm:$0xf]
        %v2627 = vld [vmem:[%s2619 + $0x1c] sm:$0xf]
        %v2628 = vld [vmem:[%s2619 + $0x20] sm:$0xf]
        %v2629 = vld [vmem:[%s2619 + $0x24] sm:$0xf]
        %v2630 = vld [vmem:[%s2619 + $0x28] sm:$0xf]
        %v2631 = vld [vmem:[%s2619 + $0x2c] sm:$0xf]
        %v2632 = vld [vmem:[%s2619 + $0x30] sm:$0xf]
        %v2633 = vld [vmem:[%s2619 + $0x34] sm:$0xf]
        %v2634 = vld [vmem:[%s2619 + $0x38] sm:$0xf]
        %v2635 = vld [vmem:[%s2619 + $0x3c] sm:$0xf]
        %v2636 = vld [vmem:[%s2619 + $0x40] sm:$0xf]
        %v2637 = vld [vmem:[%s2619 + $0x44] sm:$0xf]
        %v2638 = vld [vmem:[%s2619 + $0x48] sm:$0xf]
        %v2639 = vld [vmem:[%s2619 + $0x4c] sm:$0xf]
        %v2640 = vld [vmem:[%s2619 + $0x50] sm:$0xf]
        %v2641 = vld [vmem:[%s2619 + $0x54] sm:$0xf]
        %v2642 = vld [vmem:[%s2619 + $0x58] sm:$0xf]
        %v2643 = vld [vmem:[%s2619 + $0x5c] sm:$0xf]
        %v2644 = vld [vmem:[%s2619 + $0x60] sm:$0xf]
        %v2645 = vld [vmem:[%s2619 + $0x64] sm:$0xf]
        %v2646 = vld [vmem:[%s2619 + $0x68] sm:$0xf]
        %v2647 = vld [vmem:[%s2619 + $0x6c] sm:$0xf]
        %v2648 = vld [vmem:[%s2619 + $0x70] sm:$0xf]
        %v2649 = vld [vmem:[%s2619 + $0x74] sm:$0xf]
        %v2650 = vld [vmem:[%s2619 + $0x78] sm:$0xf]
        %v2651 = vld [vmem:[%s2619 + $0x7c] sm:$0xf]
        %v2652 = vld [vmem:[%s2619 + $0x80] sm:$0xf]
        %v2653 = vld [vmem:[%s2619 + $0x84] sm:$0xf]
        %v2654 = vld [vmem:[%s2619 + $0x88] sm:$0xf]
        %v2655 = vld [vmem:[%s2619 + $0x8c] sm:$0xf]
        %v2656 = vld [vmem:[%s2619 + $0x90] sm:$0xf]
        %v2657 = vld [vmem:[%s2619 + $0x94] sm:$0xf]
        %v2658 = vld [vmem:[%s2619 + $0x98] sm:$0xf]
        %v2659 = vld [vmem:[%s2619 + $0x9c] sm:$0xf]
        %v2660 = vld [vmem:[%s2619 + $0xa0] sm:$0xf]
        %v2661 = vld [vmem:[%s2619 + $0xa4] sm:$0xf]
        %v2662 = vld [vmem:[%s2619 + $0xa8] sm:$0xf]
        %v2663 = vld [vmem:[%s2619 + $0xac] sm:$0xf]
        %v2664 = vld [vmem:[%s2619 + $0xb0] sm:$0xf]
        %v2665 = vld [vmem:[%s2619 + $0xb4] sm:$0xf]
        %v2666 = vld [vmem:[%s2619 + $0xb8] sm:$0xf]
        %v2667 = vld [vmem:[%s2619 + $0xbc] sm:$0xf]
        %v2716 = vunpack.c.l.b16 %v2620
        %v2717 = vunpack.c.l.b16 %v2621
        %v2718 = vunpack.c.l.b16 %v2622
        %v2719 = vunpack.c.l.b16 %v2623
        %v2720 = vunpack.c.l.b16 %v2624
        %v2721 = vunpack.c.l.b16 %v2625
        %v2722 = vunpack.c.l.b16 %v2626
        %v2723 = vunpack.c.l.b16 %v2627
        %v2724 = vunpack.c.l.b16 %v2628
        %v2725 = vunpack.c.l.b16 %v2629
        %v2726 = vunpack.c.l.b16 %v2630
        %v2727 = vunpack.c.l.b16 %v2631
        %v2728 = vunpack.c.l.b16 %v2632
        %v2729 = vunpack.c.l.b16 %v2633
        %v2730 = vunpack.c.l.b16 %v2634
        %v2731 = vunpack.c.l.b16 %v2635
        %v2732 = vunpack.c.l.b16 %v2636
        %v2733 = vunpack.c.l.b16 %v2637
        %v2734 = vunpack.c.l.b16 %v2638
        %v2735 = vunpack.c.l.b16 %v2639
        %v2736 = vunpack.c.l.b16 %v2640
        %v2737 = vunpack.c.l.b16 %v2641
        %v2738 = vunpack.c.l.b16 %v2642
        %v2739 = vunpack.c.l.b16 %v2643
        %v2740 = vunpack.c.l.b16 %v2644
        %v2741 = vunpack.c.l.b16 %v2645
        %v2742 = vunpack.c.l.b16 %v2646
        %v2743 = vunpack.c.l.b16 %v2647
        %v2744 = vunpack.c.l.b16 %v2648
        %v2745 = vunpack.c.l.b16 %v2649
        %v2746 = vunpack.c.l.b16 %v2650
        %v2747 = vunpack.c.l.b16 %v2651
        %v2748 = vunpack.c.l.b16 %v2652
        %v2749 = vunpack.c.l.b16 %v2653
        %v2750 = vunpack.c.l.b16 %v2654
        %v2751 = vunpack.c.l.b16 %v2655
        %v2752 = vunpack.c.l.b16 %v2656
        %v2753 = vunpack.c.l.b16 %v2657
        %v2754 = vunpack.c.l.b16 %v2658
        %v2755 = vunpack.c.l.b16 %v2659
        %v2756 = vunpack.c.l.b16 %v2660
        %v2757 = vunpack.c.l.b16 %v2661
        %v2758 = vunpack.c.l.b16 %v2662
        %v2759 = vunpack.c.l.b16 %v2663
        %v2760 = vunpack.c.l.b16 %v2664
        %v2761 = vunpack.c.l.b16 %v2665
        %v2762 = vunpack.c.l.b16 %v2666
        %v2763 = vunpack.c.l.b16 %v2667
        %v2764 = vpack.c.b16 %v2717, %v2716
        %v2765 = vpack.c.b16 %v2719, %v2718
        %v2766 = vpack.c.b16 %v2721, %v2720
        %v2767 = vpack.c.b16 %v2723, %v2722
        %v2768 = vpack.c.b16 %v2725, %v2724
        %v2769 = vpack.c.b16 %v2727, %v2726
        %v2770 = vpack.c.b16 %v2729, %v2728
        %v2771 = vpack.c.b16 %v2731, %v2730
        %v2772 = vpack.c.b16 %v2733, %v2732
        %v2773 = vpack.c.b16 %v2735, %v2734
        %v2774 = vpack.c.b16 %v2737, %v2736
        %v2775 = vpack.c.b16 %v2739, %v2738
        %v2776 = vpack.c.b16 %v2741, %v2740
        %v2777 = vpack.c.b16 %v2743, %v2742
        %v2778 = vpack.c.b16 %v2745, %v2744
        %v2779 = vpack.c.b16 %v2747, %v2746
        %v2780 = vpack.c.b16 %v2749, %v2748
        %v2781 = vpack.c.b16 %v2751, %v2750
        %v2782 = vpack.c.b16 %v2753, %v2752
        %v2783 = vpack.c.b16 %v2755, %v2754
        %v2784 = vpack.c.b16 %v2757, %v2756
        %v2785 = vpack.c.b16 %v2759, %v2758
        %v2786 = vpack.c.b16 %v2761, %v2760
        %v2787 = vpack.c.b16 %v2763, %v2762
        %2812 = vmatprep.subr.bf16.mxu0 0
        %2813 = vmatpush1.bf16.msra.mxu0 %v2764
        %2814 = vmatprep.subr.bf16.mxu0 0
        %2815 = vmatpush1.bf16.msra.mxu0 %v2765
        %2816 = vmatprep.subr.bf16.mxu0 0
        %2817 = vmatpush1.bf16.msra.mxu0 %v2766
        %2818 = vmatprep.subr.bf16.mxu0 0
        %2819 = vmatpush1.bf16.msra.mxu0 %v2767
        %2820 = vmatprep.subr.bf16.mxu0 0
        %2821 = vmatpush1.bf16.msra.mxu0 %v2768
        %2822 = vmatprep.subr.bf16.mxu0 0
        %2823 = vmatpush1.bf16.msra.mxu0 %v2769
        %2824 = vmatprep.subr.bf16.mxu0 0
        %2825 = vmatpush1.bf16.msra.mxu0 %v2770
        %2826 = vmatprep.subr.bf16.mxu0 0
        %2827 = vmatpush1.bf16.msra.mxu0 %v2771
        %2828 = vmatprep.subr.bf16.mxu0 0
        %2829 = vmatpush1.bf16.msra.mxu0 %v2772
        %2830 = vmatprep.subr.bf16.mxu0 0
        %2831 = vmatpush1.bf16.msra.mxu0 %v2773
        %2832 = vmatprep.subr.bf16.mxu0 0
        %2833 = vmatpush1.bf16.msra.mxu0 %v2774
        %2834 = vmatprep.subr.bf16.mxu0 0
        %2835 = vmatpush1.bf16.msra.mxu0 %v2775
        %2836 = vmatprep.subr.bf16.mxu0 0
        %2837 = vmatpush1.bf16.msra.mxu0 %v2776
        %2838 = vmatprep.subr.bf16.mxu0 0
        %2839 = vmatpush1.bf16.msra.mxu0 %v2777
        %2840 = vmatprep.subr.bf16.mxu0 0
        %2841 = vmatpush1.bf16.msra.mxu0 %v2778
        %2842 = vmatprep.subr.bf16.mxu0 0
        %2843 = vmatpush1.bf16.msra.mxu0 %v2779
        %2844 = vmatprep.mubr.bf16.mxu0 %v2572
        %2845 = vmatmul.mubr.bf16.gmra.mrb[0].mxu0 %v2571
        %v2846 = vpop.f32.mrb[0].mxu0
        %v2847 = vadd.f32 0.0, %v2846
        %v2848 = vpop.f32.mrb[0].mxu0
        %v2849 = vpop.f32.mrb[0].mxu0
        %v2850 = vadd.f32 0.0, %v2849
        %v2851 = vpop.f32.mrb[0].mxu0
        %2852 = vmatprep.mubr.bf16.mxu0 %v2575
        %2853 = vmatmul.mubr.bf16.gmra.mrb[0].mxu0 %v2574
        %v2854 = vpop.f32.mrb[0].mxu0
        %v2855 = vadd.f32 0.0, %v2854
        %v2856 = vpop.f32.mrb[0].mxu0
        %v2857 = vpop.f32.mrb[0].mxu0
        %v2858 = vadd.f32 0.0, %v2857
        %v2859 = vpop.f32.mrb[0].mxu0
        %2860 = vmatprep.mubr.bf16.mxu0 %v2578
        %2861 = vmatmul.mubr.bf16.gmra.mrb[0].mxu0 %v2577
        %v2862 = vpop.f32.mrb[0].mxu0
        %v2863 = vadd.f32 0.0, %v2862
        %v2864 = vpop.f32.mrb[0].mxu0
        %v2865 = vpop.f32.mrb[0].mxu0
        %v2866 = vadd.f32 0.0, %v2865
        %v2867 = vpop.f32.mrb[0].mxu0
        %2868 = vmatprep.mubr.bf16.mxu0 %v2581
        %2869 = vmatmul.mubr.bf16.gmra.mrb[0].mxu0 %v2580
        %v2870 = vpop.f32.mrb[0].mxu0
        %v2871 = vadd.f32 0.0, %v2870
        %v2872 = vpop.f32.mrb[0].mxu0
        %v2873 = vpop.f32.mrb[0].mxu0
        %v2874 = vadd.f32 0.0, %v2873
        %v2875 = vpop.f32.mrb[0].mxu0
        %2876 = vmatprep.mubr.bf16.mxu0 %v2584
        %2877 = vmatmul.mubr.bf16.gmra.mrb[0].mxu0 %v2583
        %v2878 = vpop.f32.mrb[0].mxu0
        %v2879 = vadd.f32 0.0, %v2878
        %v2880 = vpop.f32.mrb[0].mxu0
        %v2881 = vpop.f32.mrb[0].mxu0
        %v2882 = vadd.f32 0.0, %v2881
        %v2883 = vpop.f32.mrb[0].mxu0
        %2884 = vmatprep.mubr.bf16.mxu0 %v2587
        %2885 = vmatmul.mubr.bf16.gmra.mrb[0].mxu0 %v2586
        %v2886 = vpop.f32.mrb[0].mxu0
        %v2887 = vadd.f32 0.0, %v2886
        %v2888 = vpop.f32.mrb[0].mxu0
        %v2889 = vpop.f32.mrb[0].mxu0
        %v2890 = vadd.f32 0.0, %v2889
        %v2891 = vpop.f32.mrb[0].mxu0
        %2892 = vmatprep.mubr.bf16.mxu0 %v2590
        %2893 = vmatmul.mubr.bf16.gmra.mrb[0].mxu0 %v2589
        %v2894 = vpop.f32.mrb[0].mxu0
        %v2895 = vadd.f32 0.0, %v2894
        %v2896 = vpop.f32.mrb[0].mxu0
        %v2897 = vpop.f32.mrb[0].mxu0
        %v2898 = vadd.f32 0.0, %v2897
        %v2899 = vpop.f32.mrb[0].mxu0
        %2900 = vmatprep.mubr.bf16.mxu0 %v2593
        %2901 = vmatmul.mubr.bf16.gmra.mrb[0].mxu0 %v2592
        %v2902 = vpop.f32.mrb[0].mxu0
        %v2903 = vadd.f32 0.0, %v2902
        %v2904 = vpop.f32.mrb[0].mxu0
        %v2905 = vpop.f32.mrb[0].mxu0
        %v2906 = vadd.f32 0.0, %v2905
        %v2907 = vpop.f32.mrb[0].mxu0
        %2908 = vmatprep.mubr.bf16.mxu0 %v2596
        %2909 = vmatmul.mubr.bf16.gmra.mrb[0].mxu0 %v2595
        %v2910 = vpop.f32.mrb[0].mxu0
        %v2911 = vadd.f32 0.0, %v2910
        %v2912 = vpop.f32.mrb[0].mxu0
        %v2913 = vpop.f32.mrb[0].mxu0
        %v2914 = vadd.f32 0.0, %v2913
        %v2915 = vpop.f32.mrb[0].mxu0
        %2916 = vmatprep.mubr.bf16.mxu0 %v2599
        %2917 = vmatmul.mubr.bf16.gmra.mrb[0].mxu0 %v2598
        %v2918 = vpop.f32.mrb[0].mxu0
        %v2919 = vadd.f32 0.0, %v2918
        %v2920 = vpop.f32.mrb[0].mxu0
        %v2921 = vpop.f32.mrb[0].mxu0
        %v2922 = vadd.f32 0.0, %v2921
        %v2923 = vpop.f32.mrb[0].mxu0
        %2924 = vmatprep.mubr.bf16.mxu0 %v2602
        %2925 = vmatmul.mubr.bf16.gmra.mrb[0].mxu0 %v2601
        %v2926 = vpop.f32.mrb[0].mxu0
        %v2927 = vadd.f32 0.0, %v2926
        %v2928 = vpop.f32.mrb[0].mxu0
        %v2929 = vpop.f32.mrb[0].mxu0
        %v2930 = vadd.f32 0.0, %v2929
        %v2931 = vpop.f32.mrb[0].mxu0
        %2932 = vmatprep.mubr.bf16.mxu0 %v2605
        %2933 = vmatmul.mubr.bf16.gmra.mrb[0].mxu0 %v2604
        %v2934 = vpop.f32.mrb[0].mxu0
        %v2935 = vadd.f32 0.0, %v2934
        %v2936 = vpop.f32.mrb[0].mxu0
        %v2937 = vpop.f32.mrb[0].mxu0
        %v2938 = vadd.f32 0.0, %v2937
        %v2939 = vpop.f32.mrb[0].mxu0
        %2940 = vmatprep.mubr.bf16.mxu0 %v2608
        %2941 = vmatmul.mubr.bf16.gmra.mrb[0].mxu0 %v2607
        %v2942 = vpop.f32.mrb[0].mxu0
        %v2943 = vadd.f32 0.0, %v2942
        %v2944 = vpop.f32.mrb[0].mxu0
        %v2945 = vpop.f32.mrb[0].mxu0
        %v2946 = vadd.f32 0.0, %v2945
        %v2947 = vpop.f32.mrb[0].mxu0
        %2948 = vmatprep.mubr.bf16.mxu0 %v2611
        %2949 = vmatmul.mubr.bf16.gmra.mrb[0].mxu0 %v2610
        %v2950 = vpop.f32.mrb[0].mxu0
        %v2951 = vadd.f32 0.0, %v2950
        %v2952 = vpop.f32.mrb[0].mxu0
        %v2953 = vpop.f32.mrb[0].mxu0
        %v2954 = vadd.f32 0.0, %v2953
        %v2955 = vpop.f32.mrb[0].mxu0
        %2956 = vmatprep.mubr.bf16.mxu0 %v2614
        %2957 = vmatmul.mubr.bf16.gmra.mrb[0].mxu0 %v2613
        %v2958 = vpop.f32.mrb[0].mxu0
        %v2959 = vadd.f32 0.0, %v2958
        %v2960 = vpop.f32.mrb[0].mxu0
        %v2961 = vpop.f32.mrb[0].mxu0
        %v2962 = vadd.f32 0.0, %v2961
        %v2963 = vpop.f32.mrb[0].mxu0
        %2964 = vmatprep.mubr.bf16.mxu0 %v2617
        %2965 = vmatmul.mubr.bf16.gmra.mrb[0].mxu0 %v2616
        %v2966 = vpop.f32.mrb[0].mxu0
        %v2967 = vadd.f32 0.0, %v2966
        %v2968 = vpop.f32.mrb[0].mxu0
        %v2969 = vpop.f32.mrb[0].mxu0
        %v2970 = vadd.f32 0.0, %v2969
        %v2971 = vpop.f32.mrb[0].mxu0
        %2972 = vdwg.mxu0
        %2973 = vmatprep.subr.bf16.mxu0 0
        %2974 = vmatpush1.bf16.msra.mxu0 %v2780
        %2975 = vmatprep.subr.bf16.mxu0 0
        %2976 = vmatpush1.bf16.msra.mxu0 %v2781
        %2977 = vmatprep.subr.bf16.mxu0 0
        %2978 = vmatpush1.bf16.msra.mxu0 %v2782
        %2979 = vmatprep.subr.bf16.mxu0 0
        %2980 = vmatpush1.bf16.msra.mxu0 %v2783
        %2981 = vmatprep.subr.bf16.mxu0 0
        %2982 = vmatpush1.bf16.msra.mxu0 %v2784
        %2983 = vmatprep.subr.bf16.mxu0 0
        %2984 = vmatpush1.bf16.msra.mxu0 %v2785
        %2985 = vmatprep.subr.bf16.mxu0 0
        %2986 = vmatpush1.bf16.msra.mxu0 %v2786
        %2987 = vmatprep.subr.bf16.mxu0 0
        %2988 = vmatpush1.bf16.msra.mxu0 %v2787
        %2989 = vmatprep.subr.bf16.mxu0 0
        %2990 = vmatpush1.bf16.msra.mxu0 0
        %2991 = vmatprep.subr.bf16.mxu0 0
        %2992 = vmatpush1.bf16.msra.mxu0 0
        %2993 = vmatprep.subr.bf16.mxu0 0
        %2994 = vmatpush1.bf16.msra.mxu0 0
        %2995 = vmatprep.subr.bf16.mxu0 0
        %2996 = vmatpush1.bf16.msra.mxu0 0
        %2997 = vmatprep.subr.bf16.mxu0 0
        %2998 = vmatpush1.bf16.msra.mxu0 0
        %2999 = vmatprep.subr.bf16.mxu0 0
        %3000 = vmatpush1.bf16.msra.mxu0 0
        %3001 = vmatprep.subr.bf16.mxu0 0
        %3002 = vmatpush1.bf16.msra.mxu0 0
        %3003 = vmatprep.subr.bf16.mxu0 0
        %3004 = vmatpush1.bf16.msra.mxu0 0
        %3005 = vmatprep.mubr.bf16.mxu0 0
        %3006 = vmatmul.mubr.bf16.gmra.mrb[0].mxu0 %v2573
        %v3007 = vpop.f32.mrb[0].mxu0
        %v3008 = vadd.f32 %v2847, %v3007
        %v3009 = vpop.f32.mrb[0].mxu0
        %v3010 = vpop.f32.mrb[0].mxu0
        %v3011 = vadd.f32 %v2850, %v3010
        %v3012 = vpop.f32.mrb[0].mxu0
        %3013 = vmatprep.mubr.bf16.mxu0 0
        %3014 = vmatmul.mubr.bf16.gmra.mrb[0].mxu0 %v2576
        %v3015 = vpop.f32.mrb[0].mxu0
        %v3016 = vadd.f32 %v2855, %v3015
        %v3017 = vpop.f32.mrb[0].mxu0
        %v3018 = vpop.f32.mrb[0].mxu0
        %v3019 = vadd.f32 %v2858, %v3018
        %v3020 = vpop.f32.mrb[0].mxu0
        %3021 = vmatprep.mubr.bf16.mxu0 0
        %3022 = vmatmul.mubr.bf16.gmra.mrb[0].mxu0 %v2579
        %v3023 = vpop.f32.mrb[0].mxu0
        %v3024 = vadd.f32 %v2863, %v3023
        %v3025 = vpop.f32.mrb[0].mxu0
        %v3026 = vpop.f32.mrb[0].mxu0
        %v3027 = vadd.f32 %v2866, %v3026
        %v3028 = vpop.f32.mrb[0].mxu0
        %3029 = vmatprep.mubr.bf16.mxu0 0
        %3030 = vmatmul.mubr.bf16.gmra.mrb[0].mxu0 %v2582
        %v3031 = vpop.f32.mrb[0].mxu0
        %v3032 = vadd.f32 %v2871, %v3031
        %v3033 = vpop.f32.mrb[0].mxu0
        %v3034 = vpop.f32.mrb[0].mxu0
        %v3035 = vadd.f32 %v2874, %v3034
        %v3036 = vpop.f32.mrb[0].mxu0
        %3037 = vmatprep.mubr.bf16.mxu0 0
        %3038 = vmatmul.mubr.bf16.gmra.mrb[0].mxu0 %v2585
        %v3039 = vpop.f32.mrb[0].mxu0
        %v3040 = vadd.f32 %v2879, %v3039
        %v3041 = vpop.f32.mrb[0].mxu0
        %v3042 = vpop.f32.mrb[0].mxu0
        %v3043 = vadd.f32 %v2882, %v3042
        %v3044 = vpop.f32.mrb[0].mxu0
        %3045 = vmatprep.mubr.bf16.mxu0 0
        %3046 = vmatmul.mubr.bf16.gmra.mrb[0].mxu0 %v2588
        %v3047 = vpop.f32.mrb[0].mxu0
        %v3048 = vadd.f32 %v2887, %v3047
        %v3049 = vpop.f32.mrb[0].mxu0
        %v3050 = vpop.f32.mrb[0].mxu0
        %v3051 = vadd.f32 %v2890, %v3050
        %v3052 = vpop.f32.mrb[0].mxu0
        %3053 = vmatprep.mubr.bf16.mxu0 0
        %3054 = vmatmul.mubr.bf16.gmra.mrb[0].mxu0 %v2591
        %v3055 = vpop.f32.mrb[0].mxu0
        %v3056 = vadd.f32 %v2895, %v3055
        %v3057 = vpop.f32.mrb[0].mxu0
        %v3058 = vpop.f32.mrb[0].mxu0
        %v3059 = vadd.f32 %v2898, %v3058
        %v3060 = vpop.f32.mrb[0].mxu0
        %3061 = vmatprep.mubr.bf16.mxu0 0
        %3062 = vmatmul.mubr.bf16.gmra.mrb[0].mxu0 %v2594
        %v3063 = vpop.f32.mrb[0].mxu0
        %v3064 = vadd.f32 %v2903, %v3063
        %v3065 = vpop.f32.mrb[0].mxu0
        %v3066 = vpop.f32.mrb[0].mxu0
        %v3067 = vadd.f32 %v2906, %v3066
        %v3068 = vpop.f32.mrb[0].mxu0
        %3069 = vmatprep.mubr.bf16.mxu0 0
        %3070 = vmatmul.mubr.bf16.gmra.mrb[0].mxu0 %v2597
        %v3071 = vpop.f32.mrb[0].mxu0
        %v3072 = vadd.f32 %v2911, %v3071
        %v3073 = vpop.f32.mrb[0].mxu0
        %v3074 = vpop.f32.mrb[0].mxu0
        %v3075 = vadd.f32 %v2914, %v3074
        %v3076 = vpop.f32.mrb[0].mxu0
        %3077 = vmatprep.mubr.bf16.mxu0 0
        %3078 = vmatmul.mubr.bf16.gmra.mrb[0].mxu0 %v2600
        %v3079 = vpop.f32.mrb[0].mxu0
        %v3080 = vadd.f32 %v2919, %v3079
        %v3081 = vpop.f32.mrb[0].mxu0
        %v3082 = vpop.f32.mrb[0].mxu0
        %v3083 = vadd.f32 %v2922, %v3082
        %v3084 = vpop.f32.mrb[0].mxu0
        %3085 = vmatprep.mubr.bf16.mxu0 0
        %3086 = vmatmul.mubr.bf16.gmra.mrb[0].mxu0 %v2603
        %v3087 = vpop.f32.mrb[0].mxu0
        %v3088 = vadd.f32 %v2927, %v3087
        %v3089 = vpop.f32.mrb[0].mxu0
        %v3090 = vpop.f32.mrb[0].mxu0
        %v3091 = vadd.f32 %v2930, %v3090
        %v3092 = vpop.f32.mrb[0].mxu0
        %3093 = vmatprep.mubr.bf16.mxu0 0
        %3094 = vmatmul.mubr.bf16.gmra.mrb[0].mxu0 %v2606
        %v3095 = vpop.f32.mrb[0].mxu0
        %v3096 = vadd.f32 %v2935, %v3095
        %v3097 = vpop.f32.mrb[0].mxu0
        %v3098 = vpop.f32.mrb[0].mxu0
        %v3099 = vadd.f32 %v2938, %v3098
        %v3100 = vpop.f32.mrb[0].mxu0
        %3101 = vmatprep.mubr.bf16.mxu0 0
        %3102 = vmatmul.mubr.bf16.gmra.mrb[0].mxu0 %v2609
        %v3103 = vpop.f32.mrb[0].mxu0
        %v3104 = vadd.f32 %v2943, %v3103
        %v3105 = vpop.f32.mrb[0].mxu0
        %v3106 = vpop.f32.mrb[0].mxu0
        %v3107 = vadd.f32 %v2946, %v3106
        %v3108 = vpop.f32.mrb[0].mxu0
        %3109 = vmatprep.mubr.bf16.mxu0 0
        %3110 = vmatmul.mubr.bf16.gmra.mrb[0].mxu0 %v2612
        %v3111 = vpop.f32.mrb[0].mxu0
        %v3112 = vadd.f32 %v2951, %v3111
        %v3113 = vpop.f32.mrb[0].mxu0
        %v3114 = vpop.f32.mrb[0].mxu0
        %v3115 = vadd.f32 %v2954, %v3114
        %v3116 = vpop.f32.mrb[0].mxu0
        %3117 = vmatprep.mubr.bf16.mxu0 0
        %3118 = vmatmul.mubr.bf16.gmra.mrb[0].mxu0 %v2615
        %v3119 = vpop.f32.mrb[0].mxu0
        %v3120 = vadd.f32 %v2959, %v3119
        %v3121 = vpop.f32.mrb[0].mxu0
        %v3122 = vpop.f32.mrb[0].mxu0
        %v3123 = vadd.f32 %v2962, %v3122
        %v3124 = vpop.f32.mrb[0].mxu0
        %3125 = vmatprep.mubr.bf16.mxu0 0
        %3126 = vmatmul.mubr.bf16.gmra.mrb[0].mxu0 %v2618
        %v3127 = vpop.f32.mrb[0].mxu0
        %v3128 = vadd.f32 %v2967, %v3127
        %v3129 = vpop.f32.mrb[0].mxu0
        %v3130 = vpop.f32.mrb[0].mxu0
        %v3131 = vadd.f32 %v2970, %v3130
        %v3132 = vpop.f32.mrb[0].mxu0
        %3133 = vdwg.mxu0
        %v3134 = vadd.f32 %v2445, %v3008
        %v3135 = vadd.f32 %v2448, %v3011
        %v3136 = vadd.f32 %v2453, %v3016
        %v3137 = vadd.f32 %v2456, %v3019
        %v3138 = vadd.f32 %v2461, %v3024
        %v3139 = vadd.f32 %v2464, %v3027
        %v3140 = vadd.f32 %v2469, %v3032
        %v3141 = vadd.f32 %v2472, %v3035
        %v3142 = vadd.f32 %v2477, %v3040
        %v3143 = vadd.f32 %v2480, %v3043
        %v3144 = vadd.f32 %v2485, %v3048
        %v3145 = vadd.f32 %v2488, %v3051
        %v3146 = vadd.f32 %v2493, %v3056
        %v3147 = vadd.f32 %v2496, %v3059
        %v3148 = vadd.f32 %v2501, %v3064
        %v3149 = vadd.f32 %v2504, %v3067
        %v3150 = vadd.f32 %v2509, %v3072
        %v3151 = vadd.f32 %v2512, %v3075
        %v3152 = vadd.f32 %v2517, %v3080
        %v3153 = vadd.f32 %v2520, %v3083
        %v3154 = vadd.f32 %v2525, %v3088
        %v3155 = vadd.f32 %v2528, %v3091
        %v3156 = vadd.f32 %v2533, %v3096
        %v3157 = vadd.f32 %v2536, %v3099
        %v3158 = vadd.f32 %v2541, %v3104
        %v3159 = vadd.f32 %v2544, %v3107
        %v3160 = vadd.f32 %v2549, %v3112
        %v3161 = vadd.f32 %v2552, %v3115
        %v3162 = vadd.f32 %v2557, %v3120
        %v3163 = vadd.f32 %v2560, %v3123
        %v3164 = vadd.f32 %v2565, %v3128
        %v3165 = vadd.f32 %v2568, %v3131
        %v3166 = vld [vmem:[%s2] sm:$0x1]
        %v3168 = vlaneseq
        %v3169 = vshrl.u32 %v3168, 7
        %v3170 = vsub.s32 0, %v3169
        %v3171 = vrot.slane %v3166, %v3170
        %v3173 = vadd.f32 %v3134, %v3171
        %v3174 = vadd.f32 %v3135, %v3171
        %v3175 = vadd.f32 %v3136, %v3171
        %v3176 = vadd.f32 %v3137, %v3171
        %v3177 = vadd.f32 %v3138, %v3171
        %v3178 = vadd.f32 %v3139, %v3171
        %v3179 = vadd.f32 %v3140, %v3171
        %v3180 = vadd.f32 %v3141, %v3171
        %v3181 = vadd.f32 %v3142, %v3171
        %v3182 = vadd.f32 %v3143, %v3171
        %v3183 = vadd.f32 %v3144, %v3171
        %v3184 = vadd.f32 %v3145, %v3171
        %v3185 = vadd.f32 %v3146, %v3171
        %v3186 = vadd.f32 %v3147, %v3171
        %v3187 = vadd.f32 %v3148, %v3171
        %v3188 = vadd.f32 %v3149, %v3171
        %v3189 = vadd.f32 %v3150, %v3171
        %v3190 = vadd.f32 %v3151, %v3171
        %v3191 = vadd.f32 %v3152, %v3171
        %v3192 = vadd.f32 %v3153, %v3171
        %v3193 = vadd.f32 %v3154, %v3171
        %v3194 = vadd.f32 %v3155, %v3171
        %v3195 = vadd.f32 %v3156, %v3171
        %v3196 = vadd.f32 %v3157, %v3171
        %v3197 = vadd.f32 %v3158, %v3171
        %v3198 = vadd.f32 %v3159, %v3171
        %v3199 = vadd.f32 %v3160, %v3171
        %v3200 = vadd.f32 %v3161, %v3171
        %v3201 = vadd.f32 %v3162, %v3171
        %v3202 = vadd.f32 %v3163, %v3171
        %v3203 = vadd.f32 %v3164, %v3171
        %v3204 = vadd.f32 %v3165, %v3171
        %3205 = vst [vmem:[#allocation4] sm:$0xff] %v3173
        %3206 = vst [vmem:[#allocation4 + $0x8] sm:$0xff] %v3174
        %3207 = vst [vmem:[#allocation4 + $0x10] sm:$0xff] %v3175
        %3208 = vst [vmem:[#allocation4 + $0x18] sm:$0xff] %v3176
        %3209 = vst [vmem:[#allocation4 + $0x20] sm:$0xff] %v3177
        %3210 = vst [vmem:[#allocation4 + $0x28] sm:$0xff] %v3178
        %3211 = vst [vmem:[#allocation4 + $0x30] sm:$0xff] %v3179
        %3212 = vst [vmem:[#allocation4 + $0x38] sm:$0xff] %v3180
        %3213 = vst [vmem:[#allocation4 + $0x40] sm:$0xff] %v3181
        %3214 = vst [vmem:[#allocation4 + $0x48] sm:$0xff] %v3182
        %3215 = vst [vmem:[#allocation4 + $0x50] sm:$0xff] %v3183
        %3216 = vst [vmem:[#allocation4 + $0x58] sm:$0xff] %v3184
        %3217 = vst [vmem:[#allocation4 + $0x60] sm:$0xff] %v3185
        %3218 = vst [vmem:[#allocation4 + $0x68] sm:$0xff] %v3186
        %3219 = vst [vmem:[#allocation4 + $0x70] sm:$0xff] %v3187
        %3220 = vst [vmem:[#allocation4 + $0x78] sm:$0xff] %v3188
        %3221 = vst [vmem:[#allocation4 + $0x80] sm:$0xff] %v3189
        %3222 = vst [vmem:[#allocation4 + $0x88] sm:$0xff] %v3190
        %3223 = vst [vmem:[#allocation4 + $0x90] sm:$0xff] %v3191
        %3224 = vst [vmem:[#allocation4 + $0x98] sm:$0xff] %v3192
        %3225 = vst [vmem:[#allocation4 + $0xa0] sm:$0xff] %v3193
        %3226 = vst [vmem:[#allocation4 + $0xa8] sm:$0xff] %v3194
        %3227 = vst [vmem:[#allocation4 + $0xb0] sm:$0xff] %v3195
        %3228 = vst [vmem:[#allocation4 + $0xb8] sm:$0xff] %v3196
        %3229 = vst [vmem:[#allocation4 + $0xc0] sm:$0xff] %v3197
        %3230 = vst [vmem:[#allocation4 + $0xc8] sm:$0xff] %v3198
        %3231 = vst [vmem:[#allocation4 + $0xd0] sm:$0xff] %v3199
        %3232 = vst [vmem:[#allocation4 + $0xd8] sm:$0xff] %v3200
        %3233 = vst [vmem:[#allocation4 + $0xe0] sm:$0xff] %v3201
        %3234 = vst [vmem:[#allocation4 + $0xe8] sm:$0xff] %v3202
        %3235 = vst [vmem:[#allocation4 + $0xf0] sm:$0xff] %v3203
        %3236 = vst [vmem:[#allocation4 + $0xf8] sm:$0xff] %v3204
        %v3237 = vld [vmem:[#allocation4] ss:$2 sm:$0xff]
        %s3238 = scalar_lea.vmem [#allocation4], 16
        %v3239 = vld [vmem:[%s3238] ss:$2 sm:$0xff]
        %s3240 = scalar_lea.vmem [#allocation4], 32
        %v3241 = vld [vmem:[%s3240] ss:$2 sm:$0xff]
        %s3242 = scalar_lea.vmem [#allocation4], 48
        %v3243 = vld [vmem:[%s3242] ss:$2 sm:$0xff]
        %s3244 = scalar_lea.vmem [#allocation4], 64
        %v3245 = vld [vmem:[%s3244] ss:$2 sm:$0xff]
        %s3246 = scalar_lea.vmem [#allocation4], 80
        %v3247 = vld [vmem:[%s3246] ss:$2 sm:$0xff]
        %s3248 = scalar_lea.vmem [#allocation4], 96
        %v3249 = vld [vmem:[%s3248] ss:$2 sm:$0xff]
        %s3250 = scalar_lea.vmem [#allocation4], 112
        %v3251 = vld [vmem:[%s3250] ss:$2 sm:$0xff]
        %s3252 = scalar_lea.vmem [#allocation4], 128
        %v3253 = vld [vmem:[%s3252] ss:$2 sm:$0xff]
        %s3254 = scalar_lea.vmem [#allocation4], 144
        %v3255 = vld [vmem:[%s3254] ss:$2 sm:$0xff]
        %s3256 = scalar_lea.vmem [#allocation4], 160
        %v3257 = vld [vmem:[%s3256] ss:$2 sm:$0xff]
        %s3258 = scalar_lea.vmem [#allocation4], 176
        %v3259 = vld [vmem:[%s3258] ss:$2 sm:$0xff]
        %s3260 = scalar_lea.vmem [#allocation4], 192
        %v3261 = vld [vmem:[%s3260] ss:$2 sm:$0xff]
        %s3262 = scalar_lea.vmem [#allocation4], 208
        %v3263 = vld [vmem:[%s3262] ss:$2 sm:$0xff]
        %s3264 = scalar_lea.vmem [#allocation4], 224
        %v3265 = vld [vmem:[%s3264] ss:$2 sm:$0xff]
        %s3266 = scalar_lea.vmem [#allocation4], 240
        %v3267 = vld [vmem:[%s3266] ss:$2 sm:$0xff]
        %s3268 = scalar_lea.vmem [#allocation4], 1
        %v3269 = vld [vmem:[%s3268] ss:$2 sm:$0xff]
        %s3270 = scalar_lea.vmem [#allocation4], 17
        %v3271 = vld [vmem:[%s3270] ss:$2 sm:$0xff]
        %s3272 = scalar_lea.vmem [#allocation4], 33
        %v3273 = vld [vmem:[%s3272] ss:$2 sm:$0xff]
        %s3274 = scalar_lea.vmem [#allocation4], 49
        %v3275 = vld [vmem:[%s3274] ss:$2 sm:$0xff]
        %s3276 = scalar_lea.vmem [#allocation4], 65
        %v3277 = vld [vmem:[%s3276] ss:$2 sm:$0xff]
        %s3278 = scalar_lea.vmem [#allocation4], 81
        %v3279 = vld [vmem:[%s3278] ss:$2 sm:$0xff]
        %s3280 = scalar_lea.vmem [#allocation4], 97
        %v3281 = vld [vmem:[%s3280] ss:$2 sm:$0xff]
        %s3282 = scalar_lea.vmem [#allocation4], 113
        %v3283 = vld [vmem:[%s3282] ss:$2 sm:$0xff]
        %s3284 = scalar_lea.vmem [#allocation4], 129
        %v3285 = vld [vmem:[%s3284] ss:$2 sm:$0xff]
        %s3286 = scalar_lea.vmem [#allocation4], 145
        %v3287 = vld [vmem:[%s3286] ss:$2 sm:$0xff]
        %s3288 = scalar_lea.vmem [#allocation4], 161
        %v3289 = vld [vmem:[%s3288] ss:$2 sm:$0xff]
        %s3290 = scalar_lea.vmem [#allocation4], 177
        %v3291 = vld [vmem:[%s3290] ss:$2 sm:$0xff]
        %s3292 = scalar_lea.vmem [#allocation4], 193
        %v3293 = vld [vmem:[%s3292] ss:$2 sm:$0xff]
        %s3294 = scalar_lea.vmem [#allocation4], 209
        %v3295 = vld [vmem:[%s3294] ss:$2 sm:$0xff]
        %s3296 = scalar_lea.vmem [#allocation4], 225
        %v3297 = vld [vmem:[%s3296] ss:$2 sm:$0xff]
        %s3298 = scalar_lea.vmem [#allocation4], 241
        %v3299 = vld [vmem:[%s3298] ss:$2 sm:$0xff]
        %v3300 = vadd.f32 %v3237, %v3269
        %v3301 = vadd.f32 %v3239, %v3271
        %v3302 = vadd.f32 %v3241, %v3273
        %v3303 = vadd.f32 %v3243, %v3275
        %v3304 = vadd.f32 %v3245, %v3277
        %v3305 = vadd.f32 %v3247, %v3279
        %v3306 = vadd.f32 %v3249, %v3281
        %v3307 = vadd.f32 %v3251, %v3283
        %v3308 = vadd.f32 %v3253, %v3285
        %v3309 = vadd.f32 %v3255, %v3287
        %v3310 = vadd.f32 %v3257, %v3289
        %v3311 = vadd.f32 %v3259, %v3291
        %v3312 = vadd.f32 %v3261, %v3293
        %v3313 = vadd.f32 %v3263, %v3295
        %v3314 = vadd.f32 %v3265, %v3297
        %v3315 = vadd.f32 %v3267, %v3299
        %v3316 = vadd.f32 %v3300, %v3301
        %v3317 = vadd.f32 %v3302, %v3303
        %v3318 = vadd.f32 %v3304, %v3305
        %v3319 = vadd.f32 %v3306, %v3307
        %v3320 = vadd.f32 %v3308, %v3309
        %v3321 = vadd.f32 %v3310, %v3311
        %v3322 = vadd.f32 %v3312, %v3313
        %v3323 = vadd.f32 %v3314, %v3315
        %v3324 = vmul.f32 %v3316, 0.25
        %v3325 = vmul.f32 %v3317, 0.25
        %v3326 = vmul.f32 %v3318, 0.25
        %v3327 = vmul.f32 %v3319, 0.25
        %v3328 = vmul.f32 %v3320, 0.25
        %v3329 = vmul.f32 %v3321, 0.25
        %v3330 = vmul.f32 %v3322, 0.25
        %v3331 = vmul.f32 %v3323, 0.25
        %v3332 = vld [vmem:[%s8] sm:$0x1]
        %v3333 = vld [vmem:[%s9] sm:$0x1]
        %v3334 = vadd.f32 %v3324, %v3325
        %v3335 = vadd.f32 %v3334, %v3326
        %v3336 = vadd.f32 %v3335, %v3327
        %v3337 = vadd.f32 %v3336, %v3328
        %v3338 = vadd.f32 %v3337, %v3329
        %v3339 = vadd.f32 %v3338, %v3330
        %v3340 = vadd.f32 %v3339, %v3331
        %v3341 = vrot.slane %v3340, 4
        %v3342 = vadd.f32 %v3340, %v3341
        %v3343 = vrot.slane %v3342, 2
        %v3344 = vadd.f32 %v3342, %v3343
        %v3345 = vrot.slane %v3344, 1
        %v3346 = vadd.f32 %v3344, %v3345
        %v3347 = vmul.f32 %v3346, 0.015625
        %v3348 = vmul.f32 %v3324, %v3324
        %v3349 = vmul.f32 %v3325, %v3325
        %v3350 = vmul.f32 %v3326, %v3326
        %v3351 = vmul.f32 %v3327, %v3327
        %v3352 = vmul.f32 %v3328, %v3328
        %v3353 = vmul.f32 %v3329, %v3329
        %v3354 = vmul.f32 %v3330, %v3330
        %v3355 = vmul.f32 %v3331, %v3331
        %v3356 = vadd.f32 %v3348, %v3349
        %v3357 = vadd.f32 %v3356, %v3350
        %v3358 = vadd.f32 %v3357, %v3351
        %v3359 = vadd.f32 %v3358, %v3352
        %v3360 = vadd.f32 %v3359, %v3353
        %v3361 = vadd.f32 %v3360, %v3354
        %v3362 = vadd.f32 %v3361, %v3355
        %v3363 = vrot.slane %v3362, 4
        %v3364 = vadd.f32 %v3362, %v3363
        %v3365 = vrot.slane %v3364, 2
        %v3366 = vadd.f32 %v3364, %v3365
        %v3367 = vrot.slane %v3366, 1
        %v3368 = vadd.f32 %v3366, %v3367
        %v3369 = vmul.f32 %v3368, 0.015625
        %v3370 = vmul.f32 %v3347, %v3347
        %v3371 = vsub.f32 %v3369, %v3370
        %v3372 = vmax.f32 %v3371, 0.0
        %v3373 = vadd.f32 %v3372, 1e-05
        %v3374 = vrsqrt.pop %v3373
        %v3375 = vsub.f32 %v3324, %v3347
        %v3376 = vsub.f32 %v3325, %v3347
        %v3377 = vsub.f32 %v3326, %v3347
        %v3378 = vsub.f32 %v3327, %v3347
        %v3379 = vsub.f32 %v3328, %v3347
        %v3380 = vsub.f32 %v3329, %v3347
        %v3381 = vsub.f32 %v3330, %v3347
        %v3382 = vsub.f32 %v3331, %v3347
        %v3383 = vmul.f32 %v3374, %v3332
        %v3384 = vlaneseq
        %v3385 = vshrl.u32 %v3384, 7
        %v3386 = vsub.s32 0, %v3385
        %v3387 = vrot.slane %v3383, %v3386
        %v3388 = vmul.f32 %v3375, %v3387
        %v3389 = vmul.f32 %v3376, %v3387
        %v3390 = vmul.f32 %v3377, %v3387
        %v3391 = vmul.f32 %v3378, %v3387
        %v3392 = vmul.f32 %v3379, %v3387
        %v3393 = vmul.f32 %v3380, %v3387
        %v3394 = vmul.f32 %v3381, %v3387
        %v3395 = vmul.f32 %v3382, %v3387
        %v3397 = vlaneseq
        %v3398 = vshrl.u32 %v3397, 7
        %v3399 = vsub.s32 0, %v3398
        %v3400 = vrot.slane %v3333, %v3399
        %v3402 = vadd.f32 %v3388, %v3400
        %v3403 = vadd.f32 %v3389, %v3400
        %v3404 = vadd.f32 %v3390, %v3400
        %v3405 = vadd.f32 %v3391, %v3400
        %v3406 = vadd.f32 %v3392, %v3400
        %v3407 = vadd.f32 %v3393, %v3400
        %v3408 = vadd.f32 %v3394, %v3400
        %v3409 = vadd.f32 %v3395, %v3400
        %v3410 = vmul.f32 %v3402, 0.2
        %v3411 = vmul.f32 %v3403, 0.2
        %v3412 = vmul.f32 %v3404, 0.2
        %v3413 = vmul.f32 %v3405, 0.2
        %v3414 = vmul.f32 %v3406, 0.2
        %v3415 = vmul.f32 %v3407, 0.2
        %v3416 = vmul.f32 %v3408, 0.2
        %v3417 = vmul.f32 %v3409, 0.2
        %v3418 = vmax.f32 %v3402, %v3410
        %v3419 = vmax.f32 %v3403, %v3411
        %v3420 = vmax.f32 %v3404, %v3412
        %v3421 = vmax.f32 %v3405, %v3413
        %v3422 = vmax.f32 %v3406, %v3414
        %v3423 = vmax.f32 %v3407, %v3415
        %v3424 = vmax.f32 %v3408, %v3416
        %v3425 = vmax.f32 %v3409, %v3417
        %vm3426 = vcmask 1044480
        %vm3427 = vsmask.f32 4352
        %vm3428 = vmand %vm3426, %vm3427
        %v3429 = vld [vmem:[#allocation3] sm:$0x1f]
        %v3430 = vsel %vm3428, 0, %v3429
        %3431 = vst [vmem:[#allocation3] sm:$0x1f] %v3430
        %v3432 = vld [vmem:[#allocation3 + $0x8] sm:$0x1f]
        %v3433 = vsel %vm3428, 0, %v3432
        %3434 = vst [vmem:[#allocation3 + $0x8] sm:$0x1f] %v3433
        %v3435 = vld [vmem:[#allocation3 + $0x10] sm:$0x1f]
        %v3436 = vsel %vm3428, 0, %v3435
        %3437 = vst [vmem:[#allocation3 + $0x10] sm:$0x1f] %v3436
        %vm3438 = vcmask 1047555
        %vm3439 = vsmask.f32 7950
        %vm3440 = vmand %vm3438, %vm3439
        %v3441 = vld [vmem:[#allocation3 + $0x60] sm:$0xf8]
        %v3442 = vsel %vm3440, 0, %v3441
        %3443 = vst [vmem:[#allocation3 + $0x60] sm:$0xf8] %v3442
        %v3444 = vld [vmem:[#allocation3 + $0x68] sm:$0xf8]
        %v3445 = vsel %vm3440, 0, %v3444
        %3446 = vst [vmem:[#allocation3 + $0x68] sm:$0xf8] %v3445
        %v3447 = vld [vmem:[#allocation3 + $0x70] sm:$0xf8]
        %v3448 = vsel %vm3440, 0, %v3447
        %3449 = vst [vmem:[#allocation3 + $0x70] sm:$0xf8] %v3448
        %v3450 = vand.u32 %v772, 7
        %v3451 = vand.u32 %v773, 7
        %v3452 = vand.u32 %v774, 7
        %v3453 = vand.u32 %v775, 7
        %v3454 = vand.u32 %v776, 7
        %v3455 = vand.u32 %v777, 7
        %v3456 = vand.u32 %v778, 7
        %v3457 = vand.u32 %v779, 7
        %v3458 = vpack.c.bf16 %v3419, %v3418
        %v3459 = vpack.c.bf16 %v3421, %v3420
        %v3460 = vpack.c.bf16 %v3423, %v3422
        %v3461 = vpack.c.bf16 %v3425, %v3424
        %vm3462 = vcmp.lt.s32.totalorder %v3450, 7
        %vm3463 = vcmp.lt.s32.totalorder %v3451, 7
        %vm3464 = vcmp.lt.s32.totalorder %v3452, 7
        %vm3465 = vcmp.lt.s32.totalorder %v3453, 7
        %vm3466 = vcmp.lt.s32.totalorder %v3454, 7
        %vm3467 = vcmp.lt.s32.totalorder %v3455, 7
        %vm3468 = vcmp.lt.s32.totalorder %v3456, 7
        %vm3469 = vcmp.lt.s32.totalorder %v3457, 7
        %v3470 = vsel %vm3462, 1, 0
        %v3471 = vsel %vm3463, 1, 0
        %v3472 = vsel %vm3464, 1, 0
        %v3473 = vsel %vm3465, 1, 0
        %v3474 = vsel %vm3466, 1, 0
        %v3475 = vsel %vm3467, 1, 0
        %v3476 = vsel %vm3468, 1, 0
        %v3477 = vsel %vm3469, 1, 0
        %vm3478 = vcmp.eq.s32.totalorder %v3470, 1
        %vm3479 = vcmp.eq.s32.totalorder %v3471, 1
        %vm3480 = vcmp.eq.s32.totalorder %v3472, 1
        %vm3481 = vcmp.eq.s32.totalorder %v3473, 1
        %vm3482 = vcmp.eq.s32.totalorder %v3474, 1
        %vm3483 = vcmp.eq.s32.totalorder %v3475, 1
        %vm3484 = vcmp.eq.s32.totalorder %v3476, 1
        %vm3485 = vcmp.eq.s32.totalorder %v3477, 1
        %v3486 = vsel %vm3478, %v3418, 0.0
        %v3487 = vsel %vm3479, %v3419, 0.0
        %v3488 = vsel %vm3480, %v3420, 0.0
        %v3489 = vsel %vm3481, %v3421, 0.0
        %v3490 = vsel %vm3482, %v3422, 0.0
        %v3491 = vsel %vm3483, %v3423, 0.0
        %v3492 = vsel %vm3484, %v3424, 0.0
        %v3493 = vsel %vm3485, %v3425, 0.0
        %v3494 = vpack.c.bf16 %v3487, %v3486
        %v3495 = vpack.c.bf16 %v3489, %v3488
        %v3496 = vpack.c.bf16 %v3491, %v3490
        %v3497 = vpack.c.bf16 %v3493, %v3492
        %vm3498 = vcmp.gt.s32.totalorder %v3450, 0
        %vm3499 = vcmp.gt.s32.totalorder %v3451, 0
        %vm3500 = vcmp.gt.s32.totalorder %v3452, 0
        %vm3501 = vcmp.gt.s32.totalorder %v3453, 0
        %vm3502 = vcmp.gt.s32.totalorder %v3454, 0
        %vm3503 = vcmp.gt.s32.totalorder %v3455, 0
        %vm3504 = vcmp.gt.s32.totalorder %v3456, 0
        %vm3505 = vcmp.gt.s32.totalorder %v3457, 0
        %v3506 = vsel %vm3498, 1, 0
        %v3507 = vsel %vm3499, 1, 0
        %v3508 = vsel %vm3500, 1, 0
        %v3509 = vsel %vm3501, 1, 0
        %v3510 = vsel %vm3502, 1, 0
        %v3511 = vsel %vm3503, 1, 0
        %v3512 = vsel %vm3504, 1, 0
        %v3513 = vsel %vm3505, 1, 0
        %vm3514 = vcmp.eq.s32.totalorder %v3506, 1
        %vm3515 = vcmp.eq.s32.totalorder %v3507, 1
        %vm3516 = vcmp.eq.s32.totalorder %v3508, 1
        %vm3517 = vcmp.eq.s32.totalorder %v3509, 1
        %vm3518 = vcmp.eq.s32.totalorder %v3510, 1
        %vm3519 = vcmp.eq.s32.totalorder %v3511, 1
        %vm3520 = vcmp.eq.s32.totalorder %v3512, 1
        %vm3521 = vcmp.eq.s32.totalorder %v3513, 1
        %v3522 = vsel %vm3514, %v3418, 0.0
        %v3523 = vsel %vm3515, %v3419, 0.0
        %v3524 = vsel %vm3516, %v3420, 0.0
        %v3525 = vsel %vm3517, %v3421, 0.0
        %v3526 = vsel %vm3518, %v3422, 0.0
        %v3527 = vsel %vm3519, %v3423, 0.0
        %v3528 = vsel %vm3520, %v3424, 0.0
        %v3529 = vsel %vm3521, %v3425, 0.0
        %v3530 = vpack.c.bf16 %v3523, %v3522
        %v3531 = vpack.c.bf16 %v3525, %v3524
        %v3532 = vpack.c.bf16 %v3527, %v3526
        %v3533 = vpack.c.bf16 %v3529, %v3528
        %vm3538 = vcmask 1043456
        %v3539 = vrot.slane %v3458, 4
        %v3540 = vrot.slane %v3459, 4
        %v3541 = vsel %vm3538, %v3539, %v3540
        %v3542 = vrot.slane %v3460, 4
        %v3543 = vsel %vm3538, %v3540, %v3542
        %v3544 = vrot.slane %v3461, 4
        %v3545 = vsel %vm3538, %v3542, %v3544
        %3551 = vst [vmem:[#allocation3 + $0x8] sm:$0xf0] %v3539
        %3552 = vst [vmem:[#allocation3 + $0x20] sm:$0xff] %v3541
        %3553 = vst [vmem:[#allocation3 + $0x38] sm:$0xff] %v3543
        %3554 = vst [vmem:[#allocation3 + $0x50] sm:$0xff] %v3545
        %3555 = vst [vmem:[#allocation3 + $0x68] sm:$0xf] %v3544
        %v3557 = vshrl.u32 %v3494, 16
        %v3559 = vrot.slane %v3557, 3
        %v3560 = vshll.u32 %v3494, 16
        %v3562 = vrot.slane %v3560, 4
        %v3563 = vor.u32 %v3559, %v3562
        %v3565 = vshrl.u32 %v3495, 16
        %v3567 = vrot.slane %v3565, 3
        %v3568 = vshll.u32 %v3495, 16
        %v3570 = vrot.slane %v3568, 4
        %v3571 = vor.u32 %v3567, %v3570
        %v3572 = vsel %vm3427, %v3563, %v3571
        %v3574 = vshrl.u32 %v3496, 16
        %v3576 = vrot.slane %v3574, 3
        %v3577 = vshll.u32 %v3496, 16
        %v3579 = vrot.slane %v3577, 4
        %v3580 = vor.u32 %v3576, %v3579
        %v3581 = vsel %vm3427, %v3571, %v3580
        %v3583 = vshrl.u32 %v3497, 16
        %v3585 = vrot.slane %v3583, 3
        %v3586 = vshll.u32 %v3497, 16
        %v3588 = vrot.slane %v3586, 4
        %v3589 = vor.u32 %v3585, %v3588
        %v3590 = vsel %vm3427, %v3580, %v3589
        %vm3596 = vcmask 1047556
        %vm3597 = vsmask.f32 7954
        %vm3598 = vmand %vm3596, %vm3597
        %v3599 = vld [vmem:[#allocation3] sm:$0xf0]
        %v3600 = vsel %vm3598, %v3563, %v3599
        %3601 = vst [vmem:[#allocation3] sm:$0xf0] %v3600
        %3602 = vst [vmem:[#allocation3 + $0x18] sm:$0xff] %v3572
        %3603 = vst [vmem:[#allocation3 + $0x30] sm:$0xff] %v3581
        %3604 = vst [vmem:[#allocation3 + $0x48] sm:$0xff] %v3590
        %v3605 = vld [vmem:[#allocation3 + $0x60] sm:$0x1f]
        %v3606 = vsel %vm3428, %v3589, %v3605
        %3607 = vst [vmem:[#allocation3 + $0x60] sm:$0x1f] %v3606
        %vm3608 = vsmask.f32 3328
        %v3610 = vshrl.u32 %v3530, 16
        %v3612 = vrot.slane %v3610, 4
        %v3613 = vshll.u32 %v3530, 16
        %v3615 = vrot.slane %v3613, 5
        %v3616 = vor.u32 %v3612, %v3615
        %v3618 = vshrl.u32 %v3531, 16
        %v3620 = vrot.slane %v3618, 4
        %v3621 = vshll.u32 %v3531, 16
        %v3623 = vrot.slane %v3621, 5
        %v3624 = vor.u32 %v3620, %v3623
        %v3625 = vsel %vm3608, %v3616, %v3624
        %v3627 = vshrl.u32 %v3532, 16
        %v3629 = vrot.slane %v3627, 4
        %v3630 = vshll.u32 %v3532, 16
        %v3632 = vrot.slane %v3630, 5
        %v3633 = vor.u32 %v3629, %v3632
        %v3634 = vsel %vm3608, %v3624, %v3633
        %v3636 = vshrl.u32 %v3533, 16
        %v3638 = vrot.slane %v3636, 4
        %v3639 = vshll.u32 %v3533, 16
        %v3641 = vrot.slane %v3639, 5
        %v3642 = vor.u32 %v3638, %v3641
        %v3643 = vsel %vm3608, %v3633, %v3642
        %v3649 = vld [vmem:[#allocation3 + $0x10] sm:$0xf8]
        %v3650 = vsel %vm3440, %v3616, %v3649
        %3651 = vst [vmem:[#allocation3 + $0x10] sm:$0xf8] %v3650
        %3652 = vst [vmem:[#allocation3 + $0x28] sm:$0xff] %v3625
        %3653 = vst [vmem:[#allocation3 + $0x40] sm:$0xff] %v3634
        %3654 = vst [vmem:[#allocation3 + $0x58] sm:$0xff] %v3643
        %vm3655 = vmand %vm3538, %vm3608
        %v3656 = vld [vmem:[#allocation3 + $0x70] sm:$0xf]
        %v3657 = vsel %vm3655, %v3642, %v3656
        %3658 = vst [vmem:[#allocation3 + $0x70] sm:$0xf] %v3657
        %v3659 = vld [vmem:[#allocation3] sm:$0xff]
        %v3660 = vld [vmem:[#allocation3 + $0x8] sm:$0xff]
        %v3661 = vld [vmem:[#allocation3 + $0x10] sm:$0xff]
        %v3662 = vld [vmem:[#allocation3 + $0x18] sm:$0xff]
        %v3663 = vld [vmem:[#allocation3 + $0x20] sm:$0xff]
        %v3664 = vld [vmem:[#allocation3 + $0x28] sm:$0xff]
        %v3665 = vld [vmem:[#allocation3 + $0x30] sm:$0xff]
        %v3666 = vld [vmem:[#allocation3 + $0x38] sm:$0xff]
        %v3667 = vld [vmem:[#allocation3 + $0x40] sm:$0xff]
        %v3668 = vld [vmem:[#allocation3 + $0x48] sm:$0xff]
        %v3669 = vld [vmem:[#allocation3 + $0x50] sm:$0xff]
        %v3670 = vld [vmem:[#allocation3 + $0x58] sm:$0xff]
        %v3671 = vld [vmem:[#allocation10] sm:$0xf]
        %v3672 = vld [vmem:[#allocation10 + $0x4] sm:$0xf]
        %v3673 = vld [vmem:[#allocation10 + $0x8] sm:$0xf]
        %v3674 = vld [vmem:[#allocation10 + $0xc] sm:$0xf]
        %v3675 = vld [vmem:[#allocation10 + $0x10] sm:$0xf]
        %v3676 = vld [vmem:[#allocation10 + $0x14] sm:$0xf]
        %v3677 = vld [vmem:[#allocation10 + $0x18] sm:$0xf]
        %v3678 = vld [vmem:[#allocation10 + $0x1c] sm:$0xf]
        %v3679 = vld [vmem:[#allocation10 + $0x20] sm:$0xf]
        %v3680 = vld [vmem:[#allocation10 + $0x24] sm:$0xf]
        %v3681 = vld [vmem:[#allocation10 + $0x28] sm:$0xf]
        %v3682 = vld [vmem:[#allocation10 + $0x2c] sm:$0xf]
        %v3683 = vld [vmem:[#allocation10 + $0x30] sm:$0xf]
        %v3684 = vld [vmem:[#allocation10 + $0x34] sm:$0xf]
        %v3685 = vld [vmem:[#allocation10 + $0x38] sm:$0xf]
        %v3686 = vld [vmem:[#allocation10 + $0x3c] sm:$0xf]
        %v3687 = vld [vmem:[#allocation10 + $0x40] sm:$0xf]
        %v3688 = vld [vmem:[#allocation10 + $0x44] sm:$0xf]
        %v3689 = vld [vmem:[#allocation10 + $0x48] sm:$0xf]
        %v3690 = vld [vmem:[#allocation10 + $0x4c] sm:$0xf]
        %v3691 = vld [vmem:[#allocation10 + $0x50] sm:$0xf]
        %v3692 = vld [vmem:[#allocation10 + $0x54] sm:$0xf]
        %v3693 = vld [vmem:[#allocation10 + $0x58] sm:$0xf]
        %v3694 = vld [vmem:[#allocation10 + $0x5c] sm:$0xf]
        %v3695 = vld [vmem:[#allocation10 + $0x60] sm:$0xf]
        %v3696 = vld [vmem:[#allocation10 + $0x64] sm:$0xf]
        %v3697 = vld [vmem:[#allocation10 + $0x68] sm:$0xf]
        %v3698 = vld [vmem:[#allocation10 + $0x6c] sm:$0xf]
        %v3699 = vld [vmem:[#allocation10 + $0x70] sm:$0xf]
        %v3700 = vld [vmem:[#allocation10 + $0x74] sm:$0xf]
        %v3701 = vld [vmem:[#allocation10 + $0x78] sm:$0xf]
        %v3702 = vld [vmem:[#allocation10 + $0x7c] sm:$0xf]
        %v3703 = vld [vmem:[#allocation10 + $0x80] sm:$0xf]
        %v3704 = vld [vmem:[#allocation10 + $0x84] sm:$0xf]
        %v3705 = vld [vmem:[#allocation10 + $0x88] sm:$0xf]
        %v3706 = vld [vmem:[#allocation10 + $0x8c] sm:$0xf]
        %v3707 = vld [vmem:[#allocation10 + $0x90] sm:$0xf]
        %v3708 = vld [vmem:[#allocation10 + $0x94] sm:$0xf]
        %v3709 = vld [vmem:[#allocation10 + $0x98] sm:$0xf]
        %v3710 = vld [vmem:[#allocation10 + $0x9c] sm:$0xf]
        %v3711 = vld [vmem:[#allocation10 + $0xa0] sm:$0xf]
        %v3712 = vld [vmem:[#allocation10 + $0xa4] sm:$0xf]
        %v3713 = vld [vmem:[#allocation10 + $0xa8] sm:$0xf]
        %v3714 = vld [vmem:[#allocation10 + $0xac] sm:$0xf]
        %v3715 = vld [vmem:[#allocation10 + $0xb0] sm:$0xf]
        %v3716 = vld [vmem:[#allocation10 + $0xb4] sm:$0xf]
        %v3717 = vld [vmem:[#allocation10 + $0xb8] sm:$0xf]
        %v3718 = vld [vmem:[#allocation10 + $0xbc] sm:$0xf]
        %v3719 = vld [vmem:[#allocation3] sm:$0xf0]
        %v3720 = vld [vmem:[#allocation3 + $0x8] sm:$0xf0]
        %v3721 = vld [vmem:[#allocation3 + $0x10] sm:$0xf0]
        %v3722 = vld [vmem:[#allocation3 + $0x18] sm:$0xff]
        %v3723 = vld [vmem:[#allocation3 + $0x20] sm:$0xff]
        %v3724 = vld [vmem:[#allocation3 + $0x28] sm:$0xff]
        %v3725 = vld [vmem:[#allocation3 + $0x30] sm:$0xff]
        %v3726 = vld [vmem:[#allocation3 + $0x38] sm:$0xff]
        %v3727 = vld [vmem:[#allocation3 + $0x40] sm:$0xff]
        %v3728 = vld [vmem:[#allocation3 + $0x48] sm:$0xff]
        %v3729 = vld [vmem:[#allocation3 + $0x50] sm:$0xff]
        %v3730 = vld [vmem:[#allocation3 + $0x58] sm:$0xff]
        %v3731 = vld [vmem:[#allocation3 + $0x60] sm:$0xf]
        %v3732 = vld [vmem:[#allocation3 + $0x68] sm:$0xf]
        %v3733 = vld [vmem:[#allocation3 + $0x70] sm:$0xf]
        %s3734 = scalar_lea.vmem [#allocation10], 192
        %v3735 = vld [vmem:[%s3734] sm:$0xf]
        %v3736 = vld [vmem:[%s3734 + $0x4] sm:$0xf]
        %v3737 = vld [vmem:[%s3734 + $0x8] sm:$0xf]
        %v3738 = vld [vmem:[%s3734 + $0xc] sm:$0xf]
        %v3739 = vld [vmem:[%s3734 + $0x10] sm:$0xf]
        %v3740 = vld [vmem:[%s3734 + $0x14] sm:$0xf]
        %v3741 = vld [vmem:[%s3734 + $0x18] sm:$0xf]
        %v3742 = vld [vmem:[%s3734 + $0x1c] sm:$0xf]
        %v3743 = vld [vmem:[%s3734 + $0x20] sm:$0xf]
        %v3744 = vld [vmem:[%s3734 + $0x24] sm:$0xf]
        %v3745 = vld [vmem:[%s3734 + $0x28] sm:$0xf]
        %v3746 = vld [vmem:[%s3734 + $0x2c] sm:$0xf]
        %v3747 = vld [vmem:[%s3734 + $0x30] sm:$0xf]
        %v3748 = vld [vmem:[%s3734 + $0x34] sm:$0xf]
        %v3749 = vld [vmem:[%s3734 + $0x38] sm:$0xf]
        %v3750 = vld [vmem:[%s3734 + $0x3c] sm:$0xf]
        %v3751 = vld [vmem:[%s3734 + $0x40] sm:$0xf]
        %v3752 = vld [vmem:[%s3734 + $0x44] sm:$0xf]
        %v3753 = vld [vmem:[%s3734 + $0x48] sm:$0xf]
        %v3754 = vld [vmem:[%s3734 + $0x4c] sm:$0xf]
        %v3755 = vld [vmem:[%s3734 + $0x50] sm:$0xf]
        %v3756 = vld [vmem:[%s3734 + $0x54] sm:$0xf]
        %v3757 = vld [vmem:[%s3734 + $0x58] sm:$0xf]
        %v3758 = vld [vmem:[%s3734 + $0x5c] sm:$0xf]
        %v3759 = vld [vmem:[%s3734 + $0x60] sm:$0xf]
        %v3760 = vld [vmem:[%s3734 + $0x64] sm:$0xf]
        %v3761 = vld [vmem:[%s3734 + $0x68] sm:$0xf]
        %v3762 = vld [vmem:[%s3734 + $0x6c] sm:$0xf]
        %v3763 = vld [vmem:[%s3734 + $0x70] sm:$0xf]
        %v3764 = vld [vmem:[%s3734 + $0x74] sm:$0xf]
        %v3765 = vld [vmem:[%s3734 + $0x78] sm:$0xf]
        %v3766 = vld [vmem:[%s3734 + $0x7c] sm:$0xf]
        %v3767 = vld [vmem:[%s3734 + $0x80] sm:$0xf]
        %v3768 = vld [vmem:[%s3734 + $0x84] sm:$0xf]
        %v3769 = vld [vmem:[%s3734 + $0x88] sm:$0xf]
        %v3770 = vld [vmem:[%s3734 + $0x8c] sm:$0xf]
        %v3771 = vld [vmem:[%s3734 + $0x90] sm:$0xf]
        %v3772 = vld [vmem:[%s3734 + $0x94] sm:$0xf]
        %v3773 = vld [vmem:[%s3734 + $0x98] sm:$0xf]
        %v3774 = vld [vmem:[%s3734 + $0x9c] sm:$0xf]
        %v3775 = vld [vmem:[%s3734 + $0xa0] sm:$0xf]
        %v3776 = vld [vmem:[%s3734 + $0xa4] sm:$0xf]
        %v3777 = vld [vmem:[%s3734 + $0xa8] sm:$0xf]
        %v3778 = vld [vmem:[%s3734 + $0xac] sm:$0xf]
        %v3779 = vld [vmem:[%s3734 + $0xb0] sm:$0xf]
        %v3780 = vld [vmem:[%s3734 + $0xb4] sm:$0xf]
        %v3781 = vld [vmem:[%s3734 + $0xb8] sm:$0xf]
        %v3782 = vld [vmem:[%s3734 + $0xbc] sm:$0xf]
        %v3798 = vrot.slane %v3719, 4
        %v3799 = vrot.slane %v3722, 4
        %v3800 = vsel %vm3538, %v3798, %v3799
        %v3801 = vrot.slane %v3720, 4
        %v3802 = vrot.slane %v3723, 4
        %v3803 = vsel %vm3538, %v3801, %v3802
        %v3804 = vrot.slane %v3721, 4
        %v3805 = vrot.slane %v3724, 4
        %v3806 = vsel %vm3538, %v3804, %v3805
        %v3807 = vrot.slane %v3725, 4
        %v3808 = vsel %vm3538, %v3799, %v3807
        %v3809 = vrot.slane %v3726, 4
        %v3810 = vsel %vm3538, %v3802, %v3809
        %v3811 = vrot.slane %v3727, 4
        %v3812 = vsel %vm3538, %v3805, %v3811
        %v3813 = vrot.slane %v3728, 4
        %v3814 = vsel %vm3538, %v3807, %v3813
        %v3815 = vrot.slane %v3729, 4
        %v3816 = vsel %vm3538, %v3809, %v3815
        %v3817 = vrot.slane %v3730, 4
        %v3818 = vsel %vm3538, %v3811, %v3817
        %v3819 = vrot.slane %v3731, 4
        %v3820 = vsel %vm3538, %v3813, %v3819
        %v3821 = vrot.slane %v3732, 4
        %v3822 = vsel %vm3538, %v3815, %v3821
        %v3823 = vrot.slane %v3733, 4
        %v3824 = vsel %vm3538, %v3817, %v3823
        %v3885 = vunpack.c.l.b16 %v3735
        %v3886 = vunpack.c.l.b16 %v3736
        %v3887 = vunpack.c.l.b16 %v3737
        %v3888 = vunpack.c.l.b16 %v3738
        %v3889 = vunpack.c.l.b16 %v3739
        %v3890 = vunpack.c.l.b16 %v3740
        %v3891 = vunpack.c.l.b16 %v3741
        %v3892 = vunpack.c.l.b16 %v3742
        %v3893 = vunpack.c.l.b16 %v3743
        %v3894 = vunpack.c.l.b16 %v3744
        %v3895 = vunpack.c.l.b16 %v3745
        %v3896 = vunpack.c.l.b16 %v3746
        %v3897 = vunpack.c.l.b16 %v3747
        %v3898 = vunpack.c.l.b16 %v3748
        %v3899 = vunpack.c.l.b16 %v3749
        %v3900 = vunpack.c.l.b16 %v3750
        %v3901 = vunpack.c.l.b16 %v3751
        %v3902 = vunpack.c.l.b16 %v3752
        %v3903 = vunpack.c.l.b16 %v3753
        %v3904 = vunpack.c.l.b16 %v3754
        %v3905 = vunpack.c.l.b16 %v3755
        %v3906 = vunpack.c.l.b16 %v3756
        %v3907 = vunpack.c.l.b16 %v3757
        %v3908 = vunpack.c.l.b16 %v3758
        %v3909 = vunpack.c.l.b16 %v3759
        %v3910 = vunpack.c.l.b16 %v3760
        %v3911 = vunpack.c.l.b16 %v3761
        %v3912 = vunpack.c.l.b16 %v3762
        %v3913 = vunpack.c.l.b16 %v3763
        %v3914 = vunpack.c.l.b16 %v3764
        %v3915 = vunpack.c.l.b16 %v3765
        %v3916 = vunpack.c.l.b16 %v3766
        %v3917 = vunpack.c.l.b16 %v3767
        %v3918 = vunpack.c.l.b16 %v3768
        %v3919 = vunpack.c.l.b16 %v3769
        %v3920 = vunpack.c.l.b16 %v3770
        %v3921 = vunpack.c.l.b16 %v3771
        %v3922 = vunpack.c.l.b16 %v3772
        %v3923 = vunpack.c.l.b16 %v3773
        %v3924 = vunpack.c.l.b16 %v3774
        %v3925 = vunpack.c.l.b16 %v3775
        %v3926 = vunpack.c.l.b16 %v3776
        %v3927 = vunpack.c.l.b16 %v3777
        %v3928 = vunpack.c.l.b16 %v3778
        %v3929 = vunpack.c.l.b16 %v3779
        %v3930 = vunpack.c.l.b16 %v3780
        %v3931 = vunpack.c.l.b16 %v3781
        %v3932 = vunpack.c.l.b16 %v3782
        %v3933 = vpack.c.b16 %v3886, %v3885
        %v3934 = vpack.c.b16 %v3888, %v3887
        %v3935 = vpack.c.b16 %v3890, %v3889
        %v3936 = vpack.c.b16 %v3892, %v3891
        %v3937 = vpack.c.b16 %v3894, %v3893
        %v3938 = vpack.c.b16 %v3896, %v3895
        %v3939 = vpack.c.b16 %v3898, %v3897
        %v3940 = vpack.c.b16 %v3900, %v3899
        %v3941 = vpack.c.b16 %v3902, %v3901
        %v3942 = vpack.c.b16 %v3904, %v3903
        %v3943 = vpack.c.b16 %v3906, %v3905
        %v3944 = vpack.c.b16 %v3908, %v3907
        %v3945 = vpack.c.b16 %v3910, %v3909
        %v3946 = vpack.c.b16 %v3912, %v3911
        %v3947 = vpack.c.b16 %v3914, %v3913
        %v3948 = vpack.c.b16 %v3916, %v3915
        %v3949 = vpack.c.b16 %v3918, %v3917
        %v3950 = vpack.c.b16 %v3920, %v3919
        %v3951 = vpack.c.b16 %v3922, %v3921
        %v3952 = vpack.c.b16 %v3924, %v3923
        %v3953 = vpack.c.b16 %v3926, %v3925
        %v3954 = vpack.c.b16 %v3928, %v3927
        %v3955 = vpack.c.b16 %v3930, %v3929
        %v3956 = vpack.c.b16 %v3932, %v3931
        %3981 = vmatprep.subr.bf16.mxu0 0
        %3982 = vmatpush1.bf16.msra.mxu0 %v3933
        %3983 = vmatprep.subr.bf16.mxu0 0
        %3984 = vmatpush1.bf16.msra.mxu0 %v3934
        %3985 = vmatprep.subr.bf16.mxu0 0
        %3986 = vmatpush1.bf16.msra.mxu0 %v3935
        %3987 = vmatprep.subr.bf16.mxu0 0
        %3988 = vmatpush1.bf16.msra.mxu0 %v3936
        %3989 = vmatprep.subr.bf16.mxu0 0
        %3990 = vmatpush1.bf16.msra.mxu0 %v3937
        %3991 = vmatprep.subr.bf16.mxu0 0
        %3992 = vmatpush1.bf16.msra.mxu0 %v3938
        %3993 = vmatprep.subr.bf16.mxu0 0
        %3994 = vmatpush1.bf16.msra.mxu0 %v3939
        %3995 = vmatprep.subr.bf16.mxu0 0
        %3996 = vmatpush1.bf16.msra.mxu0 %v3940
        %3997 = vmatprep.subr.bf16.mxu0 0
        %3998 = vmatpush1.bf16.msra.mxu0 %v3941
        %3999 = vmatprep.subr.bf16.mxu0 0
        %4000 = vmatpush1.bf16.msra.mxu0 %v3942
        %4001 = vmatprep.subr.bf16.mxu0 0
        %4002 = vmatpush1.bf16.msra.mxu0 %v3943
        %4003 = vmatprep.subr.bf16.mxu0 0
        %4004 = vmatpush1.bf16.msra.mxu0 %v3944
        %4005 = vmatprep.subr.bf16.mxu0 0
        %4006 = vmatpush1.bf16.msra.mxu0 %v3945
        %4007 = vmatprep.subr.bf16.mxu0 0
        %4008 = vmatpush1.bf16.msra.mxu0 %v3946
        %4009 = vmatprep.subr.bf16.mxu0 0
        %4010 = vmatpush1.bf16.msra.mxu0 %v3947
        %4011 = vmatprep.subr.bf16.mxu0 0
        %4012 = vmatpush1.bf16.msra.mxu0 %v3948
        %4013 = vmatprep.mubr.bf16.mxu0 %v3803
        %4014 = vmatmul.mubr.bf16.gmra.mrb[0].mxu0 %v3800
        %v4015 = vpop.f32.mrb[0].mxu0
        %v4016 = vadd.f32 0.0, %v4015
        %v4017 = vpop.f32.mrb[0].mxu0
        %v4018 = vpop.f32.mrb[0].mxu0
        %v4019 = vadd.f32 0.0, %v4018
        %v4020 = vpop.f32.mrb[0].mxu0
        %4021 = vmatprep.mubr.bf16.mxu0 %v3810
        %4022 = vmatmul.mubr.bf16.gmra.mrb[0].mxu0 %v3808
        %v4023 = vpop.f32.mrb[0].mxu0
        %v4024 = vadd.f32 0.0, %v4023
        %v4025 = vpop.f32.mrb[0].mxu0
        %v4026 = vpop.f32.mrb[0].mxu0
        %v4027 = vadd.f32 0.0, %v4026
        %v4028 = vpop.f32.mrb[0].mxu0
        %4029 = vmatprep.mubr.bf16.mxu0 %v3816
        %4030 = vmatmul.mubr.bf16.gmra.mrb[0].mxu0 %v3814
        %v4031 = vpop.f32.mrb[0].mxu0
        %v4032 = vadd.f32 0.0, %v4031
        %v4033 = vpop.f32.mrb[0].mxu0
        %v4034 = vpop.f32.mrb[0].mxu0
        %v4035 = vadd.f32 0.0, %v4034
        %v4036 = vpop.f32.mrb[0].mxu0
        %4037 = vmatprep.mubr.bf16.mxu0 %v3822
        %4038 = vmatmul.mubr.bf16.gmra.mrb[0].mxu0 %v3820
        %v4039 = vpop.f32.mrb[0].mxu0
        %v4040 = vadd.f32 0.0, %v4039
        %v4041 = vpop.f32.mrb[0].mxu0
        %v4042 = vpop.f32.mrb[0].mxu0
        %v4043 = vadd.f32 0.0, %v4042
        %v4044 = vpop.f32.mrb[0].mxu0
        %4045 = vdwg.mxu0
        %4046 = vmatprep.subr.bf16.mxu0 0
        %4047 = vmatpush1.bf16.msra.mxu0 %v3949
        %4048 = vmatprep.subr.bf16.mxu0 0
        %4049 = vmatpush1.bf16.msra.mxu0 %v3950
        %4050 = vmatprep.subr.bf16.mxu0 0
        %4051 = vmatpush1.bf16.msra.mxu0 %v3951
        %4052 = vmatprep.subr.bf16.mxu0 0
        %4053 = vmatpush1.bf16.msra.mxu0 %v3952
        %4054 = vmatprep.subr.bf16.mxu0 0
        %4055 = vmatpush1.bf16.msra.mxu0 %v3953
        %4056 = vmatprep.subr.bf16.mxu0 0
        %4057 = vmatpush1.bf16.msra.mxu0 %v3954
        %4058 = vmatprep.subr.bf16.mxu0 0
        %4059 = vmatpush1.bf16.msra.mxu0 %v3955
        %4060 = vmatprep.subr.bf16.mxu0 0
        %4061 = vmatpush1.bf16.msra.mxu0 %v3956
        %4062 = vmatprep.subr.bf16.mxu0 0
        %4063 = vmatpush1.bf16.msra.mxu0 0
        %4064 = vmatprep.subr.bf16.mxu0 0
        %4065 = vmatpush1.bf16.msra.mxu0 0
        %4066 = vmatprep.subr.bf16.mxu0 0
        %4067 = vmatpush1.bf16.msra.mxu0 0
        %4068 = vmatprep.subr.bf16.mxu0 0
        %4069 = vmatpush1.bf16.msra.mxu0 0
        %4070 = vmatprep.subr.bf16.mxu0 0
        %4071 = vmatpush1.bf16.msra.mxu0 0
        %4072 = vmatprep.subr.bf16.mxu0 0
        %4073 = vmatpush1.bf16.msra.mxu0 0
        %4074 = vmatprep.subr.bf16.mxu0 0
        %4075 = vmatpush1.bf16.msra.mxu0 0
        %4076 = vmatprep.subr.bf16.mxu0 0
        %4077 = vmatpush1.bf16.msra.mxu0 0
        %4078 = vmatprep.mubr.bf16.mxu0 0
        %4079 = vmatmul.mubr.bf16.gmra.mrb[0].mxu0 %v3806
        %v4080 = vpop.f32.mrb[0].mxu0
        %v4081 = vadd.f32 %v4016, %v4080
        %v4082 = vpop.f32.mrb[0].mxu0
        %v4083 = vpop.f32.mrb[0].mxu0
        %v4084 = vadd.f32 %v4019, %v4083
        %v4085 = vpop.f32.mrb[0].mxu0
        %4086 = vmatprep.mubr.bf16.mxu0 0
        %4087 = vmatmul.mubr.bf16.gmra.mrb[0].mxu0 %v3812
        %v4088 = vpop.f32.mrb[0].mxu0
        %v4089 = vadd.f32 %v4024, %v4088
        %v4090 = vpop.f32.mrb[0].mxu0
        %v4091 = vpop.f32.mrb[0].mxu0
        %v4092 = vadd.f32 %v4027, %v4091
        %v4093 = vpop.f32.mrb[0].mxu0
        %4094 = vmatprep.mubr.bf16.mxu0 0
        %4095 = vmatmul.mubr.bf16.gmra.mrb[0].mxu0 %v3818
        %v4096 = vpop.f32.mrb[0].mxu0
        %v4097 = vadd.f32 %v4032, %v4096
        %v4098 = vpop.f32.mrb[0].mxu0
        %v4099 = vpop.f32.mrb[0].mxu0
        %v4100 = vadd.f32 %v4035, %v4099
        %v4101 = vpop.f32.mrb[0].mxu0
        %4102 = vmatprep.mubr.bf16.mxu0 0
        %4103 = vmatmul.mubr.bf16.gmra.mrb[0].mxu0 %v3824
        %v4104 = vpop.f32.mrb[0].mxu0
        %v4105 = vadd.f32 %v4040, %v4104
        %v4106 = vpop.f32.mrb[0].mxu0
        %v4107 = vpop.f32.mrb[0].mxu0
        %v4108 = vadd.f32 %v4043, %v4107
        %v4109 = vpop.f32.mrb[0].mxu0
        %4110 = vdwg.mxu0
        %v4159 = vunpack.c.l.b16 %v3671
        %v4160 = vunpack.c.l.b16 %v3672
        %v4161 = vunpack.c.l.b16 %v3673
        %v4162 = vunpack.c.l.b16 %v3674
        %v4163 = vunpack.c.l.b16 %v3675
        %v4164 = vunpack.c.l.b16 %v3676
        %v4165 = vunpack.c.l.b16 %v3677
        %v4166 = vunpack.c.l.b16 %v3678
        %v4167 = vunpack.c.l.b16 %v3679
        %v4168 = vunpack.c.l.b16 %v3680
        %v4169 = vunpack.c.l.b16 %v3681
        %v4170 = vunpack.c.l.b16 %v3682
        %v4171 = vunpack.c.l.b16 %v3683
        %v4172 = vunpack.c.l.b16 %v3684
        %v4173 = vunpack.c.l.b16 %v3685
        %v4174 = vunpack.c.l.b16 %v3686
        %v4175 = vunpack.c.l.b16 %v3687
        %v4176 = vunpack.c.l.b16 %v3688
        %v4177 = vunpack.c.l.b16 %v3689
        %v4178 = vunpack.c.l.b16 %v3690
        %v4179 = vunpack.c.l.b16 %v3691
        %v4180 = vunpack.c.l.b16 %v3692
        %v4181 = vunpack.c.l.b16 %v3693
        %v4182 = vunpack.c.l.b16 %v3694
        %v4183 = vunpack.c.l.b16 %v3695
        %v4184 = vunpack.c.l.b16 %v3696
        %v4185 = vunpack.c.l.b16 %v3697
        %v4186 = vunpack.c.l.b16 %v3698
        %v4187 = vunpack.c.l.b16 %v3699
        %v4188 = vunpack.c.l.b16 %v3700
        %v4189 = vunpack.c.l.b16 %v3701
        %v4190 = vunpack.c.l.b16 %v3702
        %v4191 = vunpack.c.l.b16 %v3703
        %v4192 = vunpack.c.l.b16 %v3704
        %v4193 = vunpack.c.l.b16 %v3705
        %v4194 = vunpack.c.l.b16 %v3706
        %v4195 = vunpack.c.l.b16 %v3707
        %v4196 = vunpack.c.l.b16 %v3708
        %v4197 = vunpack.c.l.b16 %v3709
        %v4198 = vunpack.c.l.b16 %v3710
        %v4199 = vunpack.c.l.b16 %v3711
        %v4200 = vunpack.c.l.b16 %v3712
        %v4201 = vunpack.c.l.b16 %v3713
        %v4202 = vunpack.c.l.b16 %v3714
        %v4203 = vunpack.c.l.b16 %v3715
        %v4204 = vunpack.c.l.b16 %v3716
        %v4205 = vunpack.c.l.b16 %v3717
        %v4206 = vunpack.c.l.b16 %v3718
        %v4207 = vpack.c.b16 %v4160, %v4159
        %v4208 = vpack.c.b16 %v4162, %v4161
        %v4209 = vpack.c.b16 %v4164, %v4163
        %v4210 = vpack.c.b16 %v4166, %v4165
        %v4211 = vpack.c.b16 %v4168, %v4167
        %v4212 = vpack.c.b16 %v4170, %v4169
        %v4213 = vpack.c.b16 %v4172, %v4171
        %v4214 = vpack.c.b16 %v4174, %v4173
        %v4215 = vpack.c.b16 %v4176, %v4175
        %v4216 = vpack.c.b16 %v4178, %v4177
        %v4217 = vpack.c.b16 %v4180, %v4179
        %v4218 = vpack.c.b16 %v4182, %v4181
        %v4219 = vpack.c.b16 %v4184, %v4183
        %v4220 = vpack.c.b16 %v4186, %v4185
        %v4221 = vpack.c.b16 %v4188, %v4187
        %v4222 = vpack.c.b16 %v4190, %v4189
        %v4223 = vpack.c.b16 %v4192, %v4191
        %v4224 = vpack.c.b16 %v4194, %v4193
        %v4225 = vpack.c.b16 %v4196, %v4195
        %v4226 = vpack.c.b16 %v4198, %v4197
        %v4227 = vpack.c.b16 %v4200, %v4199
        %v4228 = vpack.c.b16 %v4202, %v4201
        %v4229 = vpack.c.b16 %v4204, %v4203
        %v4230 = vpack.c.b16 %v4206, %v4205
        %4255 = vmatprep.subr.bf16.mxu0 0
        %4256 = vmatpush1.bf16.msra.mxu0 %v4207
        %4257 = vmatprep.subr.bf16.mxu0 0
        %4258 = vmatpush1.bf16.msra.mxu0 %v4208
        %4259 = vmatprep.subr.bf16.mxu0 0
        %4260 = vmatpush1.bf16.msra.mxu0 %v4209
        %4261 = vmatprep.subr.bf16.mxu0 0
        %4262 = vmatpush1.bf16.msra.mxu0 %v4210
        %4263 = vmatprep.subr.bf16.mxu0 0
        %4264 = vmatpush1.bf16.msra.mxu0 %v4211
        %4265 = vmatprep.subr.bf16.mxu0 0
        %4266 = vmatpush1.bf16.msra.mxu0 %v4212
        %4267 = vmatprep.subr.bf16.mxu0 0
        %4268 = vmatpush1.bf16.msra.mxu0 %v4213
        %4269 = vmatprep.subr.bf16.mxu0 0
        %4270 = vmatpush1.bf16.msra.mxu0 %v4214
        %4271 = vmatprep.subr.bf16.mxu0 0
        %4272 = vmatpush1.bf16.msra.mxu0 %v4215
        %4273 = vmatprep.subr.bf16.mxu0 0
        %4274 = vmatpush1.bf16.msra.mxu0 %v4216
        %4275 = vmatprep.subr.bf16.mxu0 0
        %4276 = vmatpush1.bf16.msra.mxu0 %v4217
        %4277 = vmatprep.subr.bf16.mxu0 0
        %4278 = vmatpush1.bf16.msra.mxu0 %v4218
        %4279 = vmatprep.subr.bf16.mxu0 0
        %4280 = vmatpush1.bf16.msra.mxu0 %v4219
        %4281 = vmatprep.subr.bf16.mxu0 0
        %4282 = vmatpush1.bf16.msra.mxu0 %v4220
        %4283 = vmatprep.subr.bf16.mxu0 0
        %4284 = vmatpush1.bf16.msra.mxu0 %v4221
        %4285 = vmatprep.subr.bf16.mxu0 0
        %4286 = vmatpush1.bf16.msra.mxu0 %v4222
        %4287 = vmatprep.mubr.bf16.mxu0 %v3660
        %4288 = vmatmul.mubr.bf16.gmra.mrb[0].mxu0 %v3659
        %v4289 = vpop.f32.mrb[0].mxu0
        %v4290 = vadd.f32 %v4081, %v4289
        %v4291 = vpop.f32.mrb[0].mxu0
        %v4292 = vpop.f32.mrb[0].mxu0
        %v4293 = vadd.f32 %v4084, %v4292
        %v4294 = vpop.f32.mrb[0].mxu0
        %4295 = vmatprep.mubr.bf16.mxu0 %v3663
        %4296 = vmatmul.mubr.bf16.gmra.mrb[0].mxu0 %v3662
        %v4297 = vpop.f32.mrb[0].mxu0
        %v4298 = vadd.f32 %v4089, %v4297
        %v4299 = vpop.f32.mrb[0].mxu0
        %v4300 = vpop.f32.mrb[0].mxu0
        %v4301 = vadd.f32 %v4092, %v4300
        %v4302 = vpop.f32.mrb[0].mxu0
        %4303 = vmatprep.mubr.bf16.mxu0 %v3666
        %4304 = vmatmul.mubr.bf16.gmra.mrb[0].mxu0 %v3665
        %v4305 = vpop.f32.mrb[0].mxu0
        %v4306 = vadd.f32 %v4097, %v4305
        %v4307 = vpop.f32.mrb[0].mxu0
        %v4308 = vpop.f32.mrb[0].mxu0
        %v4309 = vadd.f32 %v4100, %v4308
        %v4310 = vpop.f32.mrb[0].mxu0
        %4311 = vmatprep.mubr.bf16.mxu0 %v3669
        %4312 = vmatmul.mubr.bf16.gmra.mrb[0].mxu0 %v3668
        %v4313 = vpop.f32.mrb[0].mxu0
        %v4314 = vadd.f32 %v4105, %v4313
        %v4315 = vpop.f32.mrb[0].mxu0
        %v4316 = vpop.f32.mrb[0].mxu0
        %v4317 = vadd.f32 %v4108, %v4316
        %v4318 = vpop.f32.mrb[0].mxu0
        %4319 = vdwg.mxu0
        %4320 = vmatprep.subr.bf16.mxu0 0
        %4321 = vmatpush1.bf16.msra.mxu0 %v4223
        %4322 = vmatprep.subr.bf16.mxu0 0
        %4323 = vmatpush1.bf16.msra.mxu0 %v4224
        %4324 = vmatprep.subr.bf16.mxu0 0
        %4325 = vmatpush1.bf16.msra.mxu0 %v4225
        %4326 = vmatprep.subr.bf16.mxu0 0
        %4327 = vmatpush1.bf16.msra.mxu0 %v4226
        %4328 = vmatprep.subr.bf16.mxu0 0
        %4329 = vmatpush1.bf16.msra.mxu0 %v4227
        %4330 = vmatprep.subr.bf16.mxu0 0
        %4331 = vmatpush1.bf16.msra.mxu0 %v4228
        %4332 = vmatprep.subr.bf16.mxu0 0
        %4333 = vmatpush1.bf16.msra.mxu0 %v4229
        %4334 = vmatprep.subr.bf16.mxu0 0
        %4335 = vmatpush1.bf16.msra.mxu0 %v4230
        %4336 = vmatprep.subr.bf16.mxu0 0
        %4337 = vmatpush1.bf16.msra.mxu0 0
        %4338 = vmatprep.subr.bf16.mxu0 0
        %4339 = vmatpush1.bf16.msra.mxu0 0
        %4340 = vmatprep.subr.bf16.mxu0 0
        %4341 = vmatpush1.bf16.msra.mxu0 0
        %4342 = vmatprep.subr.bf16.mxu0 0
        %4343 = vmatpush1.bf16.msra.mxu0 0
        %4344 = vmatprep.subr.bf16.mxu0 0
        %4345 = vmatpush1.bf16.msra.mxu0 0
        %4346 = vmatprep.subr.bf16.mxu0 0
        %4347 = vmatpush1.bf16.msra.mxu0 0
        %4348 = vmatprep.subr.bf16.mxu0 0
        %4349 = vmatpush1.bf16.msra.mxu0 0
        %4350 = vmatprep.subr.bf16.mxu0 0
        %4351 = vmatpush1.bf16.msra.mxu0 0
        %4352 = vmatprep.mubr.bf16.mxu0 0
        %4353 = vmatmul.mubr.bf16.gmra.mrb[0].mxu0 %v3661
        %v4354 = vpop.f32.mrb[0].mxu0
        %v4355 = vadd.f32 %v4290, %v4354
        %v4356 = vpop.f32.mrb[0].mxu0
        %v4357 = vpop.f32.mrb[0].mxu0
        %v4358 = vadd.f32 %v4293, %v4357
        %v4359 = vpop.f32.mrb[0].mxu0
        %4360 = vmatprep.mubr.bf16.mxu0 0
        %4361 = vmatmul.mubr.bf16.gmra.mrb[0].mxu0 %v3664
        %v4362 = vpop.f32.mrb[0].mxu0
        %v4363 = vadd.f32 %v4298, %v4362
        %v4364 = vpop.f32.mrb[0].mxu0
        %v4365 = vpop.f32.mrb[0].mxu0
        %v4366 = vadd.f32 %v4301, %v4365
        %v4367 = vpop.f32.mrb[0].mxu0
        %4368 = vmatprep.mubr.bf16.mxu0 0
        %4369 = vmatmul.mubr.bf16.gmra.mrb[0].mxu0 %v3667
        %v4370 = vpop.f32.mrb[0].mxu0
        %v4371 = vadd.f32 %v4306, %v4370
        %v4372 = vpop.f32.mrb[0].mxu0
        %v4373 = vpop.f32.mrb[0].mxu0
        %v4374 = vadd.f32 %v4309, %v4373
        %v4375 = vpop.f32.mrb[0].mxu0
        %4376 = vmatprep.mubr.bf16.mxu0 0
        %4377 = vmatmul.mubr.bf16.gmra.mrb[0].mxu0 %v3670
        %v4378 = vpop.f32.mrb[0].mxu0
        %v4379 = vadd.f32 %v4314, %v4378
        %v4380 = vpop.f32.mrb[0].mxu0
        %v4381 = vpop.f32.mrb[0].mxu0
        %v4382 = vadd.f32 %v4317, %v4381
        %v4383 = vpop.f32.mrb[0].mxu0
        %4384 = vdwg.mxu0
        %v4385 = vld [vmem:[#allocation3 + $0x60] sm:$0xff]
        %v4386 = vld [vmem:[#allocation3 + $0x68] sm:$0xff]
        %v4387 = vld [vmem:[#allocation3 + $0x70] sm:$0xff]
        %s4388 = scalar_lea.vmem [#allocation10], 384
        %v4389 = vld [vmem:[%s4388] sm:$0xf]
        %v4390 = vld [vmem:[%s4388 + $0x4] sm:$0xf]
        %v4391 = vld [vmem:[%s4388 + $0x8] sm:$0xf]
        %v4392 = vld [vmem:[%s4388 + $0xc] sm:$0xf]
        %v4393 = vld [vmem:[%s4388 + $0x10] sm:$0xf]
        %v4394 = vld [vmem:[%s4388 + $0x14] sm:$0xf]
        %v4395 = vld [vmem:[%s4388 + $0x18] sm:$0xf]
        %v4396 = vld [vmem:[%s4388 + $0x1c] sm:$0xf]
        %v4397 = vld [vmem:[%s4388 + $0x20] sm:$0xf]
        %v4398 = vld [vmem:[%s4388 + $0x24] sm:$0xf]
        %v4399 = vld [vmem:[%s4388 + $0x28] sm:$0xf]
        %v4400 = vld [vmem:[%s4388 + $0x2c] sm:$0xf]
        %v4401 = vld [vmem:[%s4388 + $0x30] sm:$0xf]
        %v4402 = vld [vmem:[%s4388 + $0x34] sm:$0xf]
        %v4403 = vld [vmem:[%s4388 + $0x38] sm:$0xf]
        %v4404 = vld [vmem:[%s4388 + $0x3c] sm:$0xf]
        %v4405 = vld [vmem:[%s4388 + $0x40] sm:$0xf]
        %v4406 = vld [vmem:[%s4388 + $0x44] sm:$0xf]
        %v4407 = vld [vmem:[%s4388 + $0x48] sm:$0xf]
        %v4408 = vld [vmem:[%s4388 + $0x4c] sm:$0xf]
        %v4409 = vld [vmem:[%s4388 + $0x50] sm:$0xf]
        %v4410 = vld [vmem:[%s4388 + $0x54] sm:$0xf]
        %v4411 = vld [vmem:[%s4388 + $0x58] sm:$0xf]
        %v4412 = vld [vmem:[%s4388 + $0x5c] sm:$0xf]
        %v4413 = vld [vmem:[%s4388 + $0x60] sm:$0xf]
        %v4414 = vld [vmem:[%s4388 + $0x64] sm:$0xf]
        %v4415 = vld [vmem:[%s4388 + $0x68] sm:$0xf]
        %v4416 = vld [vmem:[%s4388 + $0x6c] sm:$0xf]
        %v4417 = vld [vmem:[%s4388 + $0x70] sm:$0xf]
        %v4418 = vld [vmem:[%s4388 + $0x74] sm:$0xf]
        %v4419 = vld [vmem:[%s4388 + $0x78] sm:$0xf]
        %v4420 = vld [vmem:[%s4388 + $0x7c] sm:$0xf]
        %v4421 = vld [vmem:[%s4388 + $0x80] sm:$0xf]
        %v4422 = vld [vmem:[%s4388 + $0x84] sm:$0xf]
        %v4423 = vld [vmem:[%s4388 + $0x88] sm:$0xf]
        %v4424 = vld [vmem:[%s4388 + $0x8c] sm:$0xf]
        %v4425 = vld [vmem:[%s4388 + $0x90] sm:$0xf]
        %v4426 = vld [vmem:[%s4388 + $0x94] sm:$0xf]
        %v4427 = vld [vmem:[%s4388 + $0x98] sm:$0xf]
        %v4428 = vld [vmem:[%s4388 + $0x9c] sm:$0xf]
        %v4429 = vld [vmem:[%s4388 + $0xa0] sm:$0xf]
        %v4430 = vld [vmem:[%s4388 + $0xa4] sm:$0xf]
        %v4431 = vld [vmem:[%s4388 + $0xa8] sm:$0xf]
        %v4432 = vld [vmem:[%s4388 + $0xac] sm:$0xf]
        %v4433 = vld [vmem:[%s4388 + $0xb0] sm:$0xf]
        %v4434 = vld [vmem:[%s4388 + $0xb4] sm:$0xf]
        %v4435 = vld [vmem:[%s4388 + $0xb8] sm:$0xf]
        %v4436 = vld [vmem:[%s4388 + $0xbc] sm:$0xf]
        %v4485 = vunpack.c.l.b16 %v4389
        %v4486 = vunpack.c.l.b16 %v4390
        %v4487 = vunpack.c.l.b16 %v4391
        %v4488 = vunpack.c.l.b16 %v4392
        %v4489 = vunpack.c.l.b16 %v4393
        %v4490 = vunpack.c.l.b16 %v4394
        %v4491 = vunpack.c.l.b16 %v4395
        %v4492 = vunpack.c.l.b16 %v4396
        %v4493 = vunpack.c.l.b16 %v4397
        %v4494 = vunpack.c.l.b16 %v4398
        %v4495 = vunpack.c.l.b16 %v4399
        %v4496 = vunpack.c.l.b16 %v4400
        %v4497 = vunpack.c.l.b16 %v4401
        %v4498 = vunpack.c.l.b16 %v4402
        %v4499 = vunpack.c.l.b16 %v4403
        %v4500 = vunpack.c.l.b16 %v4404
        %v4501 = vunpack.c.l.b16 %v4405
        %v4502 = vunpack.c.l.b16 %v4406
        %v4503 = vunpack.c.l.b16 %v4407
        %v4504 = vunpack.c.l.b16 %v4408
        %v4505 = vunpack.c.l.b16 %v4409
        %v4506 = vunpack.c.l.b16 %v4410
        %v4507 = vunpack.c.l.b16 %v4411
        %v4508 = vunpack.c.l.b16 %v4412
        %v4509 = vunpack.c.l.b16 %v4413
        %v4510 = vunpack.c.l.b16 %v4414
        %v4511 = vunpack.c.l.b16 %v4415
        %v4512 = vunpack.c.l.b16 %v4416
        %v4513 = vunpack.c.l.b16 %v4417
        %v4514 = vunpack.c.l.b16 %v4418
        %v4515 = vunpack.c.l.b16 %v4419
        %v4516 = vunpack.c.l.b16 %v4420
        %v4517 = vunpack.c.l.b16 %v4421
        %v4518 = vunpack.c.l.b16 %v4422
        %v4519 = vunpack.c.l.b16 %v4423
        %v4520 = vunpack.c.l.b16 %v4424
        %v4521 = vunpack.c.l.b16 %v4425
        %v4522 = vunpack.c.l.b16 %v4426
        %v4523 = vunpack.c.l.b16 %v4427
        %v4524 = vunpack.c.l.b16 %v4428
        %v4525 = vunpack.c.l.b16 %v4429
        %v4526 = vunpack.c.l.b16 %v4430
        %v4527 = vunpack.c.l.b16 %v4431
        %v4528 = vunpack.c.l.b16 %v4432
        %v4529 = vunpack.c.l.b16 %v4433
        %v4530 = vunpack.c.l.b16 %v4434
        %v4531 = vunpack.c.l.b16 %v4435
        %v4532 = vunpack.c.l.b16 %v4436
        %v4533 = vpack.c.b16 %v4486, %v4485
        %v4534 = vpack.c.b16 %v4488, %v4487
        %v4535 = vpack.c.b16 %v4490, %v4489
        %v4536 = vpack.c.b16 %v4492, %v4491
        %v4537 = vpack.c.b16 %v4494, %v4493
        %v4538 = vpack.c.b16 %v4496, %v4495
        %v4539 = vpack.c.b16 %v4498, %v4497
        %v4540 = vpack.c.b16 %v4500, %v4499
        %v4541 = vpack.c.b16 %v4502, %v4501
        %v4542 = vpack.c.b16 %v4504, %v4503
        %v4543 = vpack.c.b16 %v4506, %v4505
        %v4544 = vpack.c.b16 %v4508, %v4507
        %v4545 = vpack.c.b16 %v4510, %v4509
        %v4546 = vpack.c.b16 %v4512, %v4511
        %v4547 = vpack.c.b16 %v4514, %v4513
        %v4548 = vpack.c.b16 %v4516, %v4515
        %v4549 = vpack.c.b16 %v4518, %v4517
        %v4550 = vpack.c.b16 %v4520, %v4519
        %v4551 = vpack.c.b16 %v4522, %v4521
        %v4552 = vpack.c.b16 %v4524, %v4523
        %v4553 = vpack.c.b16 %v4526, %v4525
        %v4554 = vpack.c.b16 %v4528, %v4527
        %v4555 = vpack.c.b16 %v4530, %v4529
        %v4556 = vpack.c.b16 %v4532, %v4531
        %4581 = vmatprep.subr.bf16.mxu0 0
        %4582 = vmatpush1.bf16.msra.mxu0 %v4533
        %4583 = vmatprep.subr.bf16.mxu0 0
        %4584 = vmatpush1.bf16.msra.mxu0 %v4534
        %4585 = vmatprep.subr.bf16.mxu0 0
        %4586 = vmatpush1.bf16.msra.mxu0 %v4535
        %4587 = vmatprep.subr.bf16.mxu0 0
        %4588 = vmatpush1.bf16.msra.mxu0 %v4536
        %4589 = vmatprep.subr.bf16.mxu0 0
        %4590 = vmatpush1.bf16.msra.mxu0 %v4537
        %4591 = vmatprep.subr.bf16.mxu0 0
        %4592 = vmatpush1.bf16.msra.mxu0 %v4538
        %4593 = vmatprep.subr.bf16.mxu0 0
        %4594 = vmatpush1.bf16.msra.mxu0 %v4539
        %4595 = vmatprep.subr.bf16.mxu0 0
        %4596 = vmatpush1.bf16.msra.mxu0 %v4540
        %4597 = vmatprep.subr.bf16.mxu0 0
        %4598 = vmatpush1.bf16.msra.mxu0 %v4541
        %4599 = vmatprep.subr.bf16.mxu0 0
        %4600 = vmatpush1.bf16.msra.mxu0 %v4542
        %4601 = vmatprep.subr.bf16.mxu0 0
        %4602 = vmatpush1.bf16.msra.mxu0 %v4543
        %4603 = vmatprep.subr.bf16.mxu0 0
        %4604 = vmatpush1.bf16.msra.mxu0 %v4544
        %4605 = vmatprep.subr.bf16.mxu0 0
        %4606 = vmatpush1.bf16.msra.mxu0 %v4545
        %4607 = vmatprep.subr.bf16.mxu0 0
        %4608 = vmatpush1.bf16.msra.mxu0 %v4546
        %4609 = vmatprep.subr.bf16.mxu0 0
        %4610 = vmatpush1.bf16.msra.mxu0 %v4547
        %4611 = vmatprep.subr.bf16.mxu0 0
        %4612 = vmatpush1.bf16.msra.mxu0 %v4548
        %4613 = vmatprep.mubr.bf16.mxu0 %v3723
        %4614 = vmatmul.mubr.bf16.gmra.mrb[0].mxu0 %v3722
        %v4615 = vpop.f32.mrb[0].mxu0
        %v4616 = vadd.f32 0.0, %v4615
        %v4617 = vpop.f32.mrb[0].mxu0
        %v4618 = vpop.f32.mrb[0].mxu0
        %v4619 = vadd.f32 0.0, %v4618
        %v4620 = vpop.f32.mrb[0].mxu0
        %4621 = vmatprep.mubr.bf16.mxu0 %v3726
        %4622 = vmatmul.mubr.bf16.gmra.mrb[0].mxu0 %v3725
        %v4623 = vpop.f32.mrb[0].mxu0
        %v4624 = vadd.f32 0.0, %v4623
        %v4625 = vpop.f32.mrb[0].mxu0
        %v4626 = vpop.f32.mrb[0].mxu0
        %v4627 = vadd.f32 0.0, %v4626
        %v4628 = vpop.f32.mrb[0].mxu0
        %4629 = vmatprep.mubr.bf16.mxu0 %v3729
        %4630 = vmatmul.mubr.bf16.gmra.mrb[0].mxu0 %v3728
        %v4631 = vpop.f32.mrb[0].mxu0
        %v4632 = vadd.f32 0.0, %v4631
        %v4633 = vpop.f32.mrb[0].mxu0
        %v4634 = vpop.f32.mrb[0].mxu0
        %v4635 = vadd.f32 0.0, %v4634
        %v4636 = vpop.f32.mrb[0].mxu0
        %4637 = vmatprep.mubr.bf16.mxu0 %v4386
        %4638 = vmatmul.mubr.bf16.gmra.mrb[0].mxu0 %v4385
        %v4639 = vpop.f32.mrb[0].mxu0
        %v4640 = vadd.f32 0.0, %v4639
        %v4641 = vpop.f32.mrb[0].mxu0
        %v4642 = vpop.f32.mrb[0].mxu0
        %v4643 = vadd.f32 0.0, %v4642
        %v4644 = vpop.f32.mrb[0].mxu0
        %4645 = vdwg.mxu0
        %4646 = vmatprep.subr.bf16.mxu0 0
        %4647 = vmatpush1.bf16.msra.mxu0 %v4549
        %4648 = vmatprep.subr.bf16.mxu0 0
        %4649 = vmatpush1.bf16.msra.mxu0 %v4550
        %4650 = vmatprep.subr.bf16.mxu0 0
        %4651 = vmatpush1.bf16.msra.mxu0 %v4551
        %4652 = vmatprep.subr.bf16.mxu0 0
        %4653 = vmatpush1.bf16.msra.mxu0 %v4552
        %4654 = vmatprep.subr.bf16.mxu0 0
        %4655 = vmatpush1.bf16.msra.mxu0 %v4553
        %4656 = vmatprep.subr.bf16.mxu0 0
        %4657 = vmatpush1.bf16.msra.mxu0 %v4554
        %4658 = vmatprep.subr.bf16.mxu0 0
        %4659 = vmatpush1.bf16.msra.mxu0 %v4555
        %4660 = vmatprep.subr.bf16.mxu0 0
        %4661 = vmatpush1.bf16.msra.mxu0 %v4556
        %4662 = vmatprep.subr.bf16.mxu0 0
        %4663 = vmatpush1.bf16.msra.mxu0 0
        %4664 = vmatprep.subr.bf16.mxu0 0
        %4665 = vmatpush1.bf16.msra.mxu0 0
        %4666 = vmatprep.subr.bf16.mxu0 0
        %4667 = vmatpush1.bf16.msra.mxu0 0
        %4668 = vmatprep.subr.bf16.mxu0 0
        %4669 = vmatpush1.bf16.msra.mxu0 0
        %4670 = vmatprep.subr.bf16.mxu0 0
        %4671 = vmatpush1.bf16.msra.mxu0 0
        %4672 = vmatprep.subr.bf16.mxu0 0
        %4673 = vmatpush1.bf16.msra.mxu0 0
        %4674 = vmatprep.subr.bf16.mxu0 0
        %4675 = vmatpush1.bf16.msra.mxu0 0
        %4676 = vmatprep.subr.bf16.mxu0 0
        %4677 = vmatpush1.bf16.msra.mxu0 0
        %4678 = vmatprep.mubr.bf16.mxu0 0
        %4679 = vmatmul.mubr.bf16.gmra.mrb[0].mxu0 %v3724
        %v4680 = vpop.f32.mrb[0].mxu0
        %v4681 = vadd.f32 %v4616, %v4680
        %v4682 = vpop.f32.mrb[0].mxu0
        %v4683 = vpop.f32.mrb[0].mxu0
        %v4684 = vadd.f32 %v4619, %v4683
        %v4685 = vpop.f32.mrb[0].mxu0
        %4686 = vmatprep.mubr.bf16.mxu0 0
        %4687 = vmatmul.mubr.bf16.gmra.mrb[0].mxu0 %v3727
        %v4688 = vpop.f32.mrb[0].mxu0
        %v4689 = vadd.f32 %v4624, %v4688
        %v4690 = vpop.f32.mrb[0].mxu0
        %v4691 = vpop.f32.mrb[0].mxu0
        %v4692 = vadd.f32 %v4627, %v4691
        %v4693 = vpop.f32.mrb[0].mxu0
        %4694 = vmatprep.mubr.bf16.mxu0 0
        %4695 = vmatmul.mubr.bf16.gmra.mrb[0].mxu0 %v3730
        %v4696 = vpop.f32.mrb[0].mxu0
        %v4697 = vadd.f32 %v4632, %v4696
        %v4698 = vpop.f32.mrb[0].mxu0
        %v4699 = vpop.f32.mrb[0].mxu0
        %v4700 = vadd.f32 %v4635, %v4699
        %v4701 = vpop.f32.mrb[0].mxu0
        %4702 = vmatprep.mubr.bf16.mxu0 0
        %4703 = vmatmul.mubr.bf16.gmra.mrb[0].mxu0 %v4387
        %v4704 = vpop.f32.mrb[0].mxu0
        %v4705 = vadd.f32 %v4640, %v4704
        %v4706 = vpop.f32.mrb[0].mxu0
        %v4707 = vpop.f32.mrb[0].mxu0
        %v4708 = vadd.f32 %v4643, %v4707
        %v4709 = vpop.f32.mrb[0].mxu0
        %4710 = vdwg.mxu0
        %v4711 = vadd.f32 %v4355, %v4681
        %v4712 = vadd.f32 %v4358, %v4684
        %v4713 = vadd.f32 %v4363, %v4689
        %v4714 = vadd.f32 %v4366, %v4692
        %v4715 = vadd.f32 %v4371, %v4697
        %v4716 = vadd.f32 %v4374, %v4700
        %v4717 = vadd.f32 %v4379, %v4705
        %v4718 = vadd.f32 %v4382, %v4708
        %v4719 = vld [vmem:[%s4] sm:$0x1]
        %v4721 = vlaneseq
        %v4722 = vshrl.u32 %v4721, 7
        %v4723 = vsub.s32 0, %v4722
        %v4724 = vrot.slane %v4719, %v4723
        %v4726 = vadd.f32 %v4711, %v4724
        %v4727 = vadd.f32 %v4712, %v4724
        %v4728 = vadd.f32 %v4713, %v4724
        %v4729 = vadd.f32 %v4714, %v4724
        %v4730 = vadd.f32 %v4715, %v4724
        %v4731 = vadd.f32 %v4716, %v4724
        %v4732 = vadd.f32 %v4717, %v4724
        %v4733 = vadd.f32 %v4718, %v4724
        %v4734 = vld [vmem:[%s373] ss:$2 sm:$0xff]
        %s4735 = scalar_lea.vmem %s373, 16 [#allocation5]
        %v4736 = vld [vmem:[%s4735] ss:$2 sm:$0xff]
        %s4737 = scalar_lea.vmem %s373, 32 [#allocation5]
        %v4738 = vld [vmem:[%s4737] ss:$2 sm:$0xff]
        %s4739 = scalar_lea.vmem %s373, 48 [#allocation5]
        %v4740 = vld [vmem:[%s4739] ss:$2 sm:$0xff]
        %s4741 = scalar_lea.vmem %s373, 64 [#allocation5]
        %v4742 = vld [vmem:[%s4741] ss:$2 sm:$0xff]
        %s4743 = scalar_lea.vmem %s373, 80 [#allocation5]
        %v4744 = vld [vmem:[%s4743] ss:$2 sm:$0xff]
        %s4745 = scalar_lea.vmem %s373, 96 [#allocation5]
        %v4746 = vld [vmem:[%s4745] ss:$2 sm:$0xff]
        %s4747 = scalar_lea.vmem %s373, 112 [#allocation5]
        %v4748 = vld [vmem:[%s4747] ss:$2 sm:$0xff]
        %s4749 = scalar_lea.vmem %s373, 128 [#allocation5]
        %v4750 = vld [vmem:[%s4749] ss:$2 sm:$0xff]
        %s4751 = scalar_lea.vmem %s373, 144 [#allocation5]
        %v4752 = vld [vmem:[%s4751] ss:$2 sm:$0xff]
        %s4753 = scalar_lea.vmem %s373, 160 [#allocation5]
        %v4754 = vld [vmem:[%s4753] ss:$2 sm:$0xff]
        %s4755 = scalar_lea.vmem %s373, 176 [#allocation5]
        %v4756 = vld [vmem:[%s4755] ss:$2 sm:$0xff]
        %s4757 = scalar_lea.vmem %s373, 192 [#allocation5]
        %v4758 = vld [vmem:[%s4757] ss:$2 sm:$0xff]
        %s4759 = scalar_lea.vmem %s373, 208 [#allocation5]
        %v4760 = vld [vmem:[%s4759] ss:$2 sm:$0xff]
        %s4761 = scalar_lea.vmem %s373, 224 [#allocation5]
        %v4762 = vld [vmem:[%s4761] ss:$2 sm:$0xff]
        %s4763 = scalar_lea.vmem %s373, 240 [#allocation5]
        %v4764 = vld [vmem:[%s4763] ss:$2 sm:$0xff]
        %s4765 = scalar_lea.vmem %s373, 1 [#allocation5]
        %v4766 = vld [vmem:[%s4765] ss:$2 sm:$0xff]
        %s4767 = scalar_lea.vmem %s373, 17 [#allocation5]
        %v4768 = vld [vmem:[%s4767] ss:$2 sm:$0xff]
        %s4769 = scalar_lea.vmem %s373, 33 [#allocation5]
        %v4770 = vld [vmem:[%s4769] ss:$2 sm:$0xff]
        %s4771 = scalar_lea.vmem %s373, 49 [#allocation5]
        %v4772 = vld [vmem:[%s4771] ss:$2 sm:$0xff]
        %s4773 = scalar_lea.vmem %s373, 65 [#allocation5]
        %v4774 = vld [vmem:[%s4773] ss:$2 sm:$0xff]
        %s4775 = scalar_lea.vmem %s373, 81 [#allocation5]
        %v4776 = vld [vmem:[%s4775] ss:$2 sm:$0xff]
        %s4777 = scalar_lea.vmem %s373, 97 [#allocation5]
        %v4778 = vld [vmem:[%s4777] ss:$2 sm:$0xff]
        %s4779 = scalar_lea.vmem %s373, 113 [#allocation5]
        %v4780 = vld [vmem:[%s4779] ss:$2 sm:$0xff]
        %s4781 = scalar_lea.vmem %s373, 129 [#allocation5]
        %v4782 = vld [vmem:[%s4781] ss:$2 sm:$0xff]
        %s4783 = scalar_lea.vmem %s373, 145 [#allocation5]
        %v4784 = vld [vmem:[%s4783] ss:$2 sm:$0xff]
        %s4785 = scalar_lea.vmem %s373, 161 [#allocation5]
        %v4786 = vld [vmem:[%s4785] ss:$2 sm:$0xff]
        %s4787 = scalar_lea.vmem %s373, 177 [#allocation5]
        %v4788 = vld [vmem:[%s4787] ss:$2 sm:$0xff]
        %s4789 = scalar_lea.vmem %s373, 193 [#allocation5]
        %v4790 = vld [vmem:[%s4789] ss:$2 sm:$0xff]
        %s4791 = scalar_lea.vmem %s373, 209 [#allocation5]
        %v4792 = vld [vmem:[%s4791] ss:$2 sm:$0xff]
        %s4793 = scalar_lea.vmem %s373, 225 [#allocation5]
        %v4794 = vld [vmem:[%s4793] ss:$2 sm:$0xff]
        %s4795 = scalar_lea.vmem %s373, 241 [#allocation5]
        %v4796 = vld [vmem:[%s4795] ss:$2 sm:$0xff]
        %v4797 = vadd.f32 %v4734, %v4766
        %v4798 = vadd.f32 %v4736, %v4768
        %v4799 = vadd.f32 %v4738, %v4770
        %v4800 = vadd.f32 %v4740, %v4772
        %v4801 = vadd.f32 %v4742, %v4774
        %v4802 = vadd.f32 %v4744, %v4776
        %v4803 = vadd.f32 %v4746, %v4778
        %v4804 = vadd.f32 %v4748, %v4780
        %v4805 = vadd.f32 %v4750, %v4782
        %v4806 = vadd.f32 %v4752, %v4784
        %v4807 = vadd.f32 %v4754, %v4786
        %v4808 = vadd.f32 %v4756, %v4788
        %v4809 = vadd.f32 %v4758, %v4790
        %v4810 = vadd.f32 %v4760, %v4792
        %v4811 = vadd.f32 %v4762, %v4794
        %v4812 = vadd.f32 %v4764, %v4796
        %v4813 = vadd.f32 %v4797, %v4798
        %v4814 = vadd.f32 %v4799, %v4800
        %v4815 = vadd.f32 %v4801, %v4802
        %v4816 = vadd.f32 %v4803, %v4804
        %v4817 = vadd.f32 %v4805, %v4806
        %v4818 = vadd.f32 %v4807, %v4808
        %v4819 = vadd.f32 %v4809, %v4810
        %v4820 = vadd.f32 %v4811, %v4812
        %v4821 = vmul.f32 %v4813, 0.25
        %v4822 = vmul.f32 %v4814, 0.25
        %v4823 = vmul.f32 %v4815, 0.25
        %v4824 = vmul.f32 %v4816, 0.25
        %v4825 = vmul.f32 %v4817, 0.25
        %v4826 = vmul.f32 %v4818, 0.25
        %v4827 = vmul.f32 %v4819, 0.25
        %v4828 = vmul.f32 %v4820, 0.25
        %v4829 = vpack.c.bf16 %v4822, %v4821
        %v4830 = vpack.c.bf16 %v4824, %v4823
        %v4831 = vpack.c.bf16 %v4826, %v4825
        %v4832 = vpack.c.bf16 %v4828, %v4827
        %v4833 = vld [vmem:[#allocation11] sm:$0xf]
        %v4834 = vld [vmem:[#allocation11 + $0x4] sm:$0xf]
        %v4835 = vld [vmem:[#allocation11 + $0x8] sm:$0xf]
        %v4836 = vld [vmem:[#allocation11 + $0xc] sm:$0xf]
        %v4837 = vld [vmem:[#allocation11 + $0x10] sm:$0xf]
        %v4838 = vld [vmem:[#allocation11 + $0x14] sm:$0xf]
        %v4839 = vld [vmem:[#allocation11 + $0x18] sm:$0xf]
        %v4840 = vld [vmem:[#allocation11 + $0x1c] sm:$0xf]
        %v4841 = vld [vmem:[#allocation11 + $0x20] sm:$0xf]
        %v4842 = vld [vmem:[#allocation11 + $0x24] sm:$0xf]
        %v4843 = vld [vmem:[#allocation11 + $0x28] sm:$0xf]
        %v4844 = vld [vmem:[#allocation11 + $0x2c] sm:$0xf]
        %v4845 = vld [vmem:[#allocation11 + $0x30] sm:$0xf]
        %v4846 = vld [vmem:[#allocation11 + $0x34] sm:$0xf]
        %v4847 = vld [vmem:[#allocation11 + $0x38] sm:$0xf]
        %v4848 = vld [vmem:[#allocation11 + $0x3c] sm:$0xf]
        %v4865 = vunpack.c.l.b16 %v4833
        %v4866 = vunpack.c.l.b16 %v4834
        %v4867 = vunpack.c.l.b16 %v4835
        %v4868 = vunpack.c.l.b16 %v4836
        %v4869 = vunpack.c.l.b16 %v4837
        %v4870 = vunpack.c.l.b16 %v4838
        %v4871 = vunpack.c.l.b16 %v4839
        %v4872 = vunpack.c.l.b16 %v4840
        %v4873 = vunpack.c.l.b16 %v4841
        %v4874 = vunpack.c.l.b16 %v4842
        %v4875 = vunpack.c.l.b16 %v4843
        %v4876 = vunpack.c.l.b16 %v4844
        %v4877 = vunpack.c.l.b16 %v4845
        %v4878 = vunpack.c.l.b16 %v4846
        %v4879 = vunpack.c.l.b16 %v4847
        %v4880 = vunpack.c.l.b16 %v4848
        %v4881 = vpack.c.b16 %v4866, %v4865
        %v4882 = vpack.c.b16 %v4868, %v4867
        %v4883 = vpack.c.b16 %v4870, %v4869
        %v4884 = vpack.c.b16 %v4872, %v4871
        %v4885 = vpack.c.b16 %v4874, %v4873
        %v4886 = vpack.c.b16 %v4876, %v4875
        %v4887 = vpack.c.b16 %v4878, %v4877
        %v4888 = vpack.c.b16 %v4880, %v4879
        %4897 = vmatprep.subr.bf16.mxu0 0
        %4898 = vmatpush1.bf16.msra.mxu0 %v4881
        %4899 = vmatprep.subr.bf16.mxu0 0
        %4900 = vmatpush1.bf16.msra.mxu0 %v4882
        %4901 = vmatprep.subr.bf16.mxu0 0
        %4902 = vmatpush1.bf16.msra.mxu0 %v4883
        %4903 = vmatprep.subr.bf16.mxu0 0
        %4904 = vmatpush1.bf16.msra.mxu0 %v4884
        %4905 = vmatprep.subr.bf16.mxu0 0
        %4906 = vmatpush1.bf16.msra.mxu0 %v4885
        %4907 = vmatprep.subr.bf16.mxu0 0
        %4908 = vmatpush1.bf16.msra.mxu0 %v4886
        %4909 = vmatprep.subr.bf16.mxu0 0
        %4910 = vmatpush1.bf16.msra.mxu0 %v4887
        %4911 = vmatprep.subr.bf16.mxu0 0
        %4912 = vmatpush1.bf16.msra.mxu0 %v4888
        %4913 = vmatprep.subr.bf16.mxu0 0
        %4914 = vmatpush1.bf16.msra.mxu0 0
        %4915 = vmatprep.subr.bf16.mxu0 0
        %4916 = vmatpush1.bf16.msra.mxu0 0
        %4917 = vmatprep.subr.bf16.mxu0 0
        %4918 = vmatpush1.bf16.msra.mxu0 0
        %4919 = vmatprep.subr.bf16.mxu0 0
        %4920 = vmatpush1.bf16.msra.mxu0 0
        %4921 = vmatprep.subr.bf16.mxu0 0
        %4922 = vmatpush1.bf16.msra.mxu0 0
        %4923 = vmatprep.subr.bf16.mxu0 0
        %4924 = vmatpush1.bf16.msra.mxu0 0
        %4925 = vmatprep.subr.bf16.mxu0 0
        %4926 = vmatpush1.bf16.msra.mxu0 0
        %4927 = vmatprep.subr.bf16.mxu0 0
        %4928 = vmatpush1.bf16.msra.mxu0 0
        %4929 = vmatprep.mubr.bf16.mxu0 0
        %4930 = vmatmul.mubr.bf16.gmra.mrb[0].mxu0 %v4829
        %v4931 = vpop.f32.mrb[0].mxu0
        %v4932 = vadd.f32 0.0, %v4931
        %v4933 = vpop.f32.mrb[0].mxu0
        %v4934 = vpop.f32.mrb[0].mxu0
        %v4935 = vadd.f32 0.0, %v4934
        %v4936 = vpop.f32.mrb[0].mxu0
        %4937 = vmatprep.mubr.bf16.mxu0 0
        %4938 = vmatmul.mubr.bf16.gmra.mrb[0].mxu0 %v4830
        %v4939 = vpop.f32.mrb[0].mxu0
        %v4940 = vadd.f32 0.0, %v4939
        %v4941 = vpop.f32.mrb[0].mxu0
        %v4942 = vpop.f32.mrb[0].mxu0
        %v4943 = vadd.f32 0.0, %v4942
        %v4944 = vpop.f32.mrb[0].mxu0
        %4945 = vmatprep.mubr.bf16.mxu0 0
        %4946 = vmatmul.mubr.bf16.gmra.mrb[0].mxu0 %v4831
        %v4947 = vpop.f32.mrb[0].mxu0
        %v4948 = vadd.f32 0.0, %v4947
        %v4949 = vpop.f32.mrb[0].mxu0
        %v4950 = vpop.f32.mrb[0].mxu0
        %v4951 = vadd.f32 0.0, %v4950
        %v4952 = vpop.f32.mrb[0].mxu0
        %4953 = vmatprep.mubr.bf16.mxu0 0
        %4954 = vmatmul.mubr.bf16.gmra.mrb[0].mxu0 %v4832
        %v4955 = vpop.f32.mrb[0].mxu0
        %v4956 = vadd.f32 0.0, %v4955
        %v4957 = vpop.f32.mrb[0].mxu0
        %v4958 = vpop.f32.mrb[0].mxu0
        %v4959 = vadd.f32 0.0, %v4958
        %v4960 = vpop.f32.mrb[0].mxu0
        %4961 = vdwg.mxu0
        %v4962 = vadd.f32 %v4726, %v4932
        %v4963 = vadd.f32 %v4727, %v4935
        %v4964 = vadd.f32 %v4728, %v4940
        %v4965 = vadd.f32 %v4729, %v4943
        %v4966 = vadd.f32 %v4730, %v4948
        %v4967 = vadd.f32 %v4731, %v4951
        %v4968 = vadd.f32 %v4732, %v4956
        %v4969 = vadd.f32 %v4733, %v4959
        %v4970 = vmul.f32 %v4962, 0.70710677
        %v4971 = vmul.f32 %v4963, 0.70710677
        %v4972 = vmul.f32 %v4964, 0.70710677
        %v4973 = vmul.f32 %v4965, 0.70710677
        %v4974 = vmul.f32 %v4966, 0.70710677
        %v4975 = vmul.f32 %v4967, 0.70710677
        %v4976 = vmul.f32 %v4968, 0.70710677
        %v4977 = vmul.f32 %v4969, 0.70710677
        %4978 = vst [vmem:[%s421] sm:$0xff] %v4970
        %4979 = vst [vmem:[%s421 + $0x8] sm:$0xff] %v4971
        %4980 = vst [vmem:[%s421 + $0x10] sm:$0xff] %v4972
        %4981 = vst [vmem:[%s421 + $0x18] sm:$0xff] %v4973
        %4982 = vst [vmem:[%s421 + $0x20] sm:$0xff] %v4974
        %4983 = vst [vmem:[%s421 + $0x28] sm:$0xff] %v4975
        %4984 = vst [vmem:[%s421 + $0x30] sm:$0xff] %v4976
        %4985 = vst [vmem:[%s421 + $0x38] sm:$0xff] %v4977
        %s4986 = sand.u32 %s252, 1
        %s4987 = scalar_lea.sflag [#allocation7], %s4986
        %s4988 = sand.u32 %s252, 1
        %s4989 = smul.addr %s4988, 64
        %s4990 = scalar_lea.vmem [#allocation13], %s4989
        // Predicated region
        $region77: #{tpu_custom_call.1} parent=59 // pred_check
          %p4991 = pneg %p262
        $region78: #{tpu_custom_call.1} parent=59 // pred_check_branch
          %4993 = sbr.rel (%p4991) target = $region80
        $region79: #{tpu_custom_call.1} parent=59 // pred_region
          %s4995 = ssub.s32 1024, 1024
          %4996 = vsyncadd %s4987, %s4995
          %s4997 = smul.addr %s29, 8
          %s4998 = smul.addr %s4997, 128
          %s4999 = scalar_lea.hbm %s10, %s4998
          %s5000 = sshll.u32 %s4990, 4
          %s5001 = int_to_ptr.vmem [resolvable:$true] %s5000
          %5006 = dma.vmem_to_hbm [thread:$0]  %s5001, 1024, %s4999, %s4987, 128, 128, 8
        $region80: #{tpu_custom_call.1} parent=59 // pred_fallthru
          _
      $region60: #{tpu_custom_call.1} parent=5 // pred_fallthru
        _
      %p5007 = scmp.le.s32.totalorder 2, %s24
      // Predicated region
      $region81: #{tpu_custom_call.1} parent=5 // pred_check
        %p5008 = pneg %p5007
      $region82: #{tpu_custom_call.1} parent=5 // pred_check_branch
        %5010 = sbr.rel (%p5008) target = $region84
      $region83: #{tpu_custom_call.1} parent=5 // pred_region
        %s5011 = ssub.s32 %s24, 2
        // Predicated region
        $region85: #{tpu_custom_call.1} parent=83 // pred_check
          %p5012 = pneg %p268
        $region86: #{tpu_custom_call.1} parent=83 // pred_check_branch
          %5014 = sbr.rel (%p5012) target = $region88
        $region87: #{tpu_custom_call.1} parent=83 // pred_region
          %s5015 = sand.u32 %s253, 1
          %s5016 = scalar_lea.sflag [#allocation7], %s5015
          %s5017 = sand.u32 %s253, 1
          %s5018 = smul.addr %s5017, 64
          %s5019 = scalar_lea.vmem [#allocation13], %s5018
          %5020 = dma.done %s5016, 1024
        $region88: #{tpu_custom_call.1} parent=83 // pred_fallthru
          _
      $region84: #{tpu_custom_call.1} parent=5 // pred_fallthru
        _
    $region6: #{tpu_custom_call.1} parent=1 // loop_footer
      %s28 = sadd.s32 1, %s24
    $region7: #{tpu_custom_call.1} parent=1 // loop_footer_branch
      %23 = sbr.rel target = $region3
    $region8: #{tpu_custom_call.1} parent=1 // loop_exit
      _
    %5021 = vsyncpa [#allocation6], 1
    %s5022 = scalar_lea.sflag [#allocation6], 1
    %5023 = vsyncpa %s5022, 1
    %5024 = vsyncpa [#allocation9], 1
    %5025 = vsyncpa [#allocation12], 1
    %5026 = vsyncpa [#allocation7], 1
    %s5027 = scalar_lea.sflag [#allocation7], 1
    %5028 = vsyncpa %s5027, 1

</llo_original>
